<compile_context>
chip_gen: v5e
topology: v5e:2x2
jax: 0.10.0
libtpu: 0.0.40
codegen_flags: <defaults>
</compile_context>

<pallas_src>
import functools

import numpy as np
import jax
import jax.numpy as jnp
from jax.experimental import pallas as pl
from jax.experimental.pallas import tpu as pltpu

LANES = 128  # padded lane width of every on-chip intermediate


# ----------------------------------------------------------------------------
# Host-side weight packing (cheap; would normally run once at load time)
# ----------------------------------------------------------------------------
def _conv_pool_weight(w_oihw, in_w, out_w, k_pad):
    """Fold a conv's kx taps + the 2x2-pool column gather into matmul weights.

    Returns A of shape (KH, k_pad, 2*LANES).  For pool-column phase px, lanes
    [px*LANES, px*LANES + (out_w//2)*Cout) of A[ky] hold the weights, so

        preact[conv row, phase px] += x_row(oh + ky) @ A[ky][:, px*LANES : ...]

    and the 2x2-pool column max is a clean 128-lane slice of the result.
    Zero entries only cost (free) MXU columns and keep the kernel free of lane
    gathers / reshapes.
    """
    c_out, c_in, kh, kw = w_oihw.shape
    half_w = out_w // 2
    k, n = in_w * c_in, half_w * c_out
    # sel[px, kx, iw, wp] == 1  iff  iw == 2*wp + px + kx   (the im2col gather)
    sel = np.zeros((2, kw, in_w, half_w), np.float32)
    for px in range(2):
        for kx in range(kw):
            for wp in range(half_w):
                iw = 2 * wp + px + kx
                if iw < in_w:
                    sel[px, kx, iw, wp] = 1.0
    a = jnp.einsum("pxiw,ocyx->pyicwo", jnp.asarray(sel),
                   w_oihw.astype(jnp.float32)).reshape(2, kh, k, n)
    a = jnp.pad(a, ((0, 0), (0, 0), (0, k_pad - k), (0, LANES - n)))
    # stack the two px phases along N: (kh, k_pad, 2*LANES)
    return jnp.transpose(a, (1, 2, 0, 3)).reshape(kh, k_pad, 2 * LANES)


def _fc1_weight(fc1_w, c, h, w):
    """fc1 columns: torch NCHW-flatten order -> our (h, w*c [pad to 128]) layout."""
    n = fc1_w.shape[0]
    wt = fc1_w.reshape(n, c, h, w)                 # [n, c, h, w]
    wt = jnp.transpose(wt, (2, 3, 1, 0)).reshape(h, w * c, n)   # (5, 80, 120)
    return jnp.pad(wt, ((0, 0), (0, LANES - w * c), (0, 0)))    # (5, 128, 120)


# ----------------------------------------------------------------------------
# The fused kernel (B_BLK images per grid step, stacked along sublanes)
# ----------------------------------------------------------------------------
def _lenet_kernel(x_ref, a1_ref, b1_ref, a2_ref, b2_ref,
                  w1_ref, c1_ref, w2_ref, c2_ref, w3_ref, c3_ref, o_ref, *, bb):
    f32, bf16 = jnp.float32, jnp.bfloat16

    # -- conv1 (5x5, 3->6) + ReLU + 2x2 max-pool ------------------------------
    # p1[pp]: (7*bb, 128) bf16; row = t*bb + img (pooled row r = 2*t + pp),
    #         lane = w'*6 + c (84 used, the rest exactly 0).
    p1 = []
    for pp in range(2):
        best = None
        for py in range(2):                       # pool row phase
            acc = None
            for ky in range(5):
                o = 2 * pp + py + ky              # input image row = 4*t + o
                xs = x_ref[0, o % 4, (o // 4) * bb:(o // 4 + 7) * bb, :]
                t = jnp.dot(xs, a1_ref[ky], preferred_element_type=f32)
                acc = t if acc is None else acc + t            # (7*bb, 256)
            cur = jnp.maximum(acc[:, :LANES], acc[:, LANES:])  # max over px
            best = cur if best is None else jnp.maximum(best, cur)
        p1.append(jnp.maximum(best + b1_ref[...], 0.0).astype(bf16))

    # -- conv2 (5x5, 6->16) + ReLU + 2x2 max-pool -----------------------------
    # p2: (5*bb, 128) bf16; row = h*bb + img, lane = w'*16 + c (80 used).
    best = None
    for py in range(2):
        acc = None
        for ky in range(5):
            o = py + ky                           # p1 row (per image) = 2*h + o
            xs = p1[o % 2][(o // 2) * bb:(o // 2 + 5) * bb, :]
            t = jnp.dot(xs, a2_ref[ky], preferred_element_type=f32)
            acc = t if acc is None else acc + t                # (5*bb, 256)
        cur = jnp.maximum(acc[:, :LANES], acc[:, LANES:])
        best = cur if best is None else jnp.maximum(best, cur)
    p2 = jnp.maximum(best + b2_ref[...], 0.0).astype(bf16)

    # -- fc1 -> ReLU -> fc2 -> ReLU -> fc3 ------------------------------------
    acc = None
    for h in range(5):                            # NCHW flatten folded into w1
        t = jnp.dot(p2[h * bb:(h + 1) * bb, :], w1_ref[h],
                    preferred_element_type=f32)
        acc = t if acc is None else acc + t
    h1 = jnp.maximum(acc + c1_ref[...], 0.0).astype(bf16)     # (bb, 120)
    h2 = jnp.dot(h1, w2_ref[...], preferred_element_type=f32) + c2_ref[...]
    h2 = jnp.maximum(h2, 0.0).astype(bf16)                    # (bb, 84)
    out = jnp.dot(h2, w3_ref[...], preferred_element_type=f32) + c3_ref[...]
    o_ref[...] = out.astype(o_ref.dtype)                      # (bb, 128) lane-dense


# ----------------------------------------------------------------------------
# Forward pass (mirrors LeNet.forward)
# ----------------------------------------------------------------------------
def _choose_block(b):
    """Batch block: MXU-row multiple capped at 256; halved while that keeps the
    grid length >= 2 so both v7x TensorCores get work."""
    bb = 256
    while bb > 8 and b < 2 * bb:
        bb //= 2
    return bb


def lenet_forward(params, x_nchw, block_b=None):
    b = x_nchw.shape[0]
    nc = params["fc3_w"].shape[0]
    assert nc <= LANES, "num_classes must fit in one 128-lane tile"
    bf16 = jnp.bfloat16

    bb = block_b if block_b is not None else _choose_block(b)
    assert bb % 8 == 0
    nb = -(-b // bb)
    b_pad = nb * bb

    # Input: NCHW -> NHWC rows of (W*C)=96 lanes, rows regrouped by (row % 4)
    # so every conv/pool phase in the kernel is a contiguous sublane slice,
    # then the bb images of each block stacked inside every row group.
    # TODO(synk): this pre-permute is one extra XLA op / HBM round trip over
    # the input; it could be folded into the conv1 gather matrix (reading NCHW
    # rows directly) at the cost of 3x more conv1 matmuls.
    x = jnp.transpose(x_nchw, (0, 2, 3, 1)).reshape(b, 32, 96).astype(bf16)
    if b_pad != b:
        x = jnp.pad(x, ((0, b_pad - b), (0, 0), (0, 0)))
    x = x.reshape(b_pad, 8, 4, 96).transpose(0, 2, 1, 3)        # (Bp, 4, 8, 96)
    x = x.reshape(nb, bb, 4, 8, 96).transpose(0, 2, 3, 1, 4)    # (nb, 4, 8, bb, 96)
    x = x.reshape(nb, 4, 8 * bb, 96)                            # rows = (t, img)

    a1 = _conv_pool_weight(params["conv1_w"], 32, 28, 96).astype(bf16)     # (5, 96,256)
    a2 = _conv_pool_weight(params["conv2_w"], 14, 10, LANES).astype(bf16)  # (5,128,256)
    b1 = jnp.pad(jnp.tile(params["conv1_b"], 14),
                 (0, LANES - 84)).reshape(1, LANES).astype(jnp.float32)
    b2 = jnp.pad(jnp.tile(params["conv2_b"], 5),
                 (0, LANES - 80)).reshape(1, LANES).astype(jnp.float32)
    w1 = _fc1_weight(params["fc1_w"], 16, 5, 5).astype(bf16)               # (5,128,120)
    w2 = params["fc2_w"].T.astype(bf16)                                    # (120, 84)
    w3 = jnp.pad(params["fc3_w"].T, ((0, 0), (0, LANES - nc))).astype(bf16)  # (84,128)
    c1 = params["fc1_b"].reshape(1, -1).astype(jnp.float32)
    c2 = params["fc2_b"].reshape(1, -1).astype(jnp.float32)
    c3 = jnp.pad(params["fc3_b"], (0, LANES - nc)).reshape(1, LANES).astype(jnp.float32)

    def resident(arr):  # whole-array block, same block index every step -> 1 copy
        nd = arr.ndim
        return pl.BlockSpec(arr.shape, lambda i: (0,) * nd)

    out = pl.pallas_call(
        functools.partial(_lenet_kernel, bb=bb),
        out_shape=jax.ShapeDtypeStruct((b_pad, LANES), jnp.float32),
        grid=(nb,),
        in_specs=[
            pl.BlockSpec((1, 4, 8 * bb, 96), lambda i: (i, 0, 0, 0)),
            resident(a1), resident(b1), resident(a2), resident(b2),
            resident(w1), resident(c1), resident(w2), resident(c2),
            resident(w3), resident(c3),
        ],
        out_specs=pl.BlockSpec((bb, LANES), lambda i: (i, 0)),
        compiler_params=pltpu.CompilerParams(
            dimension_semantics=("parallel",),    # shard batch blocks over TCs
            vmem_limit_bytes=32 * 1024 * 1024,    # clear v5e's 16 MiB default
        ),
    )(x, a1, b1, a2, b2, w1, c1, w2, c2, w3, c3)
    return out[:b, :nc]


# ----------------------------------------------------------------------------
# Parameters (deterministic, kaiming-normal "fan_out"-style init)
# ----------------------------------------------------------------------------
def init_params(key, num_classes=10):
    ks = jax.random.split(key, 5)

    def kaiming_out(k, shape, fan_out):
        return jax.random.normal(k, shape, jnp.float32) * jnp.sqrt(2.0 / fan_out)

    return {
        "conv1_w": kaiming_out(ks[0], (6, 3, 5, 5), 6 * 5 * 5),
        "conv1_b": jnp.zeros((6,), jnp.float32),
        "conv2_w": kaiming_out(ks[1], (16, 6, 5, 5), 16 * 5 * 5),
        "conv2_b": jnp.zeros((16,), jnp.float32),
        "fc1_w": kaiming_out(ks[2], (120, 16 * 5 * 5), 120),
        "fc1_b": jnp.zeros((120,), jnp.float32),
        "fc2_w": kaiming_out(ks[3], (84, 120), 84),
        "fc2_b": jnp.zeros((84,), jnp.float32),
        "fc3_w": kaiming_out(ks[4], (num_classes, 84), num_classes),
        "fc3_b": jnp.zeros((num_classes,), jnp.float32),
    }


# ----------------------------------------------------------------------------
# Pure-JAX reference (f32) for a sanity check
# ----------------------------------------------------------------------------
def lenet_reference(params, x_nchw):
    x = jnp.transpose(x_nchw, (0, 2, 3, 1))

    def conv_relu(x, w, bias):
        y = jax.lax.conv_general_dilated(
            x, jnp.transpose(w, (2, 3, 1, 0)), (1, 1), "VALID",
            dimension_numbers=("NHWC", "HWIO", "NHWC"))
        return jax.nn.relu(y + bias)

    def pool(x):
        return jax.lax.reduce_window(x, -jnp.inf, jax.lax.max,
                                     (1, 2, 2, 1), (1, 2, 2, 1), "VALID")

    x = pool(conv_relu(x, params["conv1_w"], params["conv1_b"]))
    x = pool(conv_relu(x, params["conv2_w"], params["conv2_b"]))
    x = jnp.transpose(x, (0, 3, 1, 2)).reshape(x.shape[0], -1)   # torch flatten
    x = jax.nn.relu(x @ params["fc1_w"].T + params["fc1_b"])
    x = jax.nn.relu(x @ params["fc2_w"].T + params["fc2_b"])
    return x @ params["fc3_w"].T + params["fc3_b"]


if __name__ == "__main__":
    key = jax.random.PRNGKey(0)
    k_x, k_x2, k_p = jax.random.split(key, 3)
    params = init_params(k_p, num_classes=10)
    fwd = jax.jit(lenet_forward)

    # LeNet geometry requires 3x32x32 inputs so that flatten gives 16*5*5 = 400.
    x = jax.random.normal(k_x, (2, 3, 32, 32), jnp.float32)
    logits = jax.block_until_ready(fwd(params, x))
    assert logits.shape == (2, 10), logits.shape
    assert logits.dtype == jnp.float32

    # Loose tolerance: kernel uses bf16 weights/activations with f32 accumulation.
    ref = lenet_reference(params, x)
    err = float(jnp.max(jnp.abs(logits - ref)))
    tol = 0.1 + 0.05 * float(jnp.max(jnp.abs(ref)))
    assert err <= tol, (err, tol)

    # Second check: batch not a multiple of the block -> padding + multi-step grid.
    x2 = jax.random.normal(k_x2, (13, 3, 32, 32), jnp.float32)
    logits2 = jax.block_until_ready(fwd(params, x2))
    assert logits2.shape == (13, 10), logits2.shape
    ref2 = lenet_reference(params, x2)
    err2 = float(jnp.max(jnp.abs(logits2 - ref2)))
    tol2 = 0.1 + 0.05 * float(jnp.max(jnp.abs(ref2)))
    assert err2 <= tol2, (err2, tol2)

    print("KERNEL_OK")
</pallas_src>

<mosaic_0001>
module attributes {stable_mosaic.version = 11 : i64} {
  func.func @_lenet_kernel(%arg0: i32, %arg1: memref<1x4x64x96xbf16, #tpu.memory_space<vmem>>, %arg2: memref<5x96x256xbf16, #tpu.memory_space<vmem>>, %arg3: memref<1x128xf32, #tpu.memory_space<vmem>>, %arg4: memref<5x128x256xbf16, #tpu.memory_space<vmem>>, %arg5: memref<1x128xf32, #tpu.memory_space<vmem>>, %arg6: memref<5x128x120xbf16, #tpu.memory_space<vmem>>, %arg7: memref<1x120xf32, #tpu.memory_space<vmem>>, %arg8: memref<120x84xbf16, #tpu.memory_space<vmem>>, %arg9: memref<1x84xf32, #tpu.memory_space<vmem>>, %arg10: memref<84x128xbf16, #tpu.memory_space<vmem>>, %arg11: memref<1x128xf32, #tpu.memory_space<vmem>>, %arg12: memref<8x128xf32, #tpu.memory_space<vmem>>) attributes {dimension_semantics = [#tpu.dimension_semantics<parallel>], iteration_bounds = array<i64: 1>, scalar_prefetch = 0 : i64, scratch_operands = 0 : i64, tpu.core_type = #tpu.core_type<tc>, window_params = [{transform_indices = @transform_0, window_bounds = array<i64: 1, 4, 64, 96>}, {pipeline_mode = #tpu.pipeline_mode<synchronous>, transform_indices = @transform_1, window_bounds = array<i64: 5, 96, 256>}, {pipeline_mode = #tpu.pipeline_mode<synchronous>, transform_indices = @transform_2, window_bounds = array<i64: 1, 128>}, {pipeline_mode = #tpu.pipeline_mode<synchronous>, transform_indices = @transform_3, window_bounds = array<i64: 5, 128, 256>}, {pipeline_mode = #tpu.pipeline_mode<synchronous>, transform_indices = @transform_4, window_bounds = array<i64: 1, 128>}, {pipeline_mode = #tpu.pipeline_mode<synchronous>, transform_indices = @transform_5, window_bounds = array<i64: 5, 128, 120>}, {pipeline_mode = #tpu.pipeline_mode<synchronous>, transform_indices = @transform_6, window_bounds = array<i64: 1, 120>}, {pipeline_mode = #tpu.pipeline_mode<synchronous>, transform_indices = @transform_7, window_bounds = array<i64: 120, 84>}, {pipeline_mode = #tpu.pipeline_mode<synchronous>, transform_indices = @transform_8, window_bounds = array<i64: 1, 84>}, {pipeline_mode = #tpu.pipeline_mode<synchronous>, transform_indices = @transform_9, window_bounds = array<i64: 84, 128>}, {pipeline_mode = #tpu.pipeline_mode<synchronous>, transform_indices = @transform_10, window_bounds = array<i64: 1, 128>}, {transform_indices = @transform_11, window_bounds = array<i64: 8, 128>}]} {
    %c0 = arith.constant 0 : index
    %c0_0 = arith.constant 0 : index
    %c0_1 = arith.constant 0 : index
    %c0_2 = arith.constant 0 : index
    %0 = vector.load %arg1[%c0, %c0_0, %c0_1, %c0_2] : memref<1x4x64x96xbf16, #tpu.memory_space<vmem>>, vector<1x1x56x96xbf16>
    %1 = vector.shape_cast %0 : vector<1x1x56x96xbf16> to vector<56x96xbf16>
    %c0_3 = arith.constant 0 : index
    %c0_4 = arith.constant 0 : index
    %c0_5 = arith.constant 0 : index
    %2 = vector.load %arg2[%c0_3, %c0_4, %c0_5] : memref<5x96x256xbf16, #tpu.memory_space<vmem>>, vector<1x96x256xbf16>
    %3 = vector.shape_cast %2 : vector<1x96x256xbf16> to vector<96x256xbf16>
    %cst = arith.constant dense<0.000000e+00> : vector<56x256xf32>
    %4 = tpu.matmul %1, %3, %cst {dimension_numbers = #tpu.dot_dimension_numbers<[1], [0], [0], [1], [0, 0, 1, 1], [], []>} : vector<56x96xbf16>, vector<96x256xbf16>, vector<56x256xf32> -> vector<56x256xf32>
    %c0_6 = arith.constant 0 : index
    %c1 = arith.constant 1 : index
    %c0_7 = arith.constant 0 : index
    %c0_8 = arith.constant 0 : index
    %5 = vector.load %arg1[%c0_6, %c1, %c0_7, %c0_8] : memref<1x4x64x96xbf16, #tpu.memory_space<vmem>>, vector<1x1x56x96xbf16>
    %6 = vector.shape_cast %5 : vector<1x1x56x96xbf16> to vector<56x96xbf16>
    %c1_9 = arith.constant 1 : index
    %c0_10 = arith.constant 0 : index
    %c0_11 = arith.constant 0 : index
    %7 = vector.load %arg2[%c1_9, %c0_10, %c0_11] : memref<5x96x256xbf16, #tpu.memory_space<vmem>>, vector<1x96x256xbf16>
    %8 = vector.shape_cast %7 : vector<1x96x256xbf16> to vector<96x256xbf16>
    %cst_12 = arith.constant dense<0.000000e+00> : vector<56x256xf32>
    %9 = tpu.matmul %6, %8, %cst_12 {dimension_numbers = #tpu.dot_dimension_numbers<[1], [0], [0], [1], [0, 0, 1, 1], [], []>} : vector<56x96xbf16>, vector<96x256xbf16>, vector<56x256xf32> -> vector<56x256xf32>
    %10 = arith.addf %4, %9 : vector<56x256xf32>
    %c0_13 = arith.constant 0 : index
    %c2 = arith.constant 2 : index
    %c0_14 = arith.constant 0 : index
    %c0_15 = arith.constant 0 : index
    %11 = vector.load %arg1[%c0_13, %c2, %c0_14, %c0_15] : memref<1x4x64x96xbf16, #tpu.memory_space<vmem>>, vector<1x1x56x96xbf16>
    %12 = vector.shape_cast %11 : vector<1x1x56x96xbf16> to vector<56x96xbf16>
    %c2_16 = arith.constant 2 : index
    %c0_17 = arith.constant 0 : index
    %c0_18 = arith.constant 0 : index
    %13 = vector.load %arg2[%c2_16, %c0_17, %c0_18] : memref<5x96x256xbf16, #tpu.memory_space<vmem>>, vector<1x96x256xbf16>
    %14 = vector.shape_cast %13 : vector<1x96x256xbf16> to vector<96x256xbf16>
    %cst_19 = arith.constant dense<0.000000e+00> : vector<56x256xf32>
    %15 = tpu.matmul %12, %14, %cst_19 {dimension_numbers = #tpu.dot_dimension_numbers<[1], [0], [0], [1], [0, 0, 1, 1], [], []>} : vector<56x96xbf16>, vector<96x256xbf16>, vector<56x256xf32> -> vector<56x256xf32>
    %16 = arith.addf %10, %15 : vector<56x256xf32>
    %c0_20 = arith.constant 0 : index
    %c3 = arith.constant 3 : index
    %c0_21 = arith.constant 0 : index
    %c0_22 = arith.constant 0 : index
    %17 = vector.load %arg1[%c0_20, %c3, %c0_21, %c0_22] : memref<1x4x64x96xbf16, #tpu.memory_space<vmem>>, vector<1x1x56x96xbf16>
    %18 = vector.shape_cast %17 : vector<1x1x56x96xbf16> to vector<56x96xbf16>
    %c3_23 = arith.constant 3 : index
    %c0_24 = arith.constant 0 : index
    %c0_25 = arith.constant 0 : index
    %19 = vector.load %arg2[%c3_23, %c0_24, %c0_25] : memref<5x96x256xbf16, #tpu.memory_space<vmem>>, vector<1x96x256xbf16>
    %20 = vector.shape_cast %19 : vector<1x96x256xbf16> to vector<96x256xbf16>
    %cst_26 = arith.constant dense<0.000000e+00> : vector<56x256xf32>
    %21 = tpu.matmul %18, %20, %cst_26 {dimension_numbers = #tpu.dot_dimension_numbers<[1], [0], [0], [1], [0, 0, 1, 1], [], []>} : vector<56x96xbf16>, vector<96x256xbf16>, vector<56x256xf32> -> vector<56x256xf32>
    %22 = arith.addf %16, %21 : vector<56x256xf32>
    %c0_27 = arith.constant 0 : index
    %c0_28 = arith.constant 0 : index
    %c8 = arith.constant 8 : index
    %c0_29 = arith.constant 0 : index
    %23 = vector.load %arg1[%c0_27, %c0_28, %c8, %c0_29] : memref<1x4x64x96xbf16, #tpu.memory_space<vmem>>, vector<1x1x56x96xbf16>
    %24 = vector.shape_cast %23 : vector<1x1x56x96xbf16> to vector<56x96xbf16>
    %c4 = arith.constant 4 : index
    %c0_30 = arith.constant 0 : index
    %c0_31 = arith.constant 0 : index
    %25 = vector.load %arg2[%c4, %c0_30, %c0_31] : memref<5x96x256xbf16, #tpu.memory_space<vmem>>, vector<1x96x256xbf16>
    %26 = vector.shape_cast %25 : vector<1x96x256xbf16> to vector<96x256xbf16>
    %cst_32 = arith.constant dense<0.000000e+00> : vector<56x256xf32>
    %27 = tpu.matmul %24, %26, %cst_32 {dimension_numbers = #tpu.dot_dimension_numbers<[1], [0], [0], [1], [0, 0, 1, 1], [], []>} : vector<56x96xbf16>, vector<96x256xbf16>, vector<56x256xf32> -> vector<56x256xf32>
    %28 = arith.addf %22, %27 : vector<56x256xf32>
    %29 = vector.extract_strided_slice %28 {offsets = [0, 0], sizes = [56, 128], strides = [1, 1]} : vector<56x256xf32> to vector<56x128xf32>
    %30 = vector.extract_strided_slice %28 {offsets = [0, 128], sizes = [56, 128], strides = [1, 1]} : vector<56x256xf32> to vector<56x128xf32>
    %31 = arith.maximumf %29, %30 : vector<56x128xf32>
    %c0_33 = arith.constant 0 : index
    %c1_34 = arith.constant 1 : index
    %c0_35 = arith.constant 0 : index
    %c0_36 = arith.constant 0 : index
    %32 = vector.load %arg1[%c0_33, %c1_34, %c0_35, %c0_36] : memref<1x4x64x96xbf16, #tpu.memory_space<vmem>>, vector<1x1x56x96xbf16>
    %33 = vector.shape_cast %32 : vector<1x1x56x96xbf16> to vector<56x96xbf16>
    %c0_37 = arith.constant 0 : index
    %c0_38 = arith.constant 0 : index
    %c0_39 = arith.constant 0 : index
    %34 = vector.load %arg2[%c0_37, %c0_38, %c0_39] : memref<5x96x256xbf16, #tpu.memory_space<vmem>>, vector<1x96x256xbf16>
    %35 = vector.shape_cast %34 : vector<1x96x256xbf16> to vector<96x256xbf16>
    %cst_40 = arith.constant dense<0.000000e+00> : vector<56x256xf32>
    %36 = tpu.matmul %33, %35, %cst_40 {dimension_numbers = #tpu.dot_dimension_numbers<[1], [0], [0], [1], [0, 0, 1, 1], [], []>} : vector<56x96xbf16>, vector<96x256xbf16>, vector<56x256xf32> -> vector<56x256xf32>
    %c0_41 = arith.constant 0 : index
    %c2_42 = arith.constant 2 : index
    %c0_43 = arith.constant 0 : index
    %c0_44 = arith.constant 0 : index
    %37 = vector.load %arg1[%c0_41, %c2_42, %c0_43, %c0_44] : memref<1x4x64x96xbf16, #tpu.memory_space<vmem>>, vector<1x1x56x96xbf16>
    %38 = vector.shape_cast %37 : vector<1x1x56x96xbf16> to vector<56x96xbf16>
    %c1_45 = arith.constant 1 : index
    %c0_46 = arith.constant 0 : index
    %c0_47 = arith.constant 0 : index
    %39 = vector.load %arg2[%c1_45, %c0_46, %c0_47] : memref<5x96x256xbf16, #tpu.memory_space<vmem>>, vector<1x96x256xbf16>
    %40 = vector.shape_cast %39 : vector<1x96x256xbf16> to vector<96x256xbf16>
    %cst_48 = arith.constant dense<0.000000e+00> : vector<56x256xf32>
    %41 = tpu.matmul %38, %40, %cst_48 {dimension_numbers = #tpu.dot_dimension_numbers<[1], [0], [0], [1], [0, 0, 1, 1], [], []>} : vector<56x96xbf16>, vector<96x256xbf16>, vector<56x256xf32> -> vector<56x256xf32>
    %42 = arith.addf %36, %41 : vector<56x256xf32>
    %c0_49 = arith.constant 0 : index
    %c3_50 = arith.constant 3 : index
    %c0_51 = arith.constant 0 : index
    %c0_52 = arith.constant 0 : index
    %43 = vector.load %arg1[%c0_49, %c3_50, %c0_51, %c0_52] : memref<1x4x64x96xbf16, #tpu.memory_space<vmem>>, vector<1x1x56x96xbf16>
    %44 = vector.shape_cast %43 : vector<1x1x56x96xbf16> to vector<56x96xbf16>
    %c2_53 = arith.constant 2 : index
    %c0_54 = arith.constant 0 : index
    %c0_55 = arith.constant 0 : index
    %45 = vector.load %arg2[%c2_53, %c0_54, %c0_55] : memref<5x96x256xbf16, #tpu.memory_space<vmem>>, vector<1x96x256xbf16>
    %46 = vector.shape_cast %45 : vector<1x96x256xbf16> to vector<96x256xbf16>
    %cst_56 = arith.constant dense<0.000000e+00> : vector<56x256xf32>
    %47 = tpu.matmul %44, %46, %cst_56 {dimension_numbers = #tpu.dot_dimension_numbers<[1], [0], [0], [1], [0, 0, 1, 1], [], []>} : vector<56x96xbf16>, vector<96x256xbf16>, vector<56x256xf32> -> vector<56x256xf32>
    %48 = arith.addf %42, %47 : vector<56x256xf32>
    %c0_57 = arith.constant 0 : index
    %c0_58 = arith.constant 0 : index
    %c8_59 = arith.constant 8 : index
    %c0_60 = arith.constant 0 : index
    %49 = vector.load %arg1[%c0_57, %c0_58, %c8_59, %c0_60] : memref<1x4x64x96xbf16, #tpu.memory_space<vmem>>, vector<1x1x56x96xbf16>
    %50 = vector.shape_cast %49 : vector<1x1x56x96xbf16> to vector<56x96xbf16>
    %c3_61 = arith.constant 3 : index
    %c0_62 = arith.constant 0 : index
    %c0_63 = arith.constant 0 : index
    %51 = vector.load %arg2[%c3_61, %c0_62, %c0_63] : memref<5x96x256xbf16, #tpu.memory_space<vmem>>, vector<1x96x256xbf16>
    %52 = vector.shape_cast %51 : vector<1x96x256xbf16> to vector<96x256xbf16>
    %cst_64 = arith.constant dense<0.000000e+00> : vector<56x256xf32>
    %53 = tpu.matmul %50, %52, %cst_64 {dimension_numbers = #tpu.dot_dimension_numbers<[1], [0], [0], [1], [0, 0, 1, 1], [], []>} : vector<56x96xbf16>, vector<96x256xbf16>, vector<56x256xf32> -> vector<56x256xf32>
    %54 = arith.addf %48, %53 : vector<56x256xf32>
    %c0_65 = arith.constant 0 : index
    %c1_66 = arith.constant 1 : index
    %c8_67 = arith.constant 8 : index
    %c0_68 = arith.constant 0 : index
    %55 = vector.load %arg1[%c0_65, %c1_66, %c8_67, %c0_68] : memref<1x4x64x96xbf16, #tpu.memory_space<vmem>>, vector<1x1x56x96xbf16>
    %56 = vector.shape_cast %55 : vector<1x1x56x96xbf16> to vector<56x96xbf16>
    %c4_69 = arith.constant 4 : index
    %c0_70 = arith.constant 0 : index
    %c0_71 = arith.constant 0 : index
    %57 = vector.load %arg2[%c4_69, %c0_70, %c0_71] : memref<5x96x256xbf16, #tpu.memory_space<vmem>>, vector<1x96x256xbf16>
    %58 = vector.shape_cast %57 : vector<1x96x256xbf16> to vector<96x256xbf16>
    %cst_72 = arith.constant dense<0.000000e+00> : vector<56x256xf32>
    %59 = tpu.matmul %56, %58, %cst_72 {dimension_numbers = #tpu.dot_dimension_numbers<[1], [0], [0], [1], [0, 0, 1, 1], [], []>} : vector<56x96xbf16>, vector<96x256xbf16>, vector<56x256xf32> -> vector<56x256xf32>
    %60 = arith.addf %54, %59 : vector<56x256xf32>
    %61 = vector.extract_strided_slice %60 {offsets = [0, 0], sizes = [56, 128], strides = [1, 1]} : vector<56x256xf32> to vector<56x128xf32>
    %62 = vector.extract_strided_slice %60 {offsets = [0, 128], sizes = [56, 128], strides = [1, 1]} : vector<56x256xf32> to vector<56x128xf32>
    %63 = arith.maximumf %61, %62 : vector<56x128xf32>
    %64 = arith.maximumf %31, %63 : vector<56x128xf32>
    %c0_73 = arith.constant 0 : index
    %c0_74 = arith.constant 0 : index
    %65 = vector.load %arg3[%c0_73, %c0_74] : memref<1x128xf32, #tpu.memory_space<vmem>>, vector<1x128xf32>
    %66 = vector.broadcast %65 : vector<1x128xf32> to vector<56x128xf32>
    %67 = arith.addf %64, %66 : vector<56x128xf32>
    %cst_75 = arith.constant 0.000000e+00 : f32
    %68 = vector.broadcast %cst_75 : f32 to vector<56x128xf32>
    %69 = arith.maximumf %67, %68 : vector<56x128xf32>
    %70 = arith.truncf %69 : vector<56x128xf32> to vector<56x128xbf16>
    %c0_76 = arith.constant 0 : index
    %c2_77 = arith.constant 2 : index
    %c0_78 = arith.constant 0 : index
    %c0_79 = arith.constant 0 : index
    %71 = vector.load %arg1[%c0_76, %c2_77, %c0_78, %c0_79] : memref<1x4x64x96xbf16, #tpu.memory_space<vmem>>, vector<1x1x56x96xbf16>
    %72 = vector.shape_cast %71 : vector<1x1x56x96xbf16> to vector<56x96xbf16>
    %c0_80 = arith.constant 0 : index
    %c0_81 = arith.constant 0 : index
    %c0_82 = arith.constant 0 : index
    %73 = vector.load %arg2[%c0_80, %c0_81, %c0_82] : memref<5x96x256xbf16, #tpu.memory_space<vmem>>, vector<1x96x256xbf16>
    %74 = vector.shape_cast %73 : vector<1x96x256xbf16> to vector<96x256xbf16>
    %cst_83 = arith.constant dense<0.000000e+00> : vector<56x256xf32>
    %75 = tpu.matmul %72, %74, %cst_83 {dimension_numbers = #tpu.dot_dimension_numbers<[1], [0], [0], [1], [0, 0, 1, 1], [], []>} : vector<56x96xbf16>, vector<96x256xbf16>, vector<56x256xf32> -> vector<56x256xf32>
    %c0_84 = arith.constant 0 : index
    %c3_85 = arith.constant 3 : index
    %c0_86 = arith.constant 0 : index
    %c0_87 = arith.constant 0 : index
    %76 = vector.load %arg1[%c0_84, %c3_85, %c0_86, %c0_87] : memref<1x4x64x96xbf16, #tpu.memory_space<vmem>>, vector<1x1x56x96xbf16>
    %77 = vector.shape_cast %76 : vector<1x1x56x96xbf16> to vector<56x96xbf16>
    %c1_88 = arith.constant 1 : index
    %c0_89 = arith.constant 0 : index
    %c0_90 = arith.constant 0 : index
    %78 = vector.load %arg2[%c1_88, %c0_89, %c0_90] : memref<5x96x256xbf16, #tpu.memory_space<vmem>>, vector<1x96x256xbf16>
    %79 = vector.shape_cast %78 : vector<1x96x256xbf16> to vector<96x256xbf16>
    %cst_91 = arith.constant dense<0.000000e+00> : vector<56x256xf32>
    %80 = tpu.matmul %77, %79, %cst_91 {dimension_numbers = #tpu.dot_dimension_numbers<[1], [0], [0], [1], [0, 0, 1, 1], [], []>} : vector<56x96xbf16>, vector<96x256xbf16>, vector<56x256xf32> -> vector<56x256xf32>
    %81 = arith.addf %75, %80 : vector<56x256xf32>
    %c0_92 = arith.constant 0 : index
    %c0_93 = arith.constant 0 : index
    %c8_94 = arith.constant 8 : index
    %c0_95 = arith.constant 0 : index
    %82 = vector.load %arg1[%c0_92, %c0_93, %c8_94, %c0_95] : memref<1x4x64x96xbf16, #tpu.memory_space<vmem>>, vector<1x1x56x96xbf16>
    %83 = vector.shape_cast %82 : vector<1x1x56x96xbf16> to vector<56x96xbf16>
    %c2_96 = arith.constant 2 : index
    %c0_97 = arith.constant 0 : index
    %c0_98 = arith.constant 0 : index
    %84 = vector.load %arg2[%c2_96, %c0_97, %c0_98] : memref<5x96x256xbf16, #tpu.memory_space<vmem>>, vector<1x96x256xbf16>
    %85 = vector.shape_cast %84 : vector<1x96x256xbf16> to vector<96x256xbf16>
    %cst_99 = arith.constant dense<0.000000e+00> : vector<56x256xf32>
    %86 = tpu.matmul %83, %85, %cst_99 {dimension_numbers = #tpu.dot_dimension_numbers<[1], [0], [0], [1], [0, 0, 1, 1], [], []>} : vector<56x96xbf16>, vector<96x256xbf16>, vector<56x256xf32> -> vector<56x256xf32>
    %87 = arith.addf %81, %86 : vector<56x256xf32>
    %c0_100 = arith.constant 0 : index
    %c1_101 = arith.constant 1 : index
    %c8_102 = arith.constant 8 : index
    %c0_103 = arith.constant 0 : index
    %88 = vector.load %arg1[%c0_100, %c1_101, %c8_102, %c0_103] : memref<1x4x64x96xbf16, #tpu.memory_space<vmem>>, vector<1x1x56x96xbf16>
    %89 = vector.shape_cast %88 : vector<1x1x56x96xbf16> to vector<56x96xbf16>
    %c3_104 = arith.constant 3 : index
    %c0_105 = arith.constant 0 : index
    %c0_106 = arith.constant 0 : index
    %90 = vector.load %arg2[%c3_104, %c0_105, %c0_106] : memref<5x96x256xbf16, #tpu.memory_space<vmem>>, vector<1x96x256xbf16>
    %91 = vector.shape_cast %90 : vector<1x96x256xbf16> to vector<96x256xbf16>
    %cst_107 = arith.constant dense<0.000000e+00> : vector<56x256xf32>
    %92 = tpu.matmul %89, %91, %cst_107 {dimension_numbers = #tpu.dot_dimension_numbers<[1], [0], [0], [1], [0, 0, 1, 1], [], []>} : vector<56x96xbf16>, vector<96x256xbf16>, vector<56x256xf32> -> vector<56x256xf32>
    %93 = arith.addf %87, %92 : vector<56x256xf32>
    %c0_108 = arith.constant 0 : index
    %c2_109 = arith.constant 2 : index
    %c8_110 = arith.constant 8 : index
    %c0_111 = arith.constant 0 : index
    %94 = vector.load %arg1[%c0_108, %c2_109, %c8_110, %c0_111] : memref<1x4x64x96xbf16, #tpu.memory_space<vmem>>, vector<1x1x56x96xbf16>
    %95 = vector.shape_cast %94 : vector<1x1x56x96xbf16> to vector<56x96xbf16>
    %c4_112 = arith.constant 4 : index
    %c0_113 = arith.constant 0 : index
    %c0_114 = arith.constant 0 : index
    %96 = vector.load %arg2[%c4_112, %c0_113, %c0_114] : memref<5x96x256xbf16, #tpu.memory_space<vmem>>, vector<1x96x256xbf16>
    %97 = vector.shape_cast %96 : vector<1x96x256xbf16> to vector<96x256xbf16>
    %cst_115 = arith.constant dense<0.000000e+00> : vector<56x256xf32>
    %98 = tpu.matmul %95, %97, %cst_115 {dimension_numbers = #tpu.dot_dimension_numbers<[1], [0], [0], [1], [0, 0, 1, 1], [], []>} : vector<56x96xbf16>, vector<96x256xbf16>, vector<56x256xf32> -> vector<56x256xf32>
    %99 = arith.addf %93, %98 : vector<56x256xf32>
    %100 = vector.extract_strided_slice %99 {offsets = [0, 0], sizes = [56, 128], strides = [1, 1]} : vector<56x256xf32> to vector<56x128xf32>
    %101 = vector.extract_strided_slice %99 {offsets = [0, 128], sizes = [56, 128], strides = [1, 1]} : vector<56x256xf32> to vector<56x128xf32>
    %102 = arith.maximumf %100, %101 : vector<56x128xf32>
    %c0_116 = arith.constant 0 : index
    %c3_117 = arith.constant 3 : index
    %c0_118 = arith.constant 0 : index
    %c0_119 = arith.constant 0 : index
    %103 = vector.load %arg1[%c0_116, %c3_117, %c0_118, %c0_119] : memref<1x4x64x96xbf16, #tpu.memory_space<vmem>>, vector<1x1x56x96xbf16>
    %104 = vector.shape_cast %103 : vector<1x1x56x96xbf16> to vector<56x96xbf16>
    %c0_120 = arith.constant 0 : index
    %c0_121 = arith.constant 0 : index
    %c0_122 = arith.constant 0 : index
    %105 = vector.load %arg2[%c0_120, %c0_121, %c0_122] : memref<5x96x256xbf16, #tpu.memory_space<vmem>>, vector<1x96x256xbf16>
    %106 = vector.shape_cast %105 : vector<1x96x256xbf16> to vector<96x256xbf16>
    %cst_123 = arith.constant dense<0.000000e+00> : vector<56x256xf32>
    %107 = tpu.matmul %104, %106, %cst_123 {dimension_numbers = #tpu.dot_dimension_numbers<[1], [0], [0], [1], [0, 0, 1, 1], [], []>} : vector<56x96xbf16>, vector<96x256xbf16>, vector<56x256xf32> -> vector<56x256xf32>
    %c0_124 = arith.constant 0 : index
    %c0_125 = arith.constant 0 : index
    %c8_126 = arith.constant 8 : index
    %c0_127 = arith.constant 0 : index
    %108 = vector.load %arg1[%c0_124, %c0_125, %c8_126, %c0_127] : memref<1x4x64x96xbf16, #tpu.memory_space<vmem>>, vector<1x1x56x96xbf16>
    %109 = vector.shape_cast %108 : vector<1x1x56x96xbf16> to vector<56x96xbf16>
    %c1_128 = arith.constant 1 : index
    %c0_129 = arith.constant 0 : index
    %c0_130 = arith.constant 0 : index
    %110 = vector.load %arg2[%c1_128, %c0_129, %c0_130] : memref<5x96x256xbf16, #tpu.memory_space<vmem>>, vector<1x96x256xbf16>
    %111 = vector.shape_cast %110 : vector<1x96x256xbf16> to vector<96x256xbf16>
    %cst_131 = arith.constant dense<0.000000e+00> : vector<56x256xf32>
    %112 = tpu.matmul %109, %111, %cst_131 {dimension_numbers = #tpu.dot_dimension_numbers<[1], [0], [0], [1], [0, 0, 1, 1], [], []>} : vector<56x96xbf16>, vector<96x256xbf16>, vector<56x256xf32> -> vector<56x256xf32>
    %113 = arith.addf %107, %112 : vector<56x256xf32>
    %c0_132 = arith.constant 0 : index
    %c1_133 = arith.constant 1 : index
    %c8_134 = arith.constant 8 : index
    %c0_135 = arith.constant 0 : index
    %114 = vector.load %arg1[%c0_132, %c1_133, %c8_134, %c0_135] : memref<1x4x64x96xbf16, #tpu.memory_space<vmem>>, vector<1x1x56x96xbf16>
    %115 = vector.shape_cast %114 : vector<1x1x56x96xbf16> to vector<56x96xbf16>
    %c2_136 = arith.constant 2 : index
    %c0_137 = arith.constant 0 : index
    %c0_138 = arith.constant 0 : index
    %116 = vector.load %arg2[%c2_136, %c0_137, %c0_138] : memref<5x96x256xbf16, #tpu.memory_space<vmem>>, vector<1x96x256xbf16>
    %117 = vector.shape_cast %116 : vector<1x96x256xbf16> to vector<96x256xbf16>
    %cst_139 = arith.constant dense<0.000000e+00> : vector<56x256xf32>
    %118 = tpu.matmul %115, %117, %cst_139 {dimension_numbers = #tpu.dot_dimension_numbers<[1], [0], [0], [1], [0, 0, 1, 1], [], []>} : vector<56x96xbf16>, vector<96x256xbf16>, vector<56x256xf32> -> vector<56x256xf32>
    %119 = arith.addf %113, %118 : vector<56x256xf32>
    %c0_140 = arith.constant 0 : index
    %c2_141 = arith.constant 2 : index
    %c8_142 = arith.constant 8 : index
    %c0_143 = arith.constant 0 : index
    %120 = vector.load %arg1[%c0_140, %c2_141, %c8_142, %c0_143] : memref<1x4x64x96xbf16, #tpu.memory_space<vmem>>, vector<1x1x56x96xbf16>
    %121 = vector.shape_cast %120 : vector<1x1x56x96xbf16> to vector<56x96xbf16>
    %c3_144 = arith.constant 3 : index
    %c0_145 = arith.constant 0 : index
    %c0_146 = arith.constant 0 : index
    %122 = vector.load %arg2[%c3_144, %c0_145, %c0_146] : memref<5x96x256xbf16, #tpu.memory_space<vmem>>, vector<1x96x256xbf16>
    %123 = vector.shape_cast %122 : vector<1x96x256xbf16> to vector<96x256xbf16>
    %cst_147 = arith.constant dense<0.000000e+00> : vector<56x256xf32>
    %124 = tpu.matmul %121, %123, %cst_147 {dimension_numbers = #tpu.dot_dimension_numbers<[1], [0], [0], [1], [0, 0, 1, 1], [], []>} : vector<56x96xbf16>, vector<96x256xbf16>, vector<56x256xf32> -> vector<56x256xf32>
    %125 = arith.addf %119, %124 : vector<56x256xf32>
    %c0_148 = arith.constant 0 : index
    %c3_149 = arith.constant 3 : index
    %c8_150 = arith.constant 8 : index
    %c0_151 = arith.constant 0 : index
    %126 = vector.load %arg1[%c0_148, %c3_149, %c8_150, %c0_151] : memref<1x4x64x96xbf16, #tpu.memory_space<vmem>>, vector<1x1x56x96xbf16>
    %127 = vector.shape_cast %126 : vector<1x1x56x96xbf16> to vector<56x96xbf16>
    %c4_152 = arith.constant 4 : index
    %c0_153 = arith.constant 0 : index
    %c0_154 = arith.constant 0 : index
    %128 = vector.load %arg2[%c4_152, %c0_153, %c0_154] : memref<5x96x256xbf16, #tpu.memory_space<vmem>>, vector<1x96x256xbf16>
    %129 = vector.shape_cast %128 : vector<1x96x256xbf16> to vector<96x256xbf16>
    %cst_155 = arith.constant dense<0.000000e+00> : vector<56x256xf32>
    %130 = tpu.matmul %127, %129, %cst_155 {dimension_numbers = #tpu.dot_dimension_numbers<[1], [0], [0], [1], [0, 0, 1, 1], [], []>} : vector<56x96xbf16>, vector<96x256xbf16>, vector<56x256xf32> -> vector<56x256xf32>
    %131 = arith.addf %125, %130 : vector<56x256xf32>
    %132 = vector.extract_strided_slice %131 {offsets = [0, 0], sizes = [56, 128], strides = [1, 1]} : vector<56x256xf32> to vector<56x128xf32>
    %133 = vector.extract_strided_slice %131 {offsets = [0, 128], sizes = [56, 128], strides = [1, 1]} : vector<56x256xf32> to vector<56x128xf32>
    %134 = arith.maximumf %132, %133 : vector<56x128xf32>
    %135 = arith.maximumf %102, %134 : vector<56x128xf32>
    %c0_156 = arith.constant 0 : index
    %c0_157 = arith.constant 0 : index
    %136 = vector.load %arg3[%c0_156, %c0_157] : memref<1x128xf32, #tpu.memory_space<vmem>>, vector<1x128xf32>
    %137 = vector.broadcast %136 : vector<1x128xf32> to vector<56x128xf32>
    %138 = arith.addf %135, %137 : vector<56x128xf32>
    %cst_158 = arith.constant 0.000000e+00 : f32
    %139 = vector.broadcast %cst_158 : f32 to vector<56x128xf32>
    %140 = arith.maximumf %138, %139 : vector<56x128xf32>
    %141 = arith.truncf %140 : vector<56x128xf32> to vector<56x128xbf16>
    %142 = vector.extract_strided_slice %70 {offsets = [0, 0], sizes = [40, 128], strides = [1, 1]} : vector<56x128xbf16> to vector<40x128xbf16>
    %c0_159 = arith.constant 0 : index
    %c0_160 = arith.constant 0 : index
    %c0_161 = arith.constant 0 : index
    %143 = vector.load %arg4[%c0_159, %c0_160, %c0_161] : memref<5x128x256xbf16, #tpu.memory_space<vmem>>, vector<1x128x256xbf16>
    %144 = vector.shape_cast %143 : vector<1x128x256xbf16> to vector<128x256xbf16>
    %cst_162 = arith.constant dense<0.000000e+00> : vector<40x256xf32>
    %145 = tpu.matmul %142, %144, %cst_162 {dimension_numbers = #tpu.dot_dimension_numbers<[1], [0], [0], [1], [0, 0, 1, 1], [], []>} : vector<40x128xbf16>, vector<128x256xbf16>, vector<40x256xf32> -> vector<40x256xf32>
    %146 = vector.extract_strided_slice %141 {offsets = [0, 0], sizes = [40, 128], strides = [1, 1]} : vector<56x128xbf16> to vector<40x128xbf16>
    %c1_163 = arith.constant 1 : index
    %c0_164 = arith.constant 0 : index
    %c0_165 = arith.constant 0 : index
    %147 = vector.load %arg4[%c1_163, %c0_164, %c0_165] : memref<5x128x256xbf16, #tpu.memory_space<vmem>>, vector<1x128x256xbf16>
    %148 = vector.shape_cast %147 : vector<1x128x256xbf16> to vector<128x256xbf16>
    %cst_166 = arith.constant dense<0.000000e+00> : vector<40x256xf32>
    %149 = tpu.matmul %146, %148, %cst_166 {dimension_numbers = #tpu.dot_dimension_numbers<[1], [0], [0], [1], [0, 0, 1, 1], [], []>} : vector<40x128xbf16>, vector<128x256xbf16>, vector<40x256xf32> -> vector<40x256xf32>
    %150 = arith.addf %145, %149 : vector<40x256xf32>
    %151 = vector.extract_strided_slice %70 {offsets = [8, 0], sizes = [40, 128], strides = [1, 1]} : vector<56x128xbf16> to vector<40x128xbf16>
    %c2_167 = arith.constant 2 : index
    %c0_168 = arith.constant 0 : index
    %c0_169 = arith.constant 0 : index
    %152 = vector.load %arg4[%c2_167, %c0_168, %c0_169] : memref<5x128x256xbf16, #tpu.memory_space<vmem>>, vector<1x128x256xbf16>
    %153 = vector.shape_cast %152 : vector<1x128x256xbf16> to vector<128x256xbf16>
    %cst_170 = arith.constant dense<0.000000e+00> : vector<40x256xf32>
    %154 = tpu.matmul %151, %153, %cst_170 {dimension_numbers = #tpu.dot_dimension_numbers<[1], [0], [0], [1], [0, 0, 1, 1], [], []>} : vector<40x128xbf16>, vector<128x256xbf16>, vector<40x256xf32> -> vector<40x256xf32>
    %155 = arith.addf %150, %154 : vector<40x256xf32>
    %156 = vector.extract_strided_slice %141 {offsets = [8, 0], sizes = [40, 128], strides = [1, 1]} : vector<56x128xbf16> to vector<40x128xbf16>
    %c3_171 = arith.constant 3 : index
    %c0_172 = arith.constant 0 : index
    %c0_173 = arith.constant 0 : index
    %157 = vector.load %arg4[%c3_171, %c0_172, %c0_173] : memref<5x128x256xbf16, #tpu.memory_space<vmem>>, vector<1x128x256xbf16>
    %158 = vector.shape_cast %157 : vector<1x128x256xbf16> to vector<128x256xbf16>
    %cst_174 = arith.constant dense<0.000000e+00> : vector<40x256xf32>
    %159 = tpu.matmul %156, %158, %cst_174 {dimension_numbers = #tpu.dot_dimension_numbers<[1], [0], [0], [1], [0, 0, 1, 1], [], []>} : vector<40x128xbf16>, vector<128x256xbf16>, vector<40x256xf32> -> vector<40x256xf32>
    %160 = arith.addf %155, %159 : vector<40x256xf32>
    %161 = vector.extract_strided_slice %70 {offsets = [16, 0], sizes = [40, 128], strides = [1, 1]} : vector<56x128xbf16> to vector<40x128xbf16>
    %c4_175 = arith.constant 4 : index
    %c0_176 = arith.constant 0 : index
    %c0_177 = arith.constant 0 : index
    %162 = vector.load %arg4[%c4_175, %c0_176, %c0_177] : memref<5x128x256xbf16, #tpu.memory_space<vmem>>, vector<1x128x256xbf16>
    %163 = vector.shape_cast %162 : vector<1x128x256xbf16> to vector<128x256xbf16>
    %cst_178 = arith.constant dense<0.000000e+00> : vector<40x256xf32>
    %164 = tpu.matmul %161, %163, %cst_178 {dimension_numbers = #tpu.dot_dimension_numbers<[1], [0], [0], [1], [0, 0, 1, 1], [], []>} : vector<40x128xbf16>, vector<128x256xbf16>, vector<40x256xf32> -> vector<40x256xf32>
    %165 = arith.addf %160, %164 : vector<40x256xf32>
    %166 = vector.extract_strided_slice %165 {offsets = [0, 0], sizes = [40, 128], strides = [1, 1]} : vector<40x256xf32> to vector<40x128xf32>
    %167 = vector.extract_strided_slice %165 {offsets = [0, 128], sizes = [40, 128], strides = [1, 1]} : vector<40x256xf32> to vector<40x128xf32>
    %168 = arith.maximumf %166, %167 : vector<40x128xf32>
    %169 = vector.extract_strided_slice %141 {offsets = [0, 0], sizes = [40, 128], strides = [1, 1]} : vector<56x128xbf16> to vector<40x128xbf16>
    %c0_179 = arith.constant 0 : index
    %c0_180 = arith.constant 0 : index
    %c0_181 = arith.constant 0 : index
    %170 = vector.load %arg4[%c0_179, %c0_180, %c0_181] : memref<5x128x256xbf16, #tpu.memory_space<vmem>>, vector<1x128x256xbf16>
    %171 = vector.shape_cast %170 : vector<1x128x256xbf16> to vector<128x256xbf16>
    %cst_182 = arith.constant dense<0.000000e+00> : vector<40x256xf32>
    %172 = tpu.matmul %169, %171, %cst_182 {dimension_numbers = #tpu.dot_dimension_numbers<[1], [0], [0], [1], [0, 0, 1, 1], [], []>} : vector<40x128xbf16>, vector<128x256xbf16>, vector<40x256xf32> -> vector<40x256xf32>
    %173 = vector.extract_strided_slice %70 {offsets = [8, 0], sizes = [40, 128], strides = [1, 1]} : vector<56x128xbf16> to vector<40x128xbf16>
    %c1_183 = arith.constant 1 : index
    %c0_184 = arith.constant 0 : index
    %c0_185 = arith.constant 0 : index
    %174 = vector.load %arg4[%c1_183, %c0_184, %c0_185] : memref<5x128x256xbf16, #tpu.memory_space<vmem>>, vector<1x128x256xbf16>
    %175 = vector.shape_cast %174 : vector<1x128x256xbf16> to vector<128x256xbf16>
    %cst_186 = arith.constant dense<0.000000e+00> : vector<40x256xf32>
    %176 = tpu.matmul %173, %175, %cst_186 {dimension_numbers = #tpu.dot_dimension_numbers<[1], [0], [0], [1], [0, 0, 1, 1], [], []>} : vector<40x128xbf16>, vector<128x256xbf16>, vector<40x256xf32> -> vector<40x256xf32>
    %177 = arith.addf %172, %176 : vector<40x256xf32>
    %178 = vector.extract_strided_slice %141 {offsets = [8, 0], sizes = [40, 128], strides = [1, 1]} : vector<56x128xbf16> to vector<40x128xbf16>
    %c2_187 = arith.constant 2 : index
    %c0_188 = arith.constant 0 : index
    %c0_189 = arith.constant 0 : index
    %179 = vector.load %arg4[%c2_187, %c0_188, %c0_189] : memref<5x128x256xbf16, #tpu.memory_space<vmem>>, vector<1x128x256xbf16>
    %180 = vector.shape_cast %179 : vector<1x128x256xbf16> to vector<128x256xbf16>
    %cst_190 = arith.constant dense<0.000000e+00> : vector<40x256xf32>
    %181 = tpu.matmul %178, %180, %cst_190 {dimension_numbers = #tpu.dot_dimension_numbers<[1], [0], [0], [1], [0, 0, 1, 1], [], []>} : vector<40x128xbf16>, vector<128x256xbf16>, vector<40x256xf32> -> vector<40x256xf32>
    %182 = arith.addf %177, %181 : vector<40x256xf32>
    %183 = vector.extract_strided_slice %70 {offsets = [16, 0], sizes = [40, 128], strides = [1, 1]} : vector<56x128xbf16> to vector<40x128xbf16>
    %c3_191 = arith.constant 3 : index
    %c0_192 = arith.constant 0 : index
    %c0_193 = arith.constant 0 : index
    %184 = vector.load %arg4[%c3_191, %c0_192, %c0_193] : memref<5x128x256xbf16, #tpu.memory_space<vmem>>, vector<1x128x256xbf16>
    %185 = vector.shape_cast %184 : vector<1x128x256xbf16> to vector<128x256xbf16>
    %cst_194 = arith.constant dense<0.000000e+00> : vector<40x256xf32>
    %186 = tpu.matmul %183, %185, %cst_194 {dimension_numbers = #tpu.dot_dimension_numbers<[1], [0], [0], [1], [0, 0, 1, 1], [], []>} : vector<40x128xbf16>, vector<128x256xbf16>, vector<40x256xf32> -> vector<40x256xf32>
    %187 = arith.addf %182, %186 : vector<40x256xf32>
    %188 = vector.extract_strided_slice %141 {offsets = [16, 0], sizes = [40, 128], strides = [1, 1]} : vector<56x128xbf16> to vector<40x128xbf16>
    %c4_195 = arith.constant 4 : index
    %c0_196 = arith.constant 0 : index
    %c0_197 = arith.constant 0 : index
    %189 = vector.load %arg4[%c4_195, %c0_196, %c0_197] : memref<5x128x256xbf16, #tpu.memory_space<vmem>>, vector<1x128x256xbf16>
    %190 = vector.shape_cast %189 : vector<1x128x256xbf16> to vector<128x256xbf16>
    %cst_198 = arith.constant dense<0.000000e+00> : vector<40x256xf32>
    %191 = tpu.matmul %188, %190, %cst_198 {dimension_numbers = #tpu.dot_dimension_numbers<[1], [0], [0], [1], [0, 0, 1, 1], [], []>} : vector<40x128xbf16>, vector<128x256xbf16>, vector<40x256xf32> -> vector<40x256xf32>
    %192 = arith.addf %187, %191 : vector<40x256xf32>
    %193 = vector.extract_strided_slice %192 {offsets = [0, 0], sizes = [40, 128], strides = [1, 1]} : vector<40x256xf32> to vector<40x128xf32>
    %194 = vector.extract_strided_slice %192 {offsets = [0, 128], sizes = [40, 128], strides = [1, 1]} : vector<40x256xf32> to vector<40x128xf32>
    %195 = arith.maximumf %193, %194 : vector<40x128xf32>
    %196 = arith.maximumf %168, %195 : vector<40x128xf32>
    %c0_199 = arith.constant 0 : index
    %c0_200 = arith.constant 0 : index
    %197 = vector.load %arg5[%c0_199, %c0_200] : memref<1x128xf32, #tpu.memory_space<vmem>>, vector<1x128xf32>
    %198 = vector.broadcast %197 : vector<1x128xf32> to vector<40x128xf32>
    %199 = arith.addf %196, %198 : vector<40x128xf32>
    %cst_201 = arith.constant 0.000000e+00 : f32
    %200 = vector.broadcast %cst_201 : f32 to vector<40x128xf32>
    %201 = arith.maximumf %199, %200 : vector<40x128xf32>
    %202 = arith.truncf %201 : vector<40x128xf32> to vector<40x128xbf16>
    %203 = vector.extract_strided_slice %202 {offsets = [0, 0], sizes = [8, 128], strides = [1, 1]} : vector<40x128xbf16> to vector<8x128xbf16>
    %c0_202 = arith.constant 0 : index
    %c0_203 = arith.constant 0 : index
    %c0_204 = arith.constant 0 : index
    %204 = vector.load %arg6[%c0_202, %c0_203, %c0_204] : memref<5x128x120xbf16, #tpu.memory_space<vmem>>, vector<1x128x120xbf16>
    %205 = vector.shape_cast %204 : vector<1x128x120xbf16> to vector<128x120xbf16>
    %cst_205 = arith.constant dense<0.000000e+00> : vector<8x120xf32>
    %206 = tpu.matmul %203, %205, %cst_205 {dimension_numbers = #tpu.dot_dimension_numbers<[1], [0], [0], [1], [0, 0, 1, 1], [], []>} : vector<8x128xbf16>, vector<128x120xbf16>, vector<8x120xf32> -> vector<8x120xf32>
    %207 = vector.extract_strided_slice %202 {offsets = [8, 0], sizes = [8, 128], strides = [1, 1]} : vector<40x128xbf16> to vector<8x128xbf16>
    %c1_206 = arith.constant 1 : index
    %c0_207 = arith.constant 0 : index
    %c0_208 = arith.constant 0 : index
    %208 = vector.load %arg6[%c1_206, %c0_207, %c0_208] : memref<5x128x120xbf16, #tpu.memory_space<vmem>>, vector<1x128x120xbf16>
    %209 = vector.shape_cast %208 : vector<1x128x120xbf16> to vector<128x120xbf16>
    %cst_209 = arith.constant dense<0.000000e+00> : vector<8x120xf32>
    %210 = tpu.matmul %207, %209, %cst_209 {dimension_numbers = #tpu.dot_dimension_numbers<[1], [0], [0], [1], [0, 0, 1, 1], [], []>} : vector<8x128xbf16>, vector<128x120xbf16>, vector<8x120xf32> -> vector<8x120xf32>
    %211 = arith.addf %206, %210 : vector<8x120xf32>
    %212 = vector.extract_strided_slice %202 {offsets = [16, 0], sizes = [8, 128], strides = [1, 1]} : vector<40x128xbf16> to vector<8x128xbf16>
    %c2_210 = arith.constant 2 : index
    %c0_211 = arith.constant 0 : index
    %c0_212 = arith.constant 0 : index
    %213 = vector.load %arg6[%c2_210, %c0_211, %c0_212] : memref<5x128x120xbf16, #tpu.memory_space<vmem>>, vector<1x128x120xbf16>
    %214 = vector.shape_cast %213 : vector<1x128x120xbf16> to vector<128x120xbf16>
    %cst_213 = arith.constant dense<0.000000e+00> : vector<8x120xf32>
    %215 = tpu.matmul %212, %214, %cst_213 {dimension_numbers = #tpu.dot_dimension_numbers<[1], [0], [0], [1], [0, 0, 1, 1], [], []>} : vector<8x128xbf16>, vector<128x120xbf16>, vector<8x120xf32> -> vector<8x120xf32>
    %216 = arith.addf %211, %215 : vector<8x120xf32>
    %217 = vector.extract_strided_slice %202 {offsets = [24, 0], sizes = [8, 128], strides = [1, 1]} : vector<40x128xbf16> to vector<8x128xbf16>
    %c3_214 = arith.constant 3 : index
    %c0_215 = arith.constant 0 : index
    %c0_216 = arith.constant 0 : index
    %218 = vector.load %arg6[%c3_214, %c0_215, %c0_216] : memref<5x128x120xbf16, #tpu.memory_space<vmem>>, vector<1x128x120xbf16>
    %219 = vector.shape_cast %218 : vector<1x128x120xbf16> to vector<128x120xbf16>
    %cst_217 = arith.constant dense<0.000000e+00> : vector<8x120xf32>
    %220 = tpu.matmul %217, %219, %cst_217 {dimension_numbers = #tpu.dot_dimension_numbers<[1], [0], [0], [1], [0, 0, 1, 1], [], []>} : vector<8x128xbf16>, vector<128x120xbf16>, vector<8x120xf32> -> vector<8x120xf32>
    %221 = arith.addf %216, %220 : vector<8x120xf32>
    %222 = vector.extract_strided_slice %202 {offsets = [32, 0], sizes = [8, 128], strides = [1, 1]} : vector<40x128xbf16> to vector<8x128xbf16>
    %c4_218 = arith.constant 4 : index
    %c0_219 = arith.constant 0 : index
    %c0_220 = arith.constant 0 : index
    %223 = vector.load %arg6[%c4_218, %c0_219, %c0_220] : memref<5x128x120xbf16, #tpu.memory_space<vmem>>, vector<1x128x120xbf16>
    %224 = vector.shape_cast %223 : vector<1x128x120xbf16> to vector<128x120xbf16>
    %cst_221 = arith.constant dense<0.000000e+00> : vector<8x120xf32>
    %225 = tpu.matmul %222, %224, %cst_221 {dimension_numbers = #tpu.dot_dimension_numbers<[1], [0], [0], [1], [0, 0, 1, 1], [], []>} : vector<8x128xbf16>, vector<128x120xbf16>, vector<8x120xf32> -> vector<8x120xf32>
    %226 = arith.addf %221, %225 : vector<8x120xf32>
    %c0_222 = arith.constant 0 : index
    %c0_223 = arith.constant 0 : index
    %227 = vector.load %arg7[%c0_222, %c0_223] : memref<1x120xf32, #tpu.memory_space<vmem>>, vector<1x120xf32>
    %228 = vector.broadcast %227 : vector<1x120xf32> to vector<8x120xf32>
    %229 = arith.addf %226, %228 : vector<8x120xf32>
    %cst_224 = arith.constant 0.000000e+00 : f32
    %230 = vector.broadcast %cst_224 : f32 to vector<8x120xf32>
    %231 = arith.maximumf %229, %230 : vector<8x120xf32>
    %232 = arith.truncf %231 : vector<8x120xf32> to vector<8x120xbf16>
    %c0_225 = arith.constant 0 : index
    %c0_226 = arith.constant 0 : index
    %233 = vector.load %arg8[%c0_225, %c0_226] : memref<120x84xbf16, #tpu.memory_space<vmem>>, vector<120x84xbf16>
    %cst_227 = arith.constant dense<0.000000e+00> : vector<8x84xf32>
    %234 = tpu.matmul %232, %233, %cst_227 {dimension_numbers = #tpu.dot_dimension_numbers<[1], [0], [0], [1], [0, 0, 1, 1], [], []>} : vector<8x120xbf16>, vector<120x84xbf16>, vector<8x84xf32> -> vector<8x84xf32>
    %c0_228 = arith.constant 0 : index
    %c0_229 = arith.constant 0 : index
    %235 = vector.load %arg9[%c0_228, %c0_229] : memref<1x84xf32, #tpu.memory_space<vmem>>, vector<1x84xf32>
    %236 = vector.broadcast %235 : vector<1x84xf32> to vector<8x84xf32>
    %237 = arith.addf %234, %236 : vector<8x84xf32>
    %cst_230 = arith.constant 0.000000e+00 : f32
    %238 = vector.broadcast %cst_230 : f32 to vector<8x84xf32>
    %239 = arith.maximumf %237, %238 : vector<8x84xf32>
    %240 = arith.truncf %239 : vector<8x84xf32> to vector<8x84xbf16>
    %c0_231 = arith.constant 0 : index
    %c0_232 = arith.constant 0 : index
    %241 = vector.load %arg10[%c0_231, %c0_232] : memref<84x128xbf16, #tpu.memory_space<vmem>>, vector<84x128xbf16>
    %cst_233 = arith.constant dense<0.000000e+00> : vector<8x128xf32>
    %242 = tpu.matmul %240, %241, %cst_233 {dimension_numbers = #tpu.dot_dimension_numbers<[1], [0], [0], [1], [0, 0, 1, 1], [], []>} : vector<8x84xbf16>, vector<84x128xbf16>, vector<8x128xf32> -> vector<8x128xf32>
    %c0_234 = arith.constant 0 : index
    %c0_235 = arith.constant 0 : index
    %243 = vector.load %arg11[%c0_234, %c0_235] : memref<1x128xf32, #tpu.memory_space<vmem>>, vector<1x128xf32>
    %244 = vector.broadcast %243 : vector<1x128xf32> to vector<8x128xf32>
    %245 = arith.addf %242, %244 : vector<8x128xf32>
    %c0_236 = arith.constant 0 : index
    %c0_237 = arith.constant 0 : index
    %246 = vector.load %arg12[%c0_236, %c0_237] : memref<8x128xf32, #tpu.memory_space<vmem>>, vector<8x128xf32>
    tpu.vector_store %arg12[%c0_236, %c0_237], %245 {strides = array<i32>} : memref<8x128xf32, #tpu.memory_space<vmem>>, vector<8x128xf32>,
    return
  }
  func.func @transform_0(%arg0: i32) -> (i32, i32, i32, i32) {
    %c0_i32 = arith.constant 0 : i32
    %c0_i32_0 = arith.constant 0 : i32
    %c0_i32_1 = arith.constant 0 : i32
    %c0_i32_2 = arith.constant 0 : i32
    return %arg0, %c0_i32, %c0_i32_0, %c0_i32_1 : i32, i32, i32, i32
  }
  func.func @transform_1(%arg0: i32) -> (i32, i32, i32) {
    %c0_i32 = arith.constant 0 : i32
    %c0_i32_0 = arith.constant 0 : i32
    %c0_i32_1 = arith.constant 0 : i32
    %c0_i32_2 = arith.constant 0 : i32
    return %c0_i32, %c0_i32_0, %c0_i32_1 : i32, i32, i32
  }
  func.func @transform_2(%arg0: i32) -> (i32, i32) {
    %c0_i32 = arith.constant 0 : i32
    %c0_i32_0 = arith.constant 0 : i32
    %c0_i32_1 = arith.constant 0 : i32
    return %c0_i32, %c0_i32_0 : i32, i32
  }
  func.func @transform_3(%arg0: i32) -> (i32, i32, i32) {
    %c0_i32 = arith.constant 0 : i32
    %c0_i32_0 = arith.constant 0 : i32
    %c0_i32_1 = arith.constant 0 : i32
    %c0_i32_2 = arith.constant 0 : i32
    return %c0_i32, %c0_i32_0, %c0_i32_1 : i32, i32, i32
  }
  func.func @transform_4(%arg0: i32) -> (i32, i32) {
    %c0_i32 = arith.constant 0 : i32
    %c0_i32_0 = arith.constant 0 : i32
    %c0_i32_1 = arith.constant 0 : i32
    return %c0_i32, %c0_i32_0 : i32, i32
  }
  func.func @transform_5(%arg0: i32) -> (i32, i32, i32) {
    %c0_i32 = arith.constant 0 : i32
    %c0_i32_0 = arith.constant 0 : i32
    %c0_i32_1 = arith.constant 0 : i32
    %c0_i32_2 = arith.constant 0 : i32
    return %c0_i32, %c0_i32_0, %c0_i32_1 : i32, i32, i32
  }
  func.func @transform_6(%arg0: i32) -> (i32, i32) {
    %c0_i32 = arith.constant 0 : i32
    %c0_i32_0 = arith.constant 0 : i32
    %c0_i32_1 = arith.constant 0 : i32
    return %c0_i32, %c0_i32_0 : i32, i32
  }
  func.func @transform_7(%arg0: i32) -> (i32, i32) {
    %c0_i32 = arith.constant 0 : i32
    %c0_i32_0 = arith.constant 0 : i32
    %c0_i32_1 = arith.constant 0 : i32
    return %c0_i32, %c0_i32_0 : i32, i32
  }
  func.func @transform_8(%arg0: i32) -> (i32, i32) {
    %c0_i32 = arith.constant 0 : i32
    %c0_i32_0 = arith.constant 0 : i32
    %c0_i32_1 = arith.constant 0 : i32
    return %c0_i32, %c0_i32_0 : i32, i32
  }
  func.func @transform_9(%arg0: i32) -> (i32, i32) {
    %c0_i32 = arith.constant 0 : i32
    %c0_i32_0 = arith.constant 0 : i32
    %c0_i32_1 = arith.constant 0 : i32
    return %c0_i32, %c0_i32_0 : i32, i32
  }
  func.func @transform_10(%arg0: i32) -> (i32, i32) {
    %c0_i32 = arith.constant 0 : i32
    %c0_i32_0 = arith.constant 0 : i32
    %c0_i32_1 = arith.constant 0 : i32
    return %c0_i32, %c0_i32_0 : i32, i32
  }
  func.func @transform_11(%arg0: i32) -> (i32, i32) {
    %c0_i32 = arith.constant 0 : i32
    %c0_i32_0 = arith.constant 0 : i32
    return %arg0, %c0_i32 : i32, i32
  }
}

</mosaic_0001>

<llo_original>
// kernel: tile.13
$region0: #{tile.13}
  #allocation0 [shape = 's32[1]{0}', space=sflag, size = 0x4, scoped, tag = 'scoped memory for tile.13']
  %s0 = inlined_call_operand.vmem [shape: f32[6], index: 0, kind: input, shape index: {}]
  %s1 = inlined_call_operand.vmem [shape: f32[14,6], index: 1, kind: output, shape index: {}]
  // Predicated region
  $region2: #{tile.13} parent=0 // pred_check
    _
  $region3: #{tile.13} parent=0 // pred_check_branch
    %3 = sbr.rel (0) target = $region5
  $region4: #{tile.13} parent=0 // pred_region
    _
  $region5: #{tile.13} parent=0 // pred_fallthru
    _
  %v4 = vld [vmem:[%s0] ss:$0 sm:$0xff]
  %5 = vst [vmem:[%s1] sm:$0xff] %v4
  %s6 = scalar_lea.vmem %s1, 8
  %7 = vst [vmem:[%s6] sm:$0xff] %v4

// kernel: tile.14
$region0: #{tile.14}
  %s0 = inlined_call_operand.vmem [shape: f32[14,6], index: 0, kind: input, shape index: {}]
  %s1 = inlined_call_operand.vmem [shape: f32[84], index: 1, kind: output, shape index: {}]
  $region1: #{tile.14} parent=0
    #allocation0 [shape = 'u8[4096]{0}', space=vmem, size = 0x1000, scoped, tag = 'scoped mem for output reshape']
    %v2 = vld [vmem:[%s0] sm:$0x1]
    %vm3 = vcmask 48128
    %4 = vst.msk [vmem:[#allocation0] sm:$0x1] %vm3, %v2
    %s5 = scalar_lea.vmem %s0, 13
    %v6 = vld [vmem:[%s5] sm:$0x1]
    %7 = vrot.lane.b32.xlu0 %v6, 78
    %v8 = vpop.permute.xlu0 %7
    %vm9 = vcmask 687728
    %10 = vst.msk [vmem:[#allocation0] sm:$0x1] %vm9, %v8
    %s11 = scalar_lea.vmem %s0, 12
    %v12 = vld [vmem:[%s11] sm:$0x1]
    %13 = vrot.lane.b32.xlu0 %v12, 72
    %v14 = vpop.permute.xlu0 %13
    %vm15 = vcmask 638528
    %16 = vst.msk [vmem:[#allocation0] sm:$0x1] %vm15, %v14
    %s17 = scalar_lea.vmem %s0, 11
    %v18 = vld [vmem:[%s17] sm:$0x1]
    %19 = vrot.lane.b32.xlu0 %v18, 66
    %v20 = vpop.permute.xlu0 %19
    %vm21 = vcmask 589328
    %22 = vst.msk [vmem:[#allocation0] sm:$0x1] %vm21, %v20
    %s23 = scalar_lea.vmem %s0, 10
    %v24 = vld [vmem:[%s23] sm:$0x1]
    %25 = vrot.lane.b32.xlu0 %v24, 60
    %v26 = vpop.permute.xlu0 %25
    %vm27 = vcmask 540128
    %28 = vst.msk [vmem:[#allocation0] sm:$0x1] %vm27, %v26
    %s29 = scalar_lea.vmem %s0, 9
    %v30 = vld [vmem:[%s29] sm:$0x1]
    %31 = vrot.lane.b32.xlu0 %v30, 54
    %v32 = vpop.permute.xlu0 %31
    %vm33 = vcmask 490928
    %34 = vst.msk [vmem:[#allocation0] sm:$0x1] %vm33, %v32
    %s35 = scalar_lea.vmem %s0, 8
    %v36 = vld [vmem:[%s35] sm:$0x1]
    %37 = vrot.lane.b32.xlu0 %v36, 48
    %v38 = vpop.permute.xlu0 %37
    %vm39 = vcmask 441728
    %40 = vst.msk [vmem:[#allocation0] sm:$0x1] %vm39, %v38
    %s41 = scalar_lea.vmem %s0, 7
    %v42 = vld [vmem:[%s41] sm:$0x1]
    %43 = vrot.lane.b32.xlu0 %v42, 42
    %v44 = vpop.permute.xlu0 %43
    %vm45 = vcmask 392528
    %46 = vst.msk [vmem:[#allocation0] sm:$0x1] %vm45, %v44
    %s47 = scalar_lea.vmem %s0, 6
    %v48 = vld [vmem:[%s47] sm:$0x1]
    %49 = vrot.lane.b32.xlu0 %v48, 36
    %v50 = vpop.permute.xlu0 %49
    %vm51 = vcmask 343328
    %52 = vst.msk [vmem:[#allocation0] sm:$0x1] %vm51, %v50
    %s53 = scalar_lea.vmem %s0, 5
    %v54 = vld [vmem:[%s53] sm:$0x1]
    %55 = vrot.lane.b32.xlu0 %v54, 30
    %v56 = vpop.permute.xlu0 %55
    %vm57 = vcmask 294128
    %58 = vst.msk [vmem:[#allocation0] sm:$0x1] %vm57, %v56
    %s59 = scalar_lea.vmem %s0, 4
    %v60 = vld [vmem:[%s59] sm:$0x1]
    %61 = vrot.lane.b32.xlu0 %v60, 24
    %v62 = vpop.permute.xlu0 %61
    %vm63 = vcmask 244928
    %64 = vst.msk [vmem:[#allocation0] sm:$0x1] %vm63, %v62
    %s65 = scalar_lea.vmem %s0, 3
    %v66 = vld [vmem:[%s65] sm:$0x1]
    %67 = vrot.lane.b32.xlu0 %v66, 18
    %v68 = vpop.permute.xlu0 %67
    %vm69 = vcmask 195728
    %70 = vst.msk [vmem:[#allocation0] sm:$0x1] %vm69, %v68
    %s71 = scalar_lea.vmem %s0, 2
    %v72 = vld [vmem:[%s71] sm:$0x1]
    %73 = vrot.lane.b32.xlu0 %v72, 12
    %v74 = vpop.permute.xlu0 %73
    %vm75 = vcmask 146528
    %76 = vst.msk [vmem:[#allocation0] sm:$0x1] %vm75, %v74
    %s77 = scalar_lea.vmem %s0, 1
    %v78 = vld [vmem:[%s77] sm:$0x1]
    %79 = vrot.lane.b32.xlu0 %v78, 6
    %v80 = vpop.permute.xlu0 %79
    %vm81 = vcmask 97328
    %82 = vst.msk [vmem:[#allocation0] sm:$0x1] %vm81, %v80
    %s84 = ssub.s32 2, 1
    %v85 = vld [vmem:[#allocation0] sm:%s84]
    %s87 = ssub.s32 2, 1
    %88 = vst [vmem:[%s1] sm:%s87] %v85

// kernel: tile.18
$region0: #{tile.18}
  #allocation0 [shape = 's32[1]{0}', space=sflag, size = 0x4, scoped, tag = 'scoped memory for tile.18']
  %s0 = inlined_call_operand.vmem [shape: f32[16], index: 0, kind: input, shape index: {}]
  %s1 = inlined_call_operand.vmem [shape: f32[5,16], index: 1, kind: output, shape index: {}]
  // Predicated region
  $region2: #{tile.18} parent=0 // pred_check
    _
  $region3: #{tile.18} parent=0 // pred_check_branch
    %3 = sbr.rel (0) target = $region5
  $region4: #{tile.18} parent=0 // pred_region
    _
  $region5: #{tile.18} parent=0 // pred_fallthru
    _
  %v4 = vld [vmem:[%s0] ss:$0 sm:$0xff]
  %5 = vst [vmem:[%s1] sm:$0xff] %v4

// kernel: tile.19
$region0: #{tile.19}
  %s0 = inlined_call_operand.vmem [shape: f32[5,16], index: 0, kind: input, shape index: {}]
  %s1 = inlined_call_operand.vmem [shape: f32[80], index: 1, kind: output, shape index: {}]
  $region1: #{tile.19} parent=0
    #allocation0 [shape = 'u8[4096]{0}', space=vmem, size = 0x1000, scoped, tag = 'scoped mem for output reshape']
    %v2 = vld [vmem:[%s0] sm:$0x1]
    %vm3 = vcmask 130048
    %4 = vst.msk [vmem:[#allocation0] sm:$0x1] %vm3, %v2
    %s5 = scalar_lea.vmem %s0, 4
    %v6 = vld [vmem:[%s5] sm:$0x1]
    %7 = vrot.lane.b32.xlu0 %v6, 64
    %v8 = vpop.permute.xlu0 %7
    %vm9 = vcmask 654848
    %10 = vst.msk [vmem:[#allocation0] sm:$0x1] %vm9, %v8
    %s11 = scalar_lea.vmem %s0, 3
    %v12 = vld [vmem:[%s11] sm:$0x1]
    %13 = vrot.lane.b32.xlu0 %v12, 48
    %v14 = vpop.permute.xlu0 %13
    %vm15 = vcmask 523648
    %16 = vst.msk [vmem:[#allocation0] sm:$0x1] %vm15, %v14
    %s17 = scalar_lea.vmem %s0, 2
    %v18 = vld [vmem:[%s17] sm:$0x1]
    %19 = vrot.lane.b32.xlu0 %v18, 32
    %v20 = vpop.permute.xlu0 %19
    %vm21 = vcmask 392448
    %22 = vst.msk [vmem:[#allocation0] sm:$0x1] %vm21, %v20
    %s23 = scalar_lea.vmem %s0, 1
    %v24 = vld [vmem:[%s23] sm:$0x1]
    %25 = vrot.lane.b32.xlu0 %v24, 16
    %v26 = vpop.permute.xlu0 %25
    %vm27 = vcmask 261248
    %28 = vst.msk [vmem:[#allocation0] sm:$0x1] %vm27, %v26
    %s30 = ssub.s32 2, 1
    %v31 = vld [vmem:[#allocation0] sm:%s30]
    %s33 = ssub.s32 2, 1
    %34 = vst [vmem:[%s1] sm:%s33] %v31

// kernel: lenet_forward.1
$region0: #{lenet_forward.1}
  #allocation0 [shape = 'u32[]', space=smem, size = 0x4, offset = 0x4, fixed_abs, tag = 'smem constant byte address 0x4 - core index']
  #allocation1 [shape = 'u32[72,128]{1,0:T(1,128)}', space=vmem, size = 0x9000, scoped, tag = 'internal scratch']
  %s0 = inlined_call_operand.vmem [shape: bf16[1,4,64,96], index: 0, kind: input, shape index: {}]
  %s1 = inlined_call_operand.vmem [shape: bf16[5,96,256], index: 1, kind: input, shape index: {}]
  %s2 = inlined_call_operand.vmem [shape: f32[1,128], index: 2, kind: input, shape index: {}]
  %s3 = inlined_call_operand.vmem [shape: bf16[5,128,256], index: 3, kind: input, shape index: {}]
  %s4 = inlined_call_operand.vmem [shape: f32[1,128], index: 4, kind: input, shape index: {}]
  %s5 = inlined_call_operand.vmem [shape: bf16[5,128,120], index: 5, kind: input, shape index: {}]
  %s6 = inlined_call_operand.vmem [shape: f32[1,120], index: 6, kind: input, shape index: {}]
  %s7 = inlined_call_operand.vmem [shape: bf16[120,84], index: 7, kind: input, shape index: {}]
  %s8 = inlined_call_operand.vmem [shape: f32[1,84], index: 8, kind: input, shape index: {}]
  %s9 = inlined_call_operand.vmem [shape: bf16[84,128], index: 9, kind: input, shape index: {}]
  %s10 = inlined_call_operand.vmem [shape: f32[1,128], index: 10, kind: input, shape index: {}]
  %s11 = inlined_call_operand.vmem [shape: f32[8,128], index: 11, kind: output, shape index: {}]
  %s12 = sld [smem:[#allocation0]]
  $region54: #{lenet_forward.1} parent=0
    _
  %s14 = ssub.s32 1, %s12
  %s15 = scalar_select 0, %s14, %s12
  // Predicated region
  $region2: #{lenet_forward.1} parent=0 // pred_check
    _
  $region3: #{lenet_forward.1} parent=0 // pred_check_branch
    %17 = sbr.rel (0) target = $region5
  $region4: #{lenet_forward.1} parent=0 // pred_region
    _
  $region5: #{lenet_forward.1} parent=0 // pred_fallthru
    _
  // Predicated region
  $region6: #{lenet_forward.1} parent=0 // pred_check
    _
  $region7: #{lenet_forward.1} parent=0 // pred_check_branch
    %19 = sbr.rel (0) target = $region9
  $region8: #{lenet_forward.1} parent=0 // pred_region
    _
  $region9: #{lenet_forward.1} parent=0 // pred_fallthru
    _
  // Predicated region
  $region10: #{lenet_forward.1} parent=0 // pred_check
    _
  $region11: #{lenet_forward.1} parent=0 // pred_check_branch
    %21 = sbr.rel (0) target = $region13
  $region12: #{lenet_forward.1} parent=0 // pred_region
    _
  $region13: #{lenet_forward.1} parent=0 // pred_fallthru
    _
  // Predicated region
  $region14: #{lenet_forward.1} parent=0 // pred_check
    _
  $region15: #{lenet_forward.1} parent=0 // pred_check_branch
    %23 = sbr.rel (0) target = $region17
  $region16: #{lenet_forward.1} parent=0 // pred_region
    _
  $region17: #{lenet_forward.1} parent=0 // pred_fallthru
    _
  // Predicated region
  $region18: #{lenet_forward.1} parent=0 // pred_check
    _
  $region19: #{lenet_forward.1} parent=0 // pred_check_branch
    %25 = sbr.rel (0) target = $region21
  $region20: #{lenet_forward.1} parent=0 // pred_region
    _
  $region21: #{lenet_forward.1} parent=0 // pred_fallthru
    _
  // Predicated region
  $region22: #{lenet_forward.1} parent=0 // pred_check
    _
  $region23: #{lenet_forward.1} parent=0 // pred_check_branch
    %27 = sbr.rel (0) target = $region25
  $region24: #{lenet_forward.1} parent=0 // pred_region
    _
  $region25: #{lenet_forward.1} parent=0 // pred_fallthru
    _
  // Predicated region
  $region26: #{lenet_forward.1} parent=0 // pred_check
    _
  $region27: #{lenet_forward.1} parent=0 // pred_check_branch
    %29 = sbr.rel (0) target = $region29
  $region28: #{lenet_forward.1} parent=0 // pred_region
    _
  $region29: #{lenet_forward.1} parent=0 // pred_fallthru
    _
  // Predicated region
  $region30: #{lenet_forward.1} parent=0 // pred_check
    _
  $region31: #{lenet_forward.1} parent=0 // pred_check_branch
    %31 = sbr.rel (0) target = $region33
  $region32: #{lenet_forward.1} parent=0 // pred_region
    _
  $region33: #{lenet_forward.1} parent=0 // pred_fallthru
    _
  // Predicated region
  $region34: #{lenet_forward.1} parent=0 // pred_check
    _
  $region35: #{lenet_forward.1} parent=0 // pred_check_branch
    %33 = sbr.rel (0) target = $region37
  $region36: #{lenet_forward.1} parent=0 // pred_region
    _
  $region37: #{lenet_forward.1} parent=0 // pred_fallthru
    _
  // Predicated region
  $region38: #{lenet_forward.1} parent=0 // pred_check
    _
  $region39: #{lenet_forward.1} parent=0 // pred_check_branch
    %35 = sbr.rel (0) target = $region41
  $region40: #{lenet_forward.1} parent=0 // pred_region
    _
  $region41: #{lenet_forward.1} parent=0 // pred_fallthru
    _
  // Predicated region
  $region42: #{lenet_forward.1} parent=0 // pred_check
    _
  $region43: #{lenet_forward.1} parent=0 // pred_check_branch
    %37 = sbr.rel (0) target = $region45
  $region44: #{lenet_forward.1} parent=0 // pred_region
    _
  $region45: #{lenet_forward.1} parent=0 // pred_fallthru
    _
  %v39 = vld [vmem:[%s0] sm:$0xf]
  %v40 = vld [vmem:[%s0 + $0x4] sm:$0xf]
  %v41 = vld [vmem:[%s0 + $0x8] sm:$0xf]
  %v42 = vld [vmem:[%s0 + $0xc] sm:$0xf]
  %v43 = vld [vmem:[%s0 + $0x10] sm:$0xf]
  %v44 = vld [vmem:[%s0 + $0x14] sm:$0xf]
  %v45 = vld [vmem:[%s0 + $0x18] sm:$0xf]
  %v46 = vld [vmem:[%s1] sm:$0xff]
  %v47 = vld [vmem:[%s1 + $0x8] sm:$0xff]
  %v48 = vld [vmem:[%s1 + $0x10] sm:$0xff]
  %v49 = vld [vmem:[%s1 + $0x18] sm:$0xff]
  %v50 = vld [vmem:[%s1 + $0x20] sm:$0xff]
  %v51 = vld [vmem:[%s1 + $0x28] sm:$0xff]
  %v52 = vld [vmem:[%s1 + $0x30] sm:$0xff]
  %v53 = vld [vmem:[%s1 + $0x38] sm:$0xff]
  %v54 = vld [vmem:[%s1 + $0x40] sm:$0xff]
  %v55 = vld [vmem:[%s1 + $0x48] sm:$0xff]
  %v56 = vld [vmem:[%s1 + $0x50] sm:$0xff]
  %v57 = vld [vmem:[%s1 + $0x58] sm:$0xff]
  %s58 = scalar_lea.vmem %s0, 32
  %v59 = vld [vmem:[%s58] sm:$0xf]
  %v60 = vld [vmem:[%s58 + $0x4] sm:$0xf]
  %v61 = vld [vmem:[%s58 + $0x8] sm:$0xf]
  %v62 = vld [vmem:[%s58 + $0xc] sm:$0xf]
  %v63 = vld [vmem:[%s58 + $0x10] sm:$0xf]
  %v64 = vld [vmem:[%s58 + $0x14] sm:$0xf]
  %v65 = vld [vmem:[%s58 + $0x18] sm:$0xf]
  %s66 = scalar_lea.vmem %s1, 96
  %v67 = vld [vmem:[%s66] sm:$0xff]
  %v68 = vld [vmem:[%s66 + $0x8] sm:$0xff]
  %v69 = vld [vmem:[%s66 + $0x10] sm:$0xff]
  %v70 = vld [vmem:[%s66 + $0x18] sm:$0xff]
  %v71 = vld [vmem:[%s66 + $0x20] sm:$0xff]
  %v72 = vld [vmem:[%s66 + $0x28] sm:$0xff]
  %v73 = vld [vmem:[%s66 + $0x30] sm:$0xff]
  %v74 = vld [vmem:[%s66 + $0x38] sm:$0xff]
  %v75 = vld [vmem:[%s66 + $0x40] sm:$0xff]
  %v76 = vld [vmem:[%s66 + $0x48] sm:$0xff]
  %v77 = vld [vmem:[%s66 + $0x50] sm:$0xff]
  %v78 = vld [vmem:[%s66 + $0x58] sm:$0xff]
  %v86 = vunpack.c.l.b16 %v59
  %v87 = vunpack.c.l.b16 %v60
  %v88 = vunpack.c.l.b16 %v61
  %v89 = vunpack.c.l.b16 %v62
  %v90 = vunpack.c.l.b16 %v63
  %v91 = vunpack.c.l.b16 %v64
  %v92 = vunpack.c.l.b16 %v65
  %v93 = vpack.c.b16 %v87, %v86
  %v94 = vpack.c.b16 %v89, %v88
  %v95 = vpack.c.b16 %v91, %v90
  %v96 = vpack.c.b16 %v92, %v92
  %v109 = vunpack.c.l.b16 %v67
  %v110 = vunpack.c.h.b16 %v67
  %v111 = vunpack.c.l.b16 %v68
  %v112 = vunpack.c.h.b16 %v68
  %v113 = vunpack.c.l.b16 %v69
  %v114 = vunpack.c.h.b16 %v69
  %v115 = vunpack.c.l.b16 %v70
  %v116 = vunpack.c.h.b16 %v70
  %v117 = vunpack.c.l.b16 %v71
  %v118 = vunpack.c.h.b16 %v71
  %v119 = vunpack.c.l.b16 %v72
  %v120 = vunpack.c.h.b16 %v72
  %v121 = vunpack.c.l.b16 %v73
  %v122 = vunpack.c.h.b16 %v73
  %v123 = vunpack.c.l.b16 %v74
  %v124 = vunpack.c.h.b16 %v74
  %v125 = vunpack.c.l.b16 %v75
  %v126 = vunpack.c.h.b16 %v75
  %v127 = vunpack.c.l.b16 %v76
  %v128 = vunpack.c.h.b16 %v76
  %v129 = vunpack.c.l.b16 %v77
  %v130 = vunpack.c.h.b16 %v77
  %v131 = vunpack.c.l.b16 %v78
  %v132 = vunpack.c.h.b16 %v78
  %v133 = vpack.c.b16 %v111, %v109
  %v134 = vpack.c.b16 %v112, %v110
  %v135 = vpack.c.b16 %v115, %v113
  %v136 = vpack.c.b16 %v116, %v114
  %v137 = vpack.c.b16 %v119, %v117
  %v138 = vpack.c.b16 %v120, %v118
  %v139 = vpack.c.b16 %v123, %v121
  %v140 = vpack.c.b16 %v124, %v122
  %v141 = vpack.c.b16 %v127, %v125
  %v142 = vpack.c.b16 %v128, %v126
  %v143 = vpack.c.b16 %v131, %v129
  %v144 = vpack.c.b16 %v132, %v130
  %vm157 = vcmask 785408
  %v159 = vsel %vm157, %v93, 0
  %v162 = vsel %vm157, %v94, 0
  %v165 = vsel %vm157, %v95, 0
  %v168 = vsel %vm157, %v96, 0
  %170 = vmatpush.bf16.msra.mxu0 0
  %171 = vmatpush.bf16.msra.mxu0 0
  %172 = vmatpush.bf16.msra.mxu0 %v143
  %173 = vmatpush.bf16.msra.mxu0 %v141
  %174 = vmatpush.bf16.msra.mxu0 %v139
  %175 = vmatpush.bf16.msra.mxu0 %v137
  %176 = vmatpush.bf16.msra.mxu0 %v135
  %177 = vmatpush.bf16.msra.mxu0 %v133
  %178 = vmatmul.bf16.gmra.mxu0 %v159
  %v179 = vpop.f32.mrf.mxu0
  %v180 = vadd.f32 0.0, %v179
  %v181 = vpop.f32.mrf.mxu0
  %v182 = vadd.f32 0.0, %v181
  %183 = vmatmul.bf16.gmra.mxu0 %v162
  %v184 = vpop.f32.mrf.mxu0
  %v185 = vadd.f32 0.0, %v184
  %v186 = vpop.f32.mrf.mxu0
  %v187 = vadd.f32 0.0, %v186
  %188 = vmatmul.bf16.gmra.mxu0 %v165
  %v189 = vpop.f32.mrf.mxu0
  %v190 = vadd.f32 0.0, %v189
  %v191 = vpop.f32.mrf.mxu0
  %v192 = vadd.f32 0.0, %v191
  %193 = vmatmul.bf16.gmra.mxu0 %v168
  %v194 = vpop.f32.mrf.mxu0
  %v195 = vadd.f32 0.0, %v194
  %v196 = vpop.f32.mrf.mxu0
  %197 = vdwg.mxu0
  %198 = vmatpush.bf16.msra.mxu0 0
  %199 = vmatpush.bf16.msra.mxu0 0
  %200 = vmatpush.bf16.msra.mxu0 %v144
  %201 = vmatpush.bf16.msra.mxu0 %v142
  %202 = vmatpush.bf16.msra.mxu0 %v140
  %203 = vmatpush.bf16.msra.mxu0 %v138
  %204 = vmatpush.bf16.msra.mxu0 %v136
  %205 = vmatpush.bf16.msra.mxu0 %v134
  %206 = vmatmul.bf16.gmra.mxu0 %v159
  %v207 = vpop.f32.mrf.mxu0
  %v208 = vadd.f32 0.0, %v207
  %v209 = vpop.f32.mrf.mxu0
  %v210 = vadd.f32 0.0, %v209
  %211 = vmatmul.bf16.gmra.mxu0 %v162
  %v212 = vpop.f32.mrf.mxu0
  %v213 = vadd.f32 0.0, %v212
  %v214 = vpop.f32.mrf.mxu0
  %v215 = vadd.f32 0.0, %v214
  %216 = vmatmul.bf16.gmra.mxu0 %v165
  %v217 = vpop.f32.mrf.mxu0
  %v218 = vadd.f32 0.0, %v217
  %v219 = vpop.f32.mrf.mxu0
  %v220 = vadd.f32 0.0, %v219
  %221 = vmatmul.bf16.gmra.mxu0 %v168
  %v222 = vpop.f32.mrf.mxu0
  %v223 = vadd.f32 0.0, %v222
  %v224 = vpop.f32.mrf.mxu0
  %225 = vdwg.mxu0
  %v233 = vunpack.c.l.b16 %v39
  %v234 = vunpack.c.l.b16 %v40
  %v235 = vunpack.c.l.b16 %v41
  %v236 = vunpack.c.l.b16 %v42
  %v237 = vunpack.c.l.b16 %v43
  %v238 = vunpack.c.l.b16 %v44
  %v239 = vunpack.c.l.b16 %v45
  %v240 = vpack.c.b16 %v234, %v233
  %v241 = vpack.c.b16 %v236, %v235
  %v242 = vpack.c.b16 %v238, %v237
  %v243 = vpack.c.b16 %v239, %v239
  %v256 = vunpack.c.l.b16 %v46
  %v257 = vunpack.c.h.b16 %v46
  %v258 = vunpack.c.l.b16 %v47
  %v259 = vunpack.c.h.b16 %v47
  %v260 = vunpack.c.l.b16 %v48
  %v261 = vunpack.c.h.b16 %v48
  %v262 = vunpack.c.l.b16 %v49
  %v263 = vunpack.c.h.b16 %v49
  %v264 = vunpack.c.l.b16 %v50
  %v265 = vunpack.c.h.b16 %v50
  %v266 = vunpack.c.l.b16 %v51
  %v267 = vunpack.c.h.b16 %v51
  %v268 = vunpack.c.l.b16 %v52
  %v269 = vunpack.c.h.b16 %v52
  %v270 = vunpack.c.l.b16 %v53
  %v271 = vunpack.c.h.b16 %v53
  %v272 = vunpack.c.l.b16 %v54
  %v273 = vunpack.c.h.b16 %v54
  %v274 = vunpack.c.l.b16 %v55
  %v275 = vunpack.c.h.b16 %v55
  %v276 = vunpack.c.l.b16 %v56
  %v277 = vunpack.c.h.b16 %v56
  %v278 = vunpack.c.l.b16 %v57
  %v279 = vunpack.c.h.b16 %v57
  %v280 = vpack.c.b16 %v258, %v256
  %v281 = vpack.c.b16 %v259, %v257
  %v282 = vpack.c.b16 %v262, %v260
  %v283 = vpack.c.b16 %v263, %v261
  %v284 = vpack.c.b16 %v266, %v264
  %v285 = vpack.c.b16 %v267, %v265
  %v286 = vpack.c.b16 %v270, %v268
  %v287 = vpack.c.b16 %v271, %v269
  %v288 = vpack.c.b16 %v274, %v272
  %v289 = vpack.c.b16 %v275, %v273
  %v290 = vpack.c.b16 %v278, %v276
  %v291 = vpack.c.b16 %v279, %v277
  %v305 = vsel %vm157, %v240, 0
  %v308 = vsel %vm157, %v241, 0
  %v311 = vsel %vm157, %v242, 0
  %v314 = vsel %vm157, %v243, 0
  %316 = vmatpush.bf16.msra.mxu0 0
  %317 = vmatpush.bf16.msra.mxu0 0
  %318 = vmatpush.bf16.msra.mxu0 %v290
  %319 = vmatpush.bf16.msra.mxu0 %v288
  %320 = vmatpush.bf16.msra.mxu0 %v286
  %321 = vmatpush.bf16.msra.mxu0 %v284
  %322 = vmatpush.bf16.msra.mxu0 %v282
  %323 = vmatpush.bf16.msra.mxu0 %v280
  %324 = vmatmul.bf16.gmra.mxu0 %v305
  %v325 = vpop.f32.mrf.mxu0
  %v326 = vadd.f32 %v180, %v325
  %v327 = vpop.f32.mrf.mxu0
  %v328 = vadd.f32 %v182, %v327
  %329 = vmatmul.bf16.gmra.mxu0 %v308
  %v330 = vpop.f32.mrf.mxu0
  %v331 = vadd.f32 %v185, %v330
  %v332 = vpop.f32.mrf.mxu0
  %v333 = vadd.f32 %v187, %v332
  %334 = vmatmul.bf16.gmra.mxu0 %v311
  %v335 = vpop.f32.mrf.mxu0
  %v336 = vadd.f32 %v190, %v335
  %v337 = vpop.f32.mrf.mxu0
  %v338 = vadd.f32 %v192, %v337
  %339 = vmatmul.bf16.gmra.mxu0 %v314
  %v340 = vpop.f32.mrf.mxu0
  %v341 = vadd.f32 %v195, %v340
  %v342 = vpop.f32.mrf.mxu0
  %343 = vdwg.mxu0
  %344 = vmatpush.bf16.msra.mxu0 0
  %345 = vmatpush.bf16.msra.mxu0 0
  %346 = vmatpush.bf16.msra.mxu0 %v291
  %347 = vmatpush.bf16.msra.mxu0 %v289
  %348 = vmatpush.bf16.msra.mxu0 %v287
  %349 = vmatpush.bf16.msra.mxu0 %v285
  %350 = vmatpush.bf16.msra.mxu0 %v283
  %351 = vmatpush.bf16.msra.mxu0 %v281
  %352 = vmatmul.bf16.gmra.mxu0 %v305
  %v353 = vpop.f32.mrf.mxu0
  %v354 = vadd.f32 %v208, %v353
  %v355 = vpop.f32.mrf.mxu0
  %v356 = vadd.f32 %v210, %v355
  %357 = vmatmul.bf16.gmra.mxu0 %v308
  %v358 = vpop.f32.mrf.mxu0
  %v359 = vadd.f32 %v213, %v358
  %v360 = vpop.f32.mrf.mxu0
  %v361 = vadd.f32 %v215, %v360
  %362 = vmatmul.bf16.gmra.mxu0 %v311
  %v363 = vpop.f32.mrf.mxu0
  %v364 = vadd.f32 %v218, %v363
  %v365 = vpop.f32.mrf.mxu0
  %v366 = vadd.f32 %v220, %v365
  %367 = vmatmul.bf16.gmra.mxu0 %v314
  %v368 = vpop.f32.mrf.mxu0
  %v369 = vadd.f32 %v223, %v368
  %v370 = vpop.f32.mrf.mxu0
  %371 = vdwg.mxu0
  %s372 = scalar_lea.vmem %s0, 64
  %v373 = vld [vmem:[%s372] sm:$0xf]
  %v374 = vld [vmem:[%s372 + $0x4] sm:$0xf]
  %v375 = vld [vmem:[%s372 + $0x8] sm:$0xf]
  %v376 = vld [vmem:[%s372 + $0xc] sm:$0xf]
  %v377 = vld [vmem:[%s372 + $0x10] sm:$0xf]
  %v378 = vld [vmem:[%s372 + $0x14] sm:$0xf]
  %v379 = vld [vmem:[%s372 + $0x18] sm:$0xf]
  %s380 = scalar_lea.vmem %s1, 192
  %v381 = vld [vmem:[%s380] sm:$0xff]
  %v382 = vld [vmem:[%s380 + $0x8] sm:$0xff]
  %v383 = vld [vmem:[%s380 + $0x10] sm:$0xff]
  %v384 = vld [vmem:[%s380 + $0x18] sm:$0xff]
  %v385 = vld [vmem:[%s380 + $0x20] sm:$0xff]
  %v386 = vld [vmem:[%s380 + $0x28] sm:$0xff]
  %v387 = vld [vmem:[%s380 + $0x30] sm:$0xff]
  %v388 = vld [vmem:[%s380 + $0x38] sm:$0xff]
  %v389 = vld [vmem:[%s380 + $0x40] sm:$0xff]
  %v390 = vld [vmem:[%s380 + $0x48] sm:$0xff]
  %v391 = vld [vmem:[%s380 + $0x50] sm:$0xff]
  %v392 = vld [vmem:[%s380 + $0x58] sm:$0xff]
  %v400 = vunpack.c.l.b16 %v373
  %v401 = vunpack.c.l.b16 %v374
  %v402 = vunpack.c.l.b16 %v375
  %v403 = vunpack.c.l.b16 %v376
  %v404 = vunpack.c.l.b16 %v377
  %v405 = vunpack.c.l.b16 %v378
  %v406 = vunpack.c.l.b16 %v379
  %v407 = vpack.c.b16 %v401, %v400
  %v408 = vpack.c.b16 %v403, %v402
  %v409 = vpack.c.b16 %v405, %v404
  %v410 = vpack.c.b16 %v406, %v406
  %v423 = vunpack.c.l.b16 %v381
  %v424 = vunpack.c.h.b16 %v381
  %v425 = vunpack.c.l.b16 %v382
  %v426 = vunpack.c.h.b16 %v382
  %v427 = vunpack.c.l.b16 %v383
  %v428 = vunpack.c.h.b16 %v383
  %v429 = vunpack.c.l.b16 %v384
  %v430 = vunpack.c.h.b16 %v384
  %v431 = vunpack.c.l.b16 %v385
  %v432 = vunpack.c.h.b16 %v385
  %v433 = vunpack.c.l.b16 %v386
  %v434 = vunpack.c.h.b16 %v386
  %v435 = vunpack.c.l.b16 %v387
  %v436 = vunpack.c.h.b16 %v387
  %v437 = vunpack.c.l.b16 %v388
  %v438 = vunpack.c.h.b16 %v388
  %v439 = vunpack.c.l.b16 %v389
  %v440 = vunpack.c.h.b16 %v389
  %v441 = vunpack.c.l.b16 %v390
  %v442 = vunpack.c.h.b16 %v390
  %v443 = vunpack.c.l.b16 %v391
  %v444 = vunpack.c.h.b16 %v391
  %v445 = vunpack.c.l.b16 %v392
  %v446 = vunpack.c.h.b16 %v392
  %v447 = vpack.c.b16 %v425, %v423
  %v448 = vpack.c.b16 %v426, %v424
  %v449 = vpack.c.b16 %v429, %v427
  %v450 = vpack.c.b16 %v430, %v428
  %v451 = vpack.c.b16 %v433, %v431
  %v452 = vpack.c.b16 %v434, %v432
  %v453 = vpack.c.b16 %v437, %v435
  %v454 = vpack.c.b16 %v438, %v436
  %v455 = vpack.c.b16 %v441, %v439
  %v456 = vpack.c.b16 %v442, %v440
  %v457 = vpack.c.b16 %v445, %v443
  %v458 = vpack.c.b16 %v446, %v444
  %v472 = vsel %vm157, %v407, 0
  %v475 = vsel %vm157, %v408, 0
  %v478 = vsel %vm157, %v409, 0
  %v481 = vsel %vm157, %v410, 0
  %483 = vmatpush.bf16.msra.mxu0 0
  %484 = vmatpush.bf16.msra.mxu0 0
  %485 = vmatpush.bf16.msra.mxu0 %v457
  %486 = vmatpush.bf16.msra.mxu0 %v455
  %487 = vmatpush.bf16.msra.mxu0 %v453
  %488 = vmatpush.bf16.msra.mxu0 %v451
  %489 = vmatpush.bf16.msra.mxu0 %v449
  %490 = vmatpush.bf16.msra.mxu0 %v447
  %491 = vmatmul.bf16.gmra.mxu0 %v472
  %v492 = vpop.f32.mrf.mxu0
  %v493 = vadd.f32 0.0, %v492
  %v494 = vpop.f32.mrf.mxu0
  %v495 = vadd.f32 0.0, %v494
  %496 = vmatmul.bf16.gmra.mxu0 %v475
  %v497 = vpop.f32.mrf.mxu0
  %v498 = vadd.f32 0.0, %v497
  %v499 = vpop.f32.mrf.mxu0
  %v500 = vadd.f32 0.0, %v499
  %501 = vmatmul.bf16.gmra.mxu0 %v478
  %v502 = vpop.f32.mrf.mxu0
  %v503 = vadd.f32 0.0, %v502
  %v504 = vpop.f32.mrf.mxu0
  %v505 = vadd.f32 0.0, %v504
  %506 = vmatmul.bf16.gmra.mxu0 %v481
  %v507 = vpop.f32.mrf.mxu0
  %v508 = vadd.f32 0.0, %v507
  %v509 = vpop.f32.mrf.mxu0
  %510 = vdwg.mxu0
  %511 = vmatpush.bf16.msra.mxu0 0
  %512 = vmatpush.bf16.msra.mxu0 0
  %513 = vmatpush.bf16.msra.mxu0 %v458
  %514 = vmatpush.bf16.msra.mxu0 %v456
  %515 = vmatpush.bf16.msra.mxu0 %v454
  %516 = vmatpush.bf16.msra.mxu0 %v452
  %517 = vmatpush.bf16.msra.mxu0 %v450
  %518 = vmatpush.bf16.msra.mxu0 %v448
  %519 = vmatmul.bf16.gmra.mxu0 %v472
  %v520 = vpop.f32.mrf.mxu0
  %v521 = vadd.f32 0.0, %v520
  %v522 = vpop.f32.mrf.mxu0
  %v523 = vadd.f32 0.0, %v522
  %524 = vmatmul.bf16.gmra.mxu0 %v475
  %v525 = vpop.f32.mrf.mxu0
  %v526 = vadd.f32 0.0, %v525
  %v527 = vpop.f32.mrf.mxu0
  %v528 = vadd.f32 0.0, %v527
  %529 = vmatmul.bf16.gmra.mxu0 %v478
  %v530 = vpop.f32.mrf.mxu0
  %v531 = vadd.f32 0.0, %v530
  %v532 = vpop.f32.mrf.mxu0
  %v533 = vadd.f32 0.0, %v532
  %534 = vmatmul.bf16.gmra.mxu0 %v481
  %v535 = vpop.f32.mrf.mxu0
  %v536 = vadd.f32 0.0, %v535
  %v537 = vpop.f32.mrf.mxu0
  %538 = vdwg.mxu0
  %v539 = vadd.f32 %v326, %v493
  %v540 = vadd.f32 %v354, %v521
  %v541 = vadd.f32 %v328, %v495
  %v542 = vadd.f32 %v356, %v523
  %v543 = vadd.f32 %v331, %v498
  %v544 = vadd.f32 %v359, %v526
  %v545 = vadd.f32 %v333, %v500
  %v546 = vadd.f32 %v361, %v528
  %v547 = vadd.f32 %v336, %v503
  %v548 = vadd.f32 %v364, %v531
  %v549 = vadd.f32 %v338, %v505
  %v550 = vadd.f32 %v366, %v533
  %v551 = vadd.f32 %v341, %v508
  %v552 = vadd.f32 %v369, %v536
  %s553 = scalar_lea.vmem %s0, 96
  %v554 = vld [vmem:[%s553] sm:$0xf]
  %v555 = vld [vmem:[%s553 + $0x4] sm:$0xf]
  %v556 = vld [vmem:[%s553 + $0x8] sm:$0xf]
  %v557 = vld [vmem:[%s553 + $0xc] sm:$0xf]
  %v558 = vld [vmem:[%s553 + $0x10] sm:$0xf]
  %v559 = vld [vmem:[%s553 + $0x14] sm:$0xf]
  %v560 = vld [vmem:[%s553 + $0x18] sm:$0xf]
  %s561 = scalar_lea.vmem %s1, 288
  %v562 = vld [vmem:[%s561] sm:$0xff]
  %v563 = vld [vmem:[%s561 + $0x8] sm:$0xff]
  %v564 = vld [vmem:[%s561 + $0x10] sm:$0xff]
  %v565 = vld [vmem:[%s561 + $0x18] sm:$0xff]
  %v566 = vld [vmem:[%s561 + $0x20] sm:$0xff]
  %v567 = vld [vmem:[%s561 + $0x28] sm:$0xff]
  %v568 = vld [vmem:[%s561 + $0x30] sm:$0xff]
  %v569 = vld [vmem:[%s561 + $0x38] sm:$0xff]
  %v570 = vld [vmem:[%s561 + $0x40] sm:$0xff]
  %v571 = vld [vmem:[%s561 + $0x48] sm:$0xff]
  %v572 = vld [vmem:[%s561 + $0x50] sm:$0xff]
  %v573 = vld [vmem:[%s561 + $0x58] sm:$0xff]
  %v581 = vunpack.c.l.b16 %v554
  %v582 = vunpack.c.l.b16 %v555
  %v583 = vunpack.c.l.b16 %v556
  %v584 = vunpack.c.l.b16 %v557
  %v585 = vunpack.c.l.b16 %v558
  %v586 = vunpack.c.l.b16 %v559
  %v587 = vunpack.c.l.b16 %v560
  %v588 = vpack.c.b16 %v582, %v581
  %v589 = vpack.c.b16 %v584, %v583
  %v590 = vpack.c.b16 %v586, %v585
  %v591 = vpack.c.b16 %v587, %v587
  %v604 = vunpack.c.l.b16 %v562
  %v605 = vunpack.c.h.b16 %v562
  %v606 = vunpack.c.l.b16 %v563
  %v607 = vunpack.c.h.b16 %v563
  %v608 = vunpack.c.l.b16 %v564
  %v609 = vunpack.c.h.b16 %v564
  %v610 = vunpack.c.l.b16 %v565
  %v611 = vunpack.c.h.b16 %v565
  %v612 = vunpack.c.l.b16 %v566
  %v613 = vunpack.c.h.b16 %v566
  %v614 = vunpack.c.l.b16 %v567
  %v615 = vunpack.c.h.b16 %v567
  %v616 = vunpack.c.l.b16 %v568
  %v617 = vunpack.c.h.b16 %v568
  %v618 = vunpack.c.l.b16 %v569
  %v619 = vunpack.c.h.b16 %v569
  %v620 = vunpack.c.l.b16 %v570
  %v621 = vunpack.c.h.b16 %v570
  %v622 = vunpack.c.l.b16 %v571
  %v623 = vunpack.c.h.b16 %v571
  %v624 = vunpack.c.l.b16 %v572
  %v625 = vunpack.c.h.b16 %v572
  %v626 = vunpack.c.l.b16 %v573
  %v627 = vunpack.c.h.b16 %v573
  %v628 = vpack.c.b16 %v606, %v604
  %v629 = vpack.c.b16 %v607, %v605
  %v630 = vpack.c.b16 %v610, %v608
  %v631 = vpack.c.b16 %v611, %v609
  %v632 = vpack.c.b16 %v614, %v612
  %v633 = vpack.c.b16 %v615, %v613
  %v634 = vpack.c.b16 %v618, %v616
  %v635 = vpack.c.b16 %v619, %v617
  %v636 = vpack.c.b16 %v622, %v620
  %v637 = vpack.c.b16 %v623, %v621
  %v638 = vpack.c.b16 %v626, %v624
  %v639 = vpack.c.b16 %v627, %v625
  %v653 = vsel %vm157, %v588, 0
  %v656 = vsel %vm157, %v589, 0
  %v659 = vsel %vm157, %v590, 0
  %v662 = vsel %vm157, %v591, 0
  %664 = vmatpush.bf16.msra.mxu0 0
  %665 = vmatpush.bf16.msra.mxu0 0
  %666 = vmatpush.bf16.msra.mxu0 %v638
  %667 = vmatpush.bf16.msra.mxu0 %v636
  %668 = vmatpush.bf16.msra.mxu0 %v634
  %669 = vmatpush.bf16.msra.mxu0 %v632
  %670 = vmatpush.bf16.msra.mxu0 %v630
  %671 = vmatpush.bf16.msra.mxu0 %v628
  %672 = vmatmul.bf16.gmra.mxu0 %v653
  %v673 = vpop.f32.mrf.mxu0
  %v674 = vadd.f32 0.0, %v673
  %v675 = vpop.f32.mrf.mxu0
  %v676 = vadd.f32 0.0, %v675
  %677 = vmatmul.bf16.gmra.mxu0 %v656
  %v678 = vpop.f32.mrf.mxu0
  %v679 = vadd.f32 0.0, %v678
  %v680 = vpop.f32.mrf.mxu0
  %v681 = vadd.f32 0.0, %v680
  %682 = vmatmul.bf16.gmra.mxu0 %v659
  %v683 = vpop.f32.mrf.mxu0
  %v684 = vadd.f32 0.0, %v683
  %v685 = vpop.f32.mrf.mxu0
  %v686 = vadd.f32 0.0, %v685
  %687 = vmatmul.bf16.gmra.mxu0 %v662
  %v688 = vpop.f32.mrf.mxu0
  %v689 = vadd.f32 0.0, %v688
  %v690 = vpop.f32.mrf.mxu0
  %691 = vdwg.mxu0
  %692 = vmatpush.bf16.msra.mxu0 0
  %693 = vmatpush.bf16.msra.mxu0 0
  %694 = vmatpush.bf16.msra.mxu0 %v639
  %695 = vmatpush.bf16.msra.mxu0 %v637
  %696 = vmatpush.bf16.msra.mxu0 %v635
  %697 = vmatpush.bf16.msra.mxu0 %v633
  %698 = vmatpush.bf16.msra.mxu0 %v631
  %699 = vmatpush.bf16.msra.mxu0 %v629
  %700 = vmatmul.bf16.gmra.mxu0 %v653
  %v701 = vpop.f32.mrf.mxu0
  %v702 = vadd.f32 0.0, %v701
  %v703 = vpop.f32.mrf.mxu0
  %v704 = vadd.f32 0.0, %v703
  %705 = vmatmul.bf16.gmra.mxu0 %v656
  %v706 = vpop.f32.mrf.mxu0
  %v707 = vadd.f32 0.0, %v706
  %v708 = vpop.f32.mrf.mxu0
  %v709 = vadd.f32 0.0, %v708
  %710 = vmatmul.bf16.gmra.mxu0 %v659
  %v711 = vpop.f32.mrf.mxu0
  %v712 = vadd.f32 0.0, %v711
  %v713 = vpop.f32.mrf.mxu0
  %v714 = vadd.f32 0.0, %v713
  %715 = vmatmul.bf16.gmra.mxu0 %v662
  %v716 = vpop.f32.mrf.mxu0
  %v717 = vadd.f32 0.0, %v716
  %v718 = vpop.f32.mrf.mxu0
  %719 = vdwg.mxu0
  %v720 = vadd.f32 %v539, %v674
  %v721 = vadd.f32 %v540, %v702
  %v722 = vadd.f32 %v541, %v676
  %v723 = vadd.f32 %v542, %v704
  %v724 = vadd.f32 %v543, %v679
  %v725 = vadd.f32 %v544, %v707
  %v726 = vadd.f32 %v545, %v681
  %v727 = vadd.f32 %v546, %v709
  %v728 = vadd.f32 %v547, %v684
  %v729 = vadd.f32 %v548, %v712
  %v730 = vadd.f32 %v549, %v686
  %v731 = vadd.f32 %v550, %v714
  %v732 = vadd.f32 %v551, %v689
  %v733 = vadd.f32 %v552, %v717
  %v734 = vld [vmem:[%s0 + $0x4] sm:$0xf]
  %v735 = vld [vmem:[%s0 + $0x8] sm:$0xf]
  %v736 = vld [vmem:[%s0 + $0xc] sm:$0xf]
  %v737 = vld [vmem:[%s0 + $0x10] sm:$0xf]
  %v738 = vld [vmem:[%s0 + $0x14] sm:$0xf]
  %v739 = vld [vmem:[%s0 + $0x18] sm:$0xf]
  %v740 = vld [vmem:[%s0 + $0x1c] sm:$0xf]
  %s741 = scalar_lea.vmem %s1, 384
  %v742 = vld [vmem:[%s741] sm:$0xff]
  %v743 = vld [vmem:[%s741 + $0x8] sm:$0xff]
  %v744 = vld [vmem:[%s741 + $0x10] sm:$0xff]
  %v745 = vld [vmem:[%s741 + $0x18] sm:$0xff]
  %v746 = vld [vmem:[%s741 + $0x20] sm:$0xff]
  %v747 = vld [vmem:[%s741 + $0x28] sm:$0xff]
  %v748 = vld [vmem:[%s741 + $0x30] sm:$0xff]
  %v749 = vld [vmem:[%s741 + $0x38] sm:$0xff]
  %v750 = vld [vmem:[%s741 + $0x40] sm:$0xff]
  %v751 = vld [vmem:[%s741 + $0x48] sm:$0xff]
  %v752 = vld [vmem:[%s741 + $0x50] sm:$0xff]
  %v753 = vld [vmem:[%s741 + $0x58] sm:$0xff]
  %v761 = vunpack.c.l.b16 %v734
  %v762 = vunpack.c.l.b16 %v735
  %v763 = vunpack.c.l.b16 %v736
  %v764 = vunpack.c.l.b16 %v737
  %v765 = vunpack.c.l.b16 %v738
  %v766 = vunpack.c.l.b16 %v739
  %v767 = vunpack.c.l.b16 %v740
  %v768 = vpack.c.b16 %v762, %v761
  %v769 = vpack.c.b16 %v764, %v763
  %v770 = vpack.c.b16 %v766, %v765
  %v771 = vpack.c.b16 %v767, %v767
  %v784 = vunpack.c.l.b16 %v742
  %v785 = vunpack.c.h.b16 %v742
  %v786 = vunpack.c.l.b16 %v743
  %v787 = vunpack.c.h.b16 %v743
  %v788 = vunpack.c.l.b16 %v744
  %v789 = vunpack.c.h.b16 %v744
  %v790 = vunpack.c.l.b16 %v745
  %v791 = vunpack.c.h.b16 %v745
  %v792 = vunpack.c.l.b16 %v746
  %v793 = vunpack.c.h.b16 %v746
  %v794 = vunpack.c.l.b16 %v747
  %v795 = vunpack.c.h.b16 %v747
  %v796 = vunpack.c.l.b16 %v748
  %v797 = vunpack.c.h.b16 %v748
  %v798 = vunpack.c.l.b16 %v749
  %v799 = vunpack.c.h.b16 %v749
  %v800 = vunpack.c.l.b16 %v750
  %v801 = vunpack.c.h.b16 %v750
  %v802 = vunpack.c.l.b16 %v751
  %v803 = vunpack.c.h.b16 %v751
  %v804 = vunpack.c.l.b16 %v752
  %v805 = vunpack.c.h.b16 %v752
  %v806 = vunpack.c.l.b16 %v753
  %v807 = vunpack.c.h.b16 %v753
  %v808 = vpack.c.b16 %v786, %v784
  %v809 = vpack.c.b16 %v787, %v785
  %v810 = vpack.c.b16 %v790, %v788
  %v811 = vpack.c.b16 %v791, %v789
  %v812 = vpack.c.b16 %v794, %v792
  %v813 = vpack.c.b16 %v795, %v793
  %v814 = vpack.c.b16 %v798, %v796
  %v815 = vpack.c.b16 %v799, %v797
  %v816 = vpack.c.b16 %v802, %v800
  %v817 = vpack.c.b16 %v803, %v801
  %v818 = vpack.c.b16 %v806, %v804
  %v819 = vpack.c.b16 %v807, %v805
  %v833 = vsel %vm157, %v768, 0
  %v836 = vsel %vm157, %v769, 0
  %v839 = vsel %vm157, %v770, 0
  %v842 = vsel %vm157, %v771, 0
  %844 = vmatpush.bf16.msra.mxu0 0
  %845 = vmatpush.bf16.msra.mxu0 0
  %846 = vmatpush.bf16.msra.mxu0 %v818
  %847 = vmatpush.bf16.msra.mxu0 %v816
  %848 = vmatpush.bf16.msra.mxu0 %v814
  %849 = vmatpush.bf16.msra.mxu0 %v812
  %850 = vmatpush.bf16.msra.mxu0 %v810
  %851 = vmatpush.bf16.msra.mxu0 %v808
  %852 = vmatmul.bf16.gmra.mxu0 %v833
  %v853 = vpop.f32.mrf.mxu0
  %v854 = vadd.f32 0.0, %v853
  %v855 = vpop.f32.mrf.mxu0
  %v856 = vadd.f32 0.0, %v855
  %857 = vmatmul.bf16.gmra.mxu0 %v836
  %v858 = vpop.f32.mrf.mxu0
  %v859 = vadd.f32 0.0, %v858
  %v860 = vpop.f32.mrf.mxu0
  %v861 = vadd.f32 0.0, %v860
  %862 = vmatmul.bf16.gmra.mxu0 %v839
  %v863 = vpop.f32.mrf.mxu0
  %v864 = vadd.f32 0.0, %v863
  %v865 = vpop.f32.mrf.mxu0
  %v866 = vadd.f32 0.0, %v865
  %867 = vmatmul.bf16.gmra.mxu0 %v842
  %v868 = vpop.f32.mrf.mxu0
  %v869 = vadd.f32 0.0, %v868
  %v870 = vpop.f32.mrf.mxu0
  %871 = vdwg.mxu0
  %872 = vmatpush.bf16.msra.mxu0 0
  %873 = vmatpush.bf16.msra.mxu0 0
  %874 = vmatpush.bf16.msra.mxu0 %v819
  %875 = vmatpush.bf16.msra.mxu0 %v817
  %876 = vmatpush.bf16.msra.mxu0 %v815
  %877 = vmatpush.bf16.msra.mxu0 %v813
  %878 = vmatpush.bf16.msra.mxu0 %v811
  %879 = vmatpush.bf16.msra.mxu0 %v809
  %880 = vmatmul.bf16.gmra.mxu0 %v833
  %v881 = vpop.f32.mrf.mxu0
  %v882 = vadd.f32 0.0, %v881
  %v883 = vpop.f32.mrf.mxu0
  %v884 = vadd.f32 0.0, %v883
  %885 = vmatmul.bf16.gmra.mxu0 %v836
  %v886 = vpop.f32.mrf.mxu0
  %v887 = vadd.f32 0.0, %v886
  %v888 = vpop.f32.mrf.mxu0
  %v889 = vadd.f32 0.0, %v888
  %890 = vmatmul.bf16.gmra.mxu0 %v839
  %v891 = vpop.f32.mrf.mxu0
  %v892 = vadd.f32 0.0, %v891
  %v893 = vpop.f32.mrf.mxu0
  %v894 = vadd.f32 0.0, %v893
  %895 = vmatmul.bf16.gmra.mxu0 %v842
  %v896 = vpop.f32.mrf.mxu0
  %v897 = vadd.f32 0.0, %v896
  %v898 = vpop.f32.mrf.mxu0
  %899 = vdwg.mxu0
  %v900 = vadd.f32 %v720, %v854
  %v901 = vadd.f32 %v721, %v882
  %v902 = vadd.f32 %v722, %v856
  %v903 = vadd.f32 %v723, %v884
  %v904 = vadd.f32 %v724, %v859
  %v905 = vadd.f32 %v725, %v887
  %v906 = vadd.f32 %v726, %v861
  %v907 = vadd.f32 %v727, %v889
  %v908 = vadd.f32 %v728, %v864
  %v909 = vadd.f32 %v729, %v892
  %v910 = vadd.f32 %v730, %v866
  %v911 = vadd.f32 %v731, %v894
  %v912 = vadd.f32 %v732, %v869
  %v913 = vadd.f32 %v733, %v897
  %v914 = vmax.f32 %v900, %v901
  %v915 = vmax.f32 %v902, %v903
  %v916 = vmax.f32 %v904, %v905
  %v917 = vmax.f32 %v906, %v907
  %v918 = vmax.f32 %v908, %v909
  %v919 = vmax.f32 %v910, %v911
  %v920 = vmax.f32 %v912, %v913
  %921 = vmatpush.bf16.msra.mxu0 0
  %922 = vmatpush.bf16.msra.mxu0 0
  %923 = vmatpush.bf16.msra.mxu0 %v143
  %924 = vmatpush.bf16.msra.mxu0 %v141
  %925 = vmatpush.bf16.msra.mxu0 %v139
  %926 = vmatpush.bf16.msra.mxu0 %v137
  %927 = vmatpush.bf16.msra.mxu0 %v135
  %928 = vmatpush.bf16.msra.mxu0 %v133
  %929 = vmatmul.bf16.gmra.mxu0 %v472
  %v930 = vpop.f32.mrf.mxu0
  %v931 = vadd.f32 0.0, %v930
  %v932 = vpop.f32.mrf.mxu0
  %v933 = vadd.f32 0.0, %v932
  %934 = vmatmul.bf16.gmra.mxu0 %v475
  %v935 = vpop.f32.mrf.mxu0
  %v936 = vadd.f32 0.0, %v935
  %v937 = vpop.f32.mrf.mxu0
  %v938 = vadd.f32 0.0, %v937
  %939 = vmatmul.bf16.gmra.mxu0 %v478
  %v940 = vpop.f32.mrf.mxu0
  %v941 = vadd.f32 0.0, %v940
  %v942 = vpop.f32.mrf.mxu0
  %v943 = vadd.f32 0.0, %v942
  %944 = vmatmul.bf16.gmra.mxu0 %v481
  %v945 = vpop.f32.mrf.mxu0
  %v946 = vadd.f32 0.0, %v945
  %v947 = vpop.f32.mrf.mxu0
  %948 = vdwg.mxu0
  %949 = vmatpush.bf16.msra.mxu0 0
  %950 = vmatpush.bf16.msra.mxu0 0
  %951 = vmatpush.bf16.msra.mxu0 %v144
  %952 = vmatpush.bf16.msra.mxu0 %v142
  %953 = vmatpush.bf16.msra.mxu0 %v140
  %954 = vmatpush.bf16.msra.mxu0 %v138
  %955 = vmatpush.bf16.msra.mxu0 %v136
  %956 = vmatpush.bf16.msra.mxu0 %v134
  %957 = vmatmul.bf16.gmra.mxu0 %v472
  %v958 = vpop.f32.mrf.mxu0
  %v959 = vadd.f32 0.0, %v958
  %v960 = vpop.f32.mrf.mxu0
  %v961 = vadd.f32 0.0, %v960
  %962 = vmatmul.bf16.gmra.mxu0 %v475
  %v963 = vpop.f32.mrf.mxu0
  %v964 = vadd.f32 0.0, %v963
  %v965 = vpop.f32.mrf.mxu0
  %v966 = vadd.f32 0.0, %v965
  %967 = vmatmul.bf16.gmra.mxu0 %v478
  %v968 = vpop.f32.mrf.mxu0
  %v969 = vadd.f32 0.0, %v968
  %v970 = vpop.f32.mrf.mxu0
  %v971 = vadd.f32 0.0, %v970
  %972 = vmatmul.bf16.gmra.mxu0 %v481
  %v973 = vpop.f32.mrf.mxu0
  %v974 = vadd.f32 0.0, %v973
  %v975 = vpop.f32.mrf.mxu0
  %976 = vdwg.mxu0
  %977 = vmatpush.bf16.msra.mxu0 0
  %978 = vmatpush.bf16.msra.mxu0 0
  %979 = vmatpush.bf16.msra.mxu0 %v290
  %980 = vmatpush.bf16.msra.mxu0 %v288
  %981 = vmatpush.bf16.msra.mxu0 %v286
  %982 = vmatpush.bf16.msra.mxu0 %v284
  %983 = vmatpush.bf16.msra.mxu0 %v282
  %984 = vmatpush.bf16.msra.mxu0 %v280
  %985 = vmatmul.bf16.gmra.mxu0 %v159
  %v986 = vpop.f32.mrf.mxu0
  %v987 = vadd.f32 %v931, %v986
  %v988 = vpop.f32.mrf.mxu0
  %v989 = vadd.f32 %v933, %v988
  %990 = vmatmul.bf16.gmra.mxu0 %v162
  %v991 = vpop.f32.mrf.mxu0
  %v992 = vadd.f32 %v936, %v991
  %v993 = vpop.f32.mrf.mxu0
  %v994 = vadd.f32 %v938, %v993
  %995 = vmatmul.bf16.gmra.mxu0 %v165
  %v996 = vpop.f32.mrf.mxu0
  %v997 = vadd.f32 %v941, %v996
  %v998 = vpop.f32.mrf.mxu0
  %v999 = vadd.f32 %v943, %v998
  %1000 = vmatmul.bf16.gmra.mxu0 %v168
  %v1001 = vpop.f32.mrf.mxu0
  %v1002 = vadd.f32 %v946, %v1001
  %v1003 = vpop.f32.mrf.mxu0
  %1004 = vdwg.mxu0
  %1005 = vmatpush.bf16.msra.mxu0 0
  %1006 = vmatpush.bf16.msra.mxu0 0
  %1007 = vmatpush.bf16.msra.mxu0 %v291
  %1008 = vmatpush.bf16.msra.mxu0 %v289
  %1009 = vmatpush.bf16.msra.mxu0 %v287
  %1010 = vmatpush.bf16.msra.mxu0 %v285
  %1011 = vmatpush.bf16.msra.mxu0 %v283
  %1012 = vmatpush.bf16.msra.mxu0 %v281
  %1013 = vmatmul.bf16.gmra.mxu0 %v159
  %v1014 = vpop.f32.mrf.mxu0
  %v1015 = vadd.f32 %v959, %v1014
  %v1016 = vpop.f32.mrf.mxu0
  %v1017 = vadd.f32 %v961, %v1016
  %1018 = vmatmul.bf16.gmra.mxu0 %v162
  %v1019 = vpop.f32.mrf.mxu0
  %v1020 = vadd.f32 %v964, %v1019
  %v1021 = vpop.f32.mrf.mxu0
  %v1022 = vadd.f32 %v966, %v1021
  %1023 = vmatmul.bf16.gmra.mxu0 %v165
  %v1024 = vpop.f32.mrf.mxu0
  %v1025 = vadd.f32 %v969, %v1024
  %v1026 = vpop.f32.mrf.mxu0
  %v1027 = vadd.f32 %v971, %v1026
  %1028 = vmatmul.bf16.gmra.mxu0 %v168
  %v1029 = vpop.f32.mrf.mxu0
  %v1030 = vadd.f32 %v974, %v1029
  %v1031 = vpop.f32.mrf.mxu0
  %1032 = vdwg.mxu0
  %1033 = vmatpush.bf16.msra.mxu0 0
  %1034 = vmatpush.bf16.msra.mxu0 0
  %1035 = vmatpush.bf16.msra.mxu0 %v457
  %1036 = vmatpush.bf16.msra.mxu0 %v455
  %1037 = vmatpush.bf16.msra.mxu0 %v453
  %1038 = vmatpush.bf16.msra.mxu0 %v451
  %1039 = vmatpush.bf16.msra.mxu0 %v449
  %1040 = vmatpush.bf16.msra.mxu0 %v447
  %1041 = vmatmul.bf16.gmra.mxu0 %v653
  %v1042 = vpop.f32.mrf.mxu0
  %v1043 = vadd.f32 0.0, %v1042
  %v1044 = vpop.f32.mrf.mxu0
  %v1045 = vadd.f32 0.0, %v1044
  %1046 = vmatmul.bf16.gmra.mxu0 %v656
  %v1047 = vpop.f32.mrf.mxu0
  %v1048 = vadd.f32 0.0, %v1047
  %v1049 = vpop.f32.mrf.mxu0
  %v1050 = vadd.f32 0.0, %v1049
  %1051 = vmatmul.bf16.gmra.mxu0 %v659
  %v1052 = vpop.f32.mrf.mxu0
  %v1053 = vadd.f32 0.0, %v1052
  %v1054 = vpop.f32.mrf.mxu0
  %v1055 = vadd.f32 0.0, %v1054
  %1056 = vmatmul.bf16.gmra.mxu0 %v662
  %v1057 = vpop.f32.mrf.mxu0
  %v1058 = vadd.f32 0.0, %v1057
  %v1059 = vpop.f32.mrf.mxu0
  %1060 = vdwg.mxu0
  %1061 = vmatpush.bf16.msra.mxu0 0
  %1062 = vmatpush.bf16.msra.mxu0 0
  %1063 = vmatpush.bf16.msra.mxu0 %v458
  %1064 = vmatpush.bf16.msra.mxu0 %v456
  %1065 = vmatpush.bf16.msra.mxu0 %v454
  %1066 = vmatpush.bf16.msra.mxu0 %v452
  %1067 = vmatpush.bf16.msra.mxu0 %v450
  %1068 = vmatpush.bf16.msra.mxu0 %v448
  %1069 = vmatmul.bf16.gmra.mxu0 %v653
  %v1070 = vpop.f32.mrf.mxu0
  %v1071 = vadd.f32 0.0, %v1070
  %v1072 = vpop.f32.mrf.mxu0
  %v1073 = vadd.f32 0.0, %v1072
  %1074 = vmatmul.bf16.gmra.mxu0 %v656
  %v1075 = vpop.f32.mrf.mxu0
  %v1076 = vadd.f32 0.0, %v1075
  %v1077 = vpop.f32.mrf.mxu0
  %v1078 = vadd.f32 0.0, %v1077
  %1079 = vmatmul.bf16.gmra.mxu0 %v659
  %v1080 = vpop.f32.mrf.mxu0
  %v1081 = vadd.f32 0.0, %v1080
  %v1082 = vpop.f32.mrf.mxu0
  %v1083 = vadd.f32 0.0, %v1082
  %1084 = vmatmul.bf16.gmra.mxu0 %v662
  %v1085 = vpop.f32.mrf.mxu0
  %v1086 = vadd.f32 0.0, %v1085
  %v1087 = vpop.f32.mrf.mxu0
  %1088 = vdwg.mxu0
  %v1089 = vadd.f32 %v987, %v1043
  %v1090 = vadd.f32 %v1015, %v1071
  %v1091 = vadd.f32 %v989, %v1045
  %v1092 = vadd.f32 %v1017, %v1073
  %v1093 = vadd.f32 %v992, %v1048
  %v1094 = vadd.f32 %v1020, %v1076
  %v1095 = vadd.f32 %v994, %v1050
  %v1096 = vadd.f32 %v1022, %v1078
  %v1097 = vadd.f32 %v997, %v1053
  %v1098 = vadd.f32 %v1025, %v1081
  %v1099 = vadd.f32 %v999, %v1055
  %v1100 = vadd.f32 %v1027, %v1083
  %v1101 = vadd.f32 %v1002, %v1058
  %v1102 = vadd.f32 %v1030, %v1086
  %1103 = vmatpush.bf16.msra.mxu0 0
  %1104 = vmatpush.bf16.msra.mxu0 0
  %1105 = vmatpush.bf16.msra.mxu0 %v638
  %1106 = vmatpush.bf16.msra.mxu0 %v636
  %1107 = vmatpush.bf16.msra.mxu0 %v634
  %1108 = vmatpush.bf16.msra.mxu0 %v632
  %1109 = vmatpush.bf16.msra.mxu0 %v630
  %1110 = vmatpush.bf16.msra.mxu0 %v628
  %1111 = vmatmul.bf16.gmra.mxu0 %v833
  %v1112 = vpop.f32.mrf.mxu0
  %v1113 = vadd.f32 0.0, %v1112
  %v1114 = vpop.f32.mrf.mxu0
  %v1115 = vadd.f32 0.0, %v1114
  %1116 = vmatmul.bf16.gmra.mxu0 %v836
  %v1117 = vpop.f32.mrf.mxu0
  %v1118 = vadd.f32 0.0, %v1117
  %v1119 = vpop.f32.mrf.mxu0
  %v1120 = vadd.f32 0.0, %v1119
  %1121 = vmatmul.bf16.gmra.mxu0 %v839
  %v1122 = vpop.f32.mrf.mxu0
  %v1123 = vadd.f32 0.0, %v1122
  %v1124 = vpop.f32.mrf.mxu0
  %v1125 = vadd.f32 0.0, %v1124
  %1126 = vmatmul.bf16.gmra.mxu0 %v842
  %v1127 = vpop.f32.mrf.mxu0
  %v1128 = vadd.f32 0.0, %v1127
  %v1129 = vpop.f32.mrf.mxu0
  %1130 = vdwg.mxu0
  %1131 = vmatpush.bf16.msra.mxu0 0
  %1132 = vmatpush.bf16.msra.mxu0 0
  %1133 = vmatpush.bf16.msra.mxu0 %v639
  %1134 = vmatpush.bf16.msra.mxu0 %v637
  %1135 = vmatpush.bf16.msra.mxu0 %v635
  %1136 = vmatpush.bf16.msra.mxu0 %v633
  %1137 = vmatpush.bf16.msra.mxu0 %v631
  %1138 = vmatpush.bf16.msra.mxu0 %v629
  %1139 = vmatmul.bf16.gmra.mxu0 %v833
  %v1140 = vpop.f32.mrf.mxu0
  %v1141 = vadd.f32 0.0, %v1140
  %v1142 = vpop.f32.mrf.mxu0
  %v1143 = vadd.f32 0.0, %v1142
  %1144 = vmatmul.bf16.gmra.mxu0 %v836
  %v1145 = vpop.f32.mrf.mxu0
  %v1146 = vadd.f32 0.0, %v1145
  %v1147 = vpop.f32.mrf.mxu0
  %v1148 = vadd.f32 0.0, %v1147
  %1149 = vmatmul.bf16.gmra.mxu0 %v839
  %v1150 = vpop.f32.mrf.mxu0
  %v1151 = vadd.f32 0.0, %v1150
  %v1152 = vpop.f32.mrf.mxu0
  %v1153 = vadd.f32 0.0, %v1152
  %1154 = vmatmul.bf16.gmra.mxu0 %v842
  %v1155 = vpop.f32.mrf.mxu0
  %v1156 = vadd.f32 0.0, %v1155
  %v1157 = vpop.f32.mrf.mxu0
  %1158 = vdwg.mxu0
  %v1159 = vadd.f32 %v1089, %v1113
  %v1160 = vadd.f32 %v1090, %v1141
  %v1161 = vadd.f32 %v1091, %v1115
  %v1162 = vadd.f32 %v1092, %v1143
  %v1163 = vadd.f32 %v1093, %v1118
  %v1164 = vadd.f32 %v1094, %v1146
  %v1165 = vadd.f32 %v1095, %v1120
  %v1166 = vadd.f32 %v1096, %v1148
  %v1167 = vadd.f32 %v1097, %v1123
  %v1168 = vadd.f32 %v1098, %v1151
  %v1169 = vadd.f32 %v1099, %v1125
  %v1170 = vadd.f32 %v1100, %v1153
  %v1171 = vadd.f32 %v1101, %v1128
  %v1172 = vadd.f32 %v1102, %v1156
  %v1173 = vld [vmem:[%s58 + $0x4] sm:$0xf]
  %v1174 = vld [vmem:[%s58 + $0x8] sm:$0xf]
  %v1175 = vld [vmem:[%s58 + $0xc] sm:$0xf]
  %v1176 = vld [vmem:[%s58 + $0x10] sm:$0xf]
  %v1177 = vld [vmem:[%s58 + $0x14] sm:$0xf]
  %v1178 = vld [vmem:[%s58 + $0x18] sm:$0xf]
  %v1179 = vld [vmem:[%s58 + $0x1c] sm:$0xf]
  %v1187 = vunpack.c.l.b16 %v1173
  %v1188 = vunpack.c.l.b16 %v1174
  %v1189 = vunpack.c.l.b16 %v1175
  %v1190 = vunpack.c.l.b16 %v1176
  %v1191 = vunpack.c.l.b16 %v1177
  %v1192 = vunpack.c.l.b16 %v1178
  %v1193 = vunpack.c.l.b16 %v1179
  %v1194 = vpack.c.b16 %v1188, %v1187
  %v1195 = vpack.c.b16 %v1190, %v1189
  %v1196 = vpack.c.b16 %v1192, %v1191
  %v1197 = vpack.c.b16 %v1193, %v1193
  %v1199 = vsel %vm157, %v1194, 0
  %v1202 = vsel %vm157, %v1195, 0
  %v1205 = vsel %vm157, %v1196, 0
  %v1208 = vsel %vm157, %v1197, 0
  %1210 = vmatpush.bf16.msra.mxu0 0
  %1211 = vmatpush.bf16.msra.mxu0 0
  %1212 = vmatpush.bf16.msra.mxu0 %v818
  %1213 = vmatpush.bf16.msra.mxu0 %v816
  %1214 = vmatpush.bf16.msra.mxu0 %v814
  %1215 = vmatpush.bf16.msra.mxu0 %v812
  %1216 = vmatpush.bf16.msra.mxu0 %v810
  %1217 = vmatpush.bf16.msra.mxu0 %v808
  %1218 = vmatmul.bf16.gmra.mxu0 %v1199
  %v1219 = vpop.f32.mrf.mxu0
  %v1220 = vadd.f32 0.0, %v1219
  %v1221 = vpop.f32.mrf.mxu0
  %v1222 = vadd.f32 0.0, %v1221
  %1223 = vmatmul.bf16.gmra.mxu0 %v1202
  %v1224 = vpop.f32.mrf.mxu0
  %v1225 = vadd.f32 0.0, %v1224
  %v1226 = vpop.f32.mrf.mxu0
  %v1227 = vadd.f32 0.0, %v1226
  %1228 = vmatmul.bf16.gmra.mxu0 %v1205
  %v1229 = vpop.f32.mrf.mxu0
  %v1230 = vadd.f32 0.0, %v1229
  %v1231 = vpop.f32.mrf.mxu0
  %v1232 = vadd.f32 0.0, %v1231
  %1233 = vmatmul.bf16.gmra.mxu0 %v1208
  %v1234 = vpop.f32.mrf.mxu0
  %v1235 = vadd.f32 0.0, %v1234
  %v1236 = vpop.f32.mrf.mxu0
  %1237 = vdwg.mxu0
  %1238 = vmatpush.bf16.msra.mxu0 0
  %1239 = vmatpush.bf16.msra.mxu0 0
  %1240 = vmatpush.bf16.msra.mxu0 %v819
  %1241 = vmatpush.bf16.msra.mxu0 %v817
  %1242 = vmatpush.bf16.msra.mxu0 %v815
  %1243 = vmatpush.bf16.msra.mxu0 %v813
  %1244 = vmatpush.bf16.msra.mxu0 %v811
  %1245 = vmatpush.bf16.msra.mxu0 %v809
  %1246 = vmatmul.bf16.gmra.mxu0 %v1199
  %v1247 = vpop.f32.mrf.mxu0
  %v1248 = vadd.f32 0.0, %v1247
  %v1249 = vpop.f32.mrf.mxu0
  %v1250 = vadd.f32 0.0, %v1249
  %1251 = vmatmul.bf16.gmra.mxu0 %v1202
  %v1252 = vpop.f32.mrf.mxu0
  %v1253 = vadd.f32 0.0, %v1252
  %v1254 = vpop.f32.mrf.mxu0
  %v1255 = vadd.f32 0.0, %v1254
  %1256 = vmatmul.bf16.gmra.mxu0 %v1205
  %v1257 = vpop.f32.mrf.mxu0
  %v1258 = vadd.f32 0.0, %v1257
  %v1259 = vpop.f32.mrf.mxu0
  %v1260 = vadd.f32 0.0, %v1259
  %1261 = vmatmul.bf16.gmra.mxu0 %v1208
  %v1262 = vpop.f32.mrf.mxu0
  %v1263 = vadd.f32 0.0, %v1262
  %v1264 = vpop.f32.mrf.mxu0
  %1265 = vdwg.mxu0
  %v1266 = vadd.f32 %v1159, %v1220
  %v1267 = vadd.f32 %v1160, %v1248
  %v1268 = vadd.f32 %v1161, %v1222
  %v1269 = vadd.f32 %v1162, %v1250
  %v1270 = vadd.f32 %v1163, %v1225
  %v1271 = vadd.f32 %v1164, %v1253
  %v1272 = vadd.f32 %v1165, %v1227
  %v1273 = vadd.f32 %v1166, %v1255
  %v1274 = vadd.f32 %v1167, %v1230
  %v1275 = vadd.f32 %v1168, %v1258
  %v1276 = vadd.f32 %v1169, %v1232
  %v1277 = vadd.f32 %v1170, %v1260
  %v1278 = vadd.f32 %v1171, %v1235
  %v1279 = vadd.f32 %v1172, %v1263
  %v1280 = vmax.f32 %v1266, %v1267
  %v1281 = vmax.f32 %v1268, %v1269
  %v1282 = vmax.f32 %v1270, %v1271
  %v1283 = vmax.f32 %v1272, %v1273
  %v1284 = vmax.f32 %v1274, %v1275
  %v1285 = vmax.f32 %v1276, %v1277
  %v1286 = vmax.f32 %v1278, %v1279
  %v1287 = vmax.f32 %v914, %v1280
  %v1288 = vmax.f32 %v915, %v1281
  %v1289 = vmax.f32 %v916, %v1282
  %v1290 = vmax.f32 %v917, %v1283
  %v1291 = vmax.f32 %v918, %v1284
  %v1292 = vmax.f32 %v919, %v1285
  %v1293 = vmax.f32 %v920, %v1286
  %v1294 = vld [vmem:[%s2] sm:$0x1]
  %v1296 = vperm.slane %v1294, 0
  %v1298 = vadd.f32 %v1287, %v1296
  %v1299 = vadd.f32 %v1288, %v1296
  %v1300 = vadd.f32 %v1289, %v1296
  %v1301 = vadd.f32 %v1290, %v1296
  %v1302 = vadd.f32 %v1291, %v1296
  %v1303 = vadd.f32 %v1292, %v1296
  %v1304 = vadd.f32 %v1293, %v1296
  %v1305 = vmax.f32 %v1298, 0.0
  %v1306 = vmax.f32 %v1299, 0.0
  %v1307 = vmax.f32 %v1300, 0.0
  %v1308 = vmax.f32 %v1301, 0.0
  %v1309 = vmax.f32 %v1302, 0.0
  %v1310 = vmax.f32 %v1303, 0.0
  %v1311 = vmax.f32 %v1304, 0.0
  %v1312 = vpack.c.bf16 %v1305, %v1305
  %v1313 = vpack.c.bf16 %v1306, %v1306
  %v1314 = vpack.c.bf16 %v1307, %v1307
  %v1315 = vpack.c.bf16 %v1308, %v1308
  %v1316 = vpack.c.bf16 %v1309, %v1309
  %v1317 = vpack.c.bf16 %v1310, %v1310
  %v1318 = vpack.c.bf16 %v1311, %v1311
  %1319 = vmatpush.bf16.msra.mxu0 0
  %1320 = vmatpush.bf16.msra.mxu0 0
  %1321 = vmatpush.bf16.msra.mxu0 %v143
  %1322 = vmatpush.bf16.msra.mxu0 %v141
  %1323 = vmatpush.bf16.msra.mxu0 %v139
  %1324 = vmatpush.bf16.msra.mxu0 %v137
  %1325 = vmatpush.bf16.msra.mxu0 %v135
  %1326 = vmatpush.bf16.msra.mxu0 %v133
  %1327 = vmatmul.bf16.gmra.mxu0 %v653
  %v1328 = vpop.f32.mrf.mxu0
  %v1329 = vadd.f32 0.0, %v1328
  %v1330 = vpop.f32.mrf.mxu0
  %v1331 = vadd.f32 0.0, %v1330
  %1332 = vmatmul.bf16.gmra.mxu0 %v656
  %v1333 = vpop.f32.mrf.mxu0
  %v1334 = vadd.f32 0.0, %v1333
  %v1335 = vpop.f32.mrf.mxu0
  %v1336 = vadd.f32 0.0, %v1335
  %1337 = vmatmul.bf16.gmra.mxu0 %v659
  %v1338 = vpop.f32.mrf.mxu0
  %v1339 = vadd.f32 0.0, %v1338
  %v1340 = vpop.f32.mrf.mxu0
  %v1341 = vadd.f32 0.0, %v1340
  %1342 = vmatmul.bf16.gmra.mxu0 %v662
  %v1343 = vpop.f32.mrf.mxu0
  %v1344 = vadd.f32 0.0, %v1343
  %v1345 = vpop.f32.mrf.mxu0
  %1346 = vdwg.mxu0
  %1347 = vmatpush.bf16.msra.mxu0 0
  %1348 = vmatpush.bf16.msra.mxu0 0
  %1349 = vmatpush.bf16.msra.mxu0 %v144
  %1350 = vmatpush.bf16.msra.mxu0 %v142
  %1351 = vmatpush.bf16.msra.mxu0 %v140
  %1352 = vmatpush.bf16.msra.mxu0 %v138
  %1353 = vmatpush.bf16.msra.mxu0 %v136
  %1354 = vmatpush.bf16.msra.mxu0 %v134
  %1355 = vmatmul.bf16.gmra.mxu0 %v653
  %v1356 = vpop.f32.mrf.mxu0
  %v1357 = vadd.f32 0.0, %v1356
  %v1358 = vpop.f32.mrf.mxu0
  %v1359 = vadd.f32 0.0, %v1358
  %1360 = vmatmul.bf16.gmra.mxu0 %v656
  %v1361 = vpop.f32.mrf.mxu0
  %v1362 = vadd.f32 0.0, %v1361
  %v1363 = vpop.f32.mrf.mxu0
  %v1364 = vadd.f32 0.0, %v1363
  %1365 = vmatmul.bf16.gmra.mxu0 %v659
  %v1366 = vpop.f32.mrf.mxu0
  %v1367 = vadd.f32 0.0, %v1366
  %v1368 = vpop.f32.mrf.mxu0
  %v1369 = vadd.f32 0.0, %v1368
  %1370 = vmatmul.bf16.gmra.mxu0 %v662
  %v1371 = vpop.f32.mrf.mxu0
  %v1372 = vadd.f32 0.0, %v1371
  %v1373 = vpop.f32.mrf.mxu0
  %1374 = vdwg.mxu0
  %1375 = vmatpush.bf16.msra.mxu0 0
  %1376 = vmatpush.bf16.msra.mxu0 0
  %1377 = vmatpush.bf16.msra.mxu0 %v290
  %1378 = vmatpush.bf16.msra.mxu0 %v288
  %1379 = vmatpush.bf16.msra.mxu0 %v286
  %1380 = vmatpush.bf16.msra.mxu0 %v284
  %1381 = vmatpush.bf16.msra.mxu0 %v282
  %1382 = vmatpush.bf16.msra.mxu0 %v280
  %1383 = vmatmul.bf16.gmra.mxu0 %v472
  %v1384 = vpop.f32.mrf.mxu0
  %v1385 = vadd.f32 %v1329, %v1384
  %v1386 = vpop.f32.mrf.mxu0
  %v1387 = vadd.f32 %v1331, %v1386
  %1388 = vmatmul.bf16.gmra.mxu0 %v475
  %v1389 = vpop.f32.mrf.mxu0
  %v1390 = vadd.f32 %v1334, %v1389
  %v1391 = vpop.f32.mrf.mxu0
  %v1392 = vadd.f32 %v1336, %v1391
  %1393 = vmatmul.bf16.gmra.mxu0 %v478
  %v1394 = vpop.f32.mrf.mxu0
  %v1395 = vadd.f32 %v1339, %v1394
  %v1396 = vpop.f32.mrf.mxu0
  %v1397 = vadd.f32 %v1341, %v1396
  %1398 = vmatmul.bf16.gmra.mxu0 %v481
  %v1399 = vpop.f32.mrf.mxu0
  %v1400 = vadd.f32 %v1344, %v1399
  %v1401 = vpop.f32.mrf.mxu0
  %1402 = vdwg.mxu0
  %1403 = vmatpush.bf16.msra.mxu0 0
  %1404 = vmatpush.bf16.msra.mxu0 0
  %1405 = vmatpush.bf16.msra.mxu0 %v291
  %1406 = vmatpush.bf16.msra.mxu0 %v289
  %1407 = vmatpush.bf16.msra.mxu0 %v287
  %1408 = vmatpush.bf16.msra.mxu0 %v285
  %1409 = vmatpush.bf16.msra.mxu0 %v283
  %1410 = vmatpush.bf16.msra.mxu0 %v281
  %1411 = vmatmul.bf16.gmra.mxu0 %v472
  %v1412 = vpop.f32.mrf.mxu0
  %v1413 = vadd.f32 %v1357, %v1412
  %v1414 = vpop.f32.mrf.mxu0
  %v1415 = vadd.f32 %v1359, %v1414
  %1416 = vmatmul.bf16.gmra.mxu0 %v475
  %v1417 = vpop.f32.mrf.mxu0
  %v1418 = vadd.f32 %v1362, %v1417
  %v1419 = vpop.f32.mrf.mxu0
  %v1420 = vadd.f32 %v1364, %v1419
  %1421 = vmatmul.bf16.gmra.mxu0 %v478
  %v1422 = vpop.f32.mrf.mxu0
  %v1423 = vadd.f32 %v1367, %v1422
  %v1424 = vpop.f32.mrf.mxu0
  %v1425 = vadd.f32 %v1369, %v1424
  %1426 = vmatmul.bf16.gmra.mxu0 %v481
  %v1427 = vpop.f32.mrf.mxu0
  %v1428 = vadd.f32 %v1372, %v1427
  %v1429 = vpop.f32.mrf.mxu0
  %1430 = vdwg.mxu0
  %1431 = vmatpush.bf16.msra.mxu0 0
  %1432 = vmatpush.bf16.msra.mxu0 0
  %1433 = vmatpush.bf16.msra.mxu0 %v457
  %1434 = vmatpush.bf16.msra.mxu0 %v455
  %1435 = vmatpush.bf16.msra.mxu0 %v453
  %1436 = vmatpush.bf16.msra.mxu0 %v451
  %1437 = vmatpush.bf16.msra.mxu0 %v449
  %1438 = vmatpush.bf16.msra.mxu0 %v447
  %1439 = vmatmul.bf16.gmra.mxu0 %v833
  %v1440 = vpop.f32.mrf.mxu0
  %v1441 = vadd.f32 0.0, %v1440
  %v1442 = vpop.f32.mrf.mxu0
  %v1443 = vadd.f32 0.0, %v1442
  %1444 = vmatmul.bf16.gmra.mxu0 %v836
  %v1445 = vpop.f32.mrf.mxu0
  %v1446 = vadd.f32 0.0, %v1445
  %v1447 = vpop.f32.mrf.mxu0
  %v1448 = vadd.f32 0.0, %v1447
  %1449 = vmatmul.bf16.gmra.mxu0 %v839
  %v1450 = vpop.f32.mrf.mxu0
  %v1451 = vadd.f32 0.0, %v1450
  %v1452 = vpop.f32.mrf.mxu0
  %v1453 = vadd.f32 0.0, %v1452
  %1454 = vmatmul.bf16.gmra.mxu0 %v842
  %v1455 = vpop.f32.mrf.mxu0
  %v1456 = vadd.f32 0.0, %v1455
  %v1457 = vpop.f32.mrf.mxu0
  %1458 = vdwg.mxu0
  %1459 = vmatpush.bf16.msra.mxu0 0
  %1460 = vmatpush.bf16.msra.mxu0 0
  %1461 = vmatpush.bf16.msra.mxu0 %v458
  %1462 = vmatpush.bf16.msra.mxu0 %v456
  %1463 = vmatpush.bf16.msra.mxu0 %v454
  %1464 = vmatpush.bf16.msra.mxu0 %v452
  %1465 = vmatpush.bf16.msra.mxu0 %v450
  %1466 = vmatpush.bf16.msra.mxu0 %v448
  %1467 = vmatmul.bf16.gmra.mxu0 %v833
  %v1468 = vpop.f32.mrf.mxu0
  %v1469 = vadd.f32 0.0, %v1468
  %v1470 = vpop.f32.mrf.mxu0
  %v1471 = vadd.f32 0.0, %v1470
  %1472 = vmatmul.bf16.gmra.mxu0 %v836
  %v1473 = vpop.f32.mrf.mxu0
  %v1474 = vadd.f32 0.0, %v1473
  %v1475 = vpop.f32.mrf.mxu0
  %v1476 = vadd.f32 0.0, %v1475
  %1477 = vmatmul.bf16.gmra.mxu0 %v839
  %v1478 = vpop.f32.mrf.mxu0
  %v1479 = vadd.f32 0.0, %v1478
  %v1480 = vpop.f32.mrf.mxu0
  %v1481 = vadd.f32 0.0, %v1480
  %1482 = vmatmul.bf16.gmra.mxu0 %v842
  %v1483 = vpop.f32.mrf.mxu0
  %v1484 = vadd.f32 0.0, %v1483
  %v1485 = vpop.f32.mrf.mxu0
  %1486 = vdwg.mxu0
  %v1487 = vadd.f32 %v1385, %v1441
  %v1488 = vadd.f32 %v1413, %v1469
  %v1489 = vadd.f32 %v1387, %v1443
  %v1490 = vadd.f32 %v1415, %v1471
  %v1491 = vadd.f32 %v1390, %v1446
  %v1492 = vadd.f32 %v1418, %v1474
  %v1493 = vadd.f32 %v1392, %v1448
  %v1494 = vadd.f32 %v1420, %v1476
  %v1495 = vadd.f32 %v1395, %v1451
  %v1496 = vadd.f32 %v1423, %v1479
  %v1497 = vadd.f32 %v1397, %v1453
  %v1498 = vadd.f32 %v1425, %v1481
  %v1499 = vadd.f32 %v1400, %v1456
  %v1500 = vadd.f32 %v1428, %v1484
  %1501 = vmatpush.bf16.msra.mxu0 0
  %1502 = vmatpush.bf16.msra.mxu0 0
  %1503 = vmatpush.bf16.msra.mxu0 %v638
  %1504 = vmatpush.bf16.msra.mxu0 %v636
  %1505 = vmatpush.bf16.msra.mxu0 %v634
  %1506 = vmatpush.bf16.msra.mxu0 %v632
  %1507 = vmatpush.bf16.msra.mxu0 %v630
  %1508 = vmatpush.bf16.msra.mxu0 %v628
  %1509 = vmatmul.bf16.gmra.mxu0 %v1199
  %v1510 = vpop.f32.mrf.mxu0
  %v1511 = vadd.f32 0.0, %v1510
  %v1512 = vpop.f32.mrf.mxu0
  %v1513 = vadd.f32 0.0, %v1512
  %1514 = vmatmul.bf16.gmra.mxu0 %v1202
  %v1515 = vpop.f32.mrf.mxu0
  %v1516 = vadd.f32 0.0, %v1515
  %v1517 = vpop.f32.mrf.mxu0
  %v1518 = vadd.f32 0.0, %v1517
  %1519 = vmatmul.bf16.gmra.mxu0 %v1205
  %v1520 = vpop.f32.mrf.mxu0
  %v1521 = vadd.f32 0.0, %v1520
  %v1522 = vpop.f32.mrf.mxu0
  %v1523 = vadd.f32 0.0, %v1522
  %1524 = vmatmul.bf16.gmra.mxu0 %v1208
  %v1525 = vpop.f32.mrf.mxu0
  %v1526 = vadd.f32 0.0, %v1525
  %v1527 = vpop.f32.mrf.mxu0
  %1528 = vdwg.mxu0
  %1529 = vmatpush.bf16.msra.mxu0 0
  %1530 = vmatpush.bf16.msra.mxu0 0
  %1531 = vmatpush.bf16.msra.mxu0 %v639
  %1532 = vmatpush.bf16.msra.mxu0 %v637
  %1533 = vmatpush.bf16.msra.mxu0 %v635
  %1534 = vmatpush.bf16.msra.mxu0 %v633
  %1535 = vmatpush.bf16.msra.mxu0 %v631
  %1536 = vmatpush.bf16.msra.mxu0 %v629
  %1537 = vmatmul.bf16.gmra.mxu0 %v1199
  %v1538 = vpop.f32.mrf.mxu0
  %v1539 = vadd.f32 0.0, %v1538
  %v1540 = vpop.f32.mrf.mxu0
  %v1541 = vadd.f32 0.0, %v1540
  %1542 = vmatmul.bf16.gmra.mxu0 %v1202
  %v1543 = vpop.f32.mrf.mxu0
  %v1544 = vadd.f32 0.0, %v1543
  %v1545 = vpop.f32.mrf.mxu0
  %v1546 = vadd.f32 0.0, %v1545
  %1547 = vmatmul.bf16.gmra.mxu0 %v1205
  %v1548 = vpop.f32.mrf.mxu0
  %v1549 = vadd.f32 0.0, %v1548
  %v1550 = vpop.f32.mrf.mxu0
  %v1551 = vadd.f32 0.0, %v1550
  %1552 = vmatmul.bf16.gmra.mxu0 %v1208
  %v1553 = vpop.f32.mrf.mxu0
  %v1554 = vadd.f32 0.0, %v1553
  %v1555 = vpop.f32.mrf.mxu0
  %1556 = vdwg.mxu0
  %v1557 = vadd.f32 %v1487, %v1511
  %v1558 = vadd.f32 %v1488, %v1539
  %v1559 = vadd.f32 %v1489, %v1513
  %v1560 = vadd.f32 %v1490, %v1541
  %v1561 = vadd.f32 %v1491, %v1516
  %v1562 = vadd.f32 %v1492, %v1544
  %v1563 = vadd.f32 %v1493, %v1518
  %v1564 = vadd.f32 %v1494, %v1546
  %v1565 = vadd.f32 %v1495, %v1521
  %v1566 = vadd.f32 %v1496, %v1549
  %v1567 = vadd.f32 %v1497, %v1523
  %v1568 = vadd.f32 %v1498, %v1551
  %v1569 = vadd.f32 %v1499, %v1526
  %v1570 = vadd.f32 %v1500, %v1554
  %v1571 = vld [vmem:[%s372 + $0x4] sm:$0xf]
  %v1572 = vld [vmem:[%s372 + $0x8] sm:$0xf]
  %v1573 = vld [vmem:[%s372 + $0xc] sm:$0xf]
  %v1574 = vld [vmem:[%s372 + $0x10] sm:$0xf]
  %v1575 = vld [vmem:[%s372 + $0x14] sm:$0xf]
  %v1576 = vld [vmem:[%s372 + $0x18] sm:$0xf]
  %v1577 = vld [vmem:[%s372 + $0x1c] sm:$0xf]
  %v1585 = vunpack.c.l.b16 %v1571
  %v1586 = vunpack.c.l.b16 %v1572
  %v1587 = vunpack.c.l.b16 %v1573
  %v1588 = vunpack.c.l.b16 %v1574
  %v1589 = vunpack.c.l.b16 %v1575
  %v1590 = vunpack.c.l.b16 %v1576
  %v1591 = vunpack.c.l.b16 %v1577
  %v1592 = vpack.c.b16 %v1586, %v1585
  %v1593 = vpack.c.b16 %v1588, %v1587
  %v1594 = vpack.c.b16 %v1590, %v1589
  %v1595 = vpack.c.b16 %v1591, %v1591
  %v1597 = vsel %vm157, %v1592, 0
  %v1600 = vsel %vm157, %v1593, 0
  %v1603 = vsel %vm157, %v1594, 0
  %v1606 = vsel %vm157, %v1595, 0
  %1608 = vmatpush.bf16.msra.mxu0 0
  %1609 = vmatpush.bf16.msra.mxu0 0
  %1610 = vmatpush.bf16.msra.mxu0 %v818
  %1611 = vmatpush.bf16.msra.mxu0 %v816
  %1612 = vmatpush.bf16.msra.mxu0 %v814
  %1613 = vmatpush.bf16.msra.mxu0 %v812
  %1614 = vmatpush.bf16.msra.mxu0 %v810
  %1615 = vmatpush.bf16.msra.mxu0 %v808
  %1616 = vmatmul.bf16.gmra.mxu0 %v1597
  %v1617 = vpop.f32.mrf.mxu0
  %v1618 = vadd.f32 0.0, %v1617
  %v1619 = vpop.f32.mrf.mxu0
  %v1620 = vadd.f32 0.0, %v1619
  %1621 = vmatmul.bf16.gmra.mxu0 %v1600
  %v1622 = vpop.f32.mrf.mxu0
  %v1623 = vadd.f32 0.0, %v1622
  %v1624 = vpop.f32.mrf.mxu0
  %v1625 = vadd.f32 0.0, %v1624
  %1626 = vmatmul.bf16.gmra.mxu0 %v1603
  %v1627 = vpop.f32.mrf.mxu0
  %v1628 = vadd.f32 0.0, %v1627
  %v1629 = vpop.f32.mrf.mxu0
  %v1630 = vadd.f32 0.0, %v1629
  %1631 = vmatmul.bf16.gmra.mxu0 %v1606
  %v1632 = vpop.f32.mrf.mxu0
  %v1633 = vadd.f32 0.0, %v1632
  %v1634 = vpop.f32.mrf.mxu0
  %1635 = vdwg.mxu0
  %1636 = vmatpush.bf16.msra.mxu0 0
  %1637 = vmatpush.bf16.msra.mxu0 0
  %1638 = vmatpush.bf16.msra.mxu0 %v819
  %1639 = vmatpush.bf16.msra.mxu0 %v817
  %1640 = vmatpush.bf16.msra.mxu0 %v815
  %1641 = vmatpush.bf16.msra.mxu0 %v813
  %1642 = vmatpush.bf16.msra.mxu0 %v811
  %1643 = vmatpush.bf16.msra.mxu0 %v809
  %1644 = vmatmul.bf16.gmra.mxu0 %v1597
  %v1645 = vpop.f32.mrf.mxu0
  %v1646 = vadd.f32 0.0, %v1645
  %v1647 = vpop.f32.mrf.mxu0
  %v1648 = vadd.f32 0.0, %v1647
  %1649 = vmatmul.bf16.gmra.mxu0 %v1600
  %v1650 = vpop.f32.mrf.mxu0
  %v1651 = vadd.f32 0.0, %v1650
  %v1652 = vpop.f32.mrf.mxu0
  %v1653 = vadd.f32 0.0, %v1652
  %1654 = vmatmul.bf16.gmra.mxu0 %v1603
  %v1655 = vpop.f32.mrf.mxu0
  %v1656 = vadd.f32 0.0, %v1655
  %v1657 = vpop.f32.mrf.mxu0
  %v1658 = vadd.f32 0.0, %v1657
  %1659 = vmatmul.bf16.gmra.mxu0 %v1606
  %v1660 = vpop.f32.mrf.mxu0
  %v1661 = vadd.f32 0.0, %v1660
  %v1662 = vpop.f32.mrf.mxu0
  %1663 = vdwg.mxu0
  %v1664 = vadd.f32 %v1557, %v1618
  %v1665 = vadd.f32 %v1558, %v1646
  %v1666 = vadd.f32 %v1559, %v1620
  %v1667 = vadd.f32 %v1560, %v1648
  %v1668 = vadd.f32 %v1561, %v1623
  %v1669 = vadd.f32 %v1562, %v1651
  %v1670 = vadd.f32 %v1563, %v1625
  %v1671 = vadd.f32 %v1564, %v1653
  %v1672 = vadd.f32 %v1565, %v1628
  %v1673 = vadd.f32 %v1566, %v1656
  %v1674 = vadd.f32 %v1567, %v1630
  %v1675 = vadd.f32 %v1568, %v1658
  %v1676 = vadd.f32 %v1569, %v1633
  %v1677 = vadd.f32 %v1570, %v1661
  %v1678 = vmax.f32 %v1664, %v1665
  %v1679 = vmax.f32 %v1666, %v1667
  %v1680 = vmax.f32 %v1668, %v1669
  %v1681 = vmax.f32 %v1670, %v1671
  %v1682 = vmax.f32 %v1672, %v1673
  %v1683 = vmax.f32 %v1674, %v1675
  %v1684 = vmax.f32 %v1676, %v1677
  %1685 = vmatpush.bf16.msra.mxu0 0
  %1686 = vmatpush.bf16.msra.mxu0 0
  %1687 = vmatpush.bf16.msra.mxu0 %v143
  %1688 = vmatpush.bf16.msra.mxu0 %v141
  %1689 = vmatpush.bf16.msra.mxu0 %v139
  %1690 = vmatpush.bf16.msra.mxu0 %v137
  %1691 = vmatpush.bf16.msra.mxu0 %v135
  %1692 = vmatpush.bf16.msra.mxu0 %v133
  %1693 = vmatmul.bf16.gmra.mxu0 %v833
  %v1694 = vpop.f32.mrf.mxu0
  %v1695 = vadd.f32 0.0, %v1694
  %v1696 = vpop.f32.mrf.mxu0
  %v1697 = vadd.f32 0.0, %v1696
  %1698 = vmatmul.bf16.gmra.mxu0 %v836
  %v1699 = vpop.f32.mrf.mxu0
  %v1700 = vadd.f32 0.0, %v1699
  %v1701 = vpop.f32.mrf.mxu0
  %v1702 = vadd.f32 0.0, %v1701
  %1703 = vmatmul.bf16.gmra.mxu0 %v839
  %v1704 = vpop.f32.mrf.mxu0
  %v1705 = vadd.f32 0.0, %v1704
  %v1706 = vpop.f32.mrf.mxu0
  %v1707 = vadd.f32 0.0, %v1706
  %1708 = vmatmul.bf16.gmra.mxu0 %v842
  %v1709 = vpop.f32.mrf.mxu0
  %v1710 = vadd.f32 0.0, %v1709
  %v1711 = vpop.f32.mrf.mxu0
  %1712 = vdwg.mxu0
  %1713 = vmatpush.bf16.msra.mxu0 0
  %1714 = vmatpush.bf16.msra.mxu0 0
  %1715 = vmatpush.bf16.msra.mxu0 %v144
  %1716 = vmatpush.bf16.msra.mxu0 %v142
  %1717 = vmatpush.bf16.msra.mxu0 %v140
  %1718 = vmatpush.bf16.msra.mxu0 %v138
  %1719 = vmatpush.bf16.msra.mxu0 %v136
  %1720 = vmatpush.bf16.msra.mxu0 %v134
  %1721 = vmatmul.bf16.gmra.mxu0 %v833
  %v1722 = vpop.f32.mrf.mxu0
  %v1723 = vadd.f32 0.0, %v1722
  %v1724 = vpop.f32.mrf.mxu0
  %v1725 = vadd.f32 0.0, %v1724
  %1726 = vmatmul.bf16.gmra.mxu0 %v836
  %v1727 = vpop.f32.mrf.mxu0
  %v1728 = vadd.f32 0.0, %v1727
  %v1729 = vpop.f32.mrf.mxu0
  %v1730 = vadd.f32 0.0, %v1729
  %1731 = vmatmul.bf16.gmra.mxu0 %v839
  %v1732 = vpop.f32.mrf.mxu0
  %v1733 = vadd.f32 0.0, %v1732
  %v1734 = vpop.f32.mrf.mxu0
  %v1735 = vadd.f32 0.0, %v1734
  %1736 = vmatmul.bf16.gmra.mxu0 %v842
  %v1737 = vpop.f32.mrf.mxu0
  %v1738 = vadd.f32 0.0, %v1737
  %v1739 = vpop.f32.mrf.mxu0
  %1740 = vdwg.mxu0
  %1741 = vmatpush.bf16.msra.mxu0 0
  %1742 = vmatpush.bf16.msra.mxu0 0
  %1743 = vmatpush.bf16.msra.mxu0 %v290
  %1744 = vmatpush.bf16.msra.mxu0 %v288
  %1745 = vmatpush.bf16.msra.mxu0 %v286
  %1746 = vmatpush.bf16.msra.mxu0 %v284
  %1747 = vmatpush.bf16.msra.mxu0 %v282
  %1748 = vmatpush.bf16.msra.mxu0 %v280
  %1749 = vmatmul.bf16.gmra.mxu0 %v653
  %v1750 = vpop.f32.mrf.mxu0
  %v1751 = vadd.f32 %v1695, %v1750
  %v1752 = vpop.f32.mrf.mxu0
  %v1753 = vadd.f32 %v1697, %v1752
  %1754 = vmatmul.bf16.gmra.mxu0 %v656
  %v1755 = vpop.f32.mrf.mxu0
  %v1756 = vadd.f32 %v1700, %v1755
  %v1757 = vpop.f32.mrf.mxu0
  %v1758 = vadd.f32 %v1702, %v1757
  %1759 = vmatmul.bf16.gmra.mxu0 %v659
  %v1760 = vpop.f32.mrf.mxu0
  %v1761 = vadd.f32 %v1705, %v1760
  %v1762 = vpop.f32.mrf.mxu0
  %v1763 = vadd.f32 %v1707, %v1762
  %1764 = vmatmul.bf16.gmra.mxu0 %v662
  %v1765 = vpop.f32.mrf.mxu0
  %v1766 = vadd.f32 %v1710, %v1765
  %v1767 = vpop.f32.mrf.mxu0
  %1768 = vdwg.mxu0
  %1769 = vmatpush.bf16.msra.mxu0 0
  %1770 = vmatpush.bf16.msra.mxu0 0
  %1771 = vmatpush.bf16.msra.mxu0 %v291
  %1772 = vmatpush.bf16.msra.mxu0 %v289
  %1773 = vmatpush.bf16.msra.mxu0 %v287
  %1774 = vmatpush.bf16.msra.mxu0 %v285
  %1775 = vmatpush.bf16.msra.mxu0 %v283
  %1776 = vmatpush.bf16.msra.mxu0 %v281
  %1777 = vmatmul.bf16.gmra.mxu0 %v653
  %v1778 = vpop.f32.mrf.mxu0
  %v1779 = vadd.f32 %v1723, %v1778
  %v1780 = vpop.f32.mrf.mxu0
  %v1781 = vadd.f32 %v1725, %v1780
  %1782 = vmatmul.bf16.gmra.mxu0 %v656
  %v1783 = vpop.f32.mrf.mxu0
  %v1784 = vadd.f32 %v1728, %v1783
  %v1785 = vpop.f32.mrf.mxu0
  %v1786 = vadd.f32 %v1730, %v1785
  %1787 = vmatmul.bf16.gmra.mxu0 %v659
  %v1788 = vpop.f32.mrf.mxu0
  %v1789 = vadd.f32 %v1733, %v1788
  %v1790 = vpop.f32.mrf.mxu0
  %v1791 = vadd.f32 %v1735, %v1790
  %1792 = vmatmul.bf16.gmra.mxu0 %v662
  %v1793 = vpop.f32.mrf.mxu0
  %v1794 = vadd.f32 %v1738, %v1793
  %v1795 = vpop.f32.mrf.mxu0
  %1796 = vdwg.mxu0
  %1797 = vmatpush.bf16.msra.mxu0 0
  %1798 = vmatpush.bf16.msra.mxu0 0
  %1799 = vmatpush.bf16.msra.mxu0 %v457
  %1800 = vmatpush.bf16.msra.mxu0 %v455
  %1801 = vmatpush.bf16.msra.mxu0 %v453
  %1802 = vmatpush.bf16.msra.mxu0 %v451
  %1803 = vmatpush.bf16.msra.mxu0 %v449
  %1804 = vmatpush.bf16.msra.mxu0 %v447
  %1805 = vmatmul.bf16.gmra.mxu0 %v1199
  %v1806 = vpop.f32.mrf.mxu0
  %v1807 = vadd.f32 0.0, %v1806
  %v1808 = vpop.f32.mrf.mxu0
  %v1809 = vadd.f32 0.0, %v1808
  %1810 = vmatmul.bf16.gmra.mxu0 %v1202
  %v1811 = vpop.f32.mrf.mxu0
  %v1812 = vadd.f32 0.0, %v1811
  %v1813 = vpop.f32.mrf.mxu0
  %v1814 = vadd.f32 0.0, %v1813
  %1815 = vmatmul.bf16.gmra.mxu0 %v1205
  %v1816 = vpop.f32.mrf.mxu0
  %v1817 = vadd.f32 0.0, %v1816
  %v1818 = vpop.f32.mrf.mxu0
  %v1819 = vadd.f32 0.0, %v1818
  %1820 = vmatmul.bf16.gmra.mxu0 %v1208
  %v1821 = vpop.f32.mrf.mxu0
  %v1822 = vadd.f32 0.0, %v1821
  %v1823 = vpop.f32.mrf.mxu0
  %1824 = vdwg.mxu0
  %1825 = vmatpush.bf16.msra.mxu0 0
  %1826 = vmatpush.bf16.msra.mxu0 0
  %1827 = vmatpush.bf16.msra.mxu0 %v458
  %1828 = vmatpush.bf16.msra.mxu0 %v456
  %1829 = vmatpush.bf16.msra.mxu0 %v454
  %1830 = vmatpush.bf16.msra.mxu0 %v452
  %1831 = vmatpush.bf16.msra.mxu0 %v450
  %1832 = vmatpush.bf16.msra.mxu0 %v448
  %1833 = vmatmul.bf16.gmra.mxu0 %v1199
  %v1834 = vpop.f32.mrf.mxu0
  %v1835 = vadd.f32 0.0, %v1834
  %v1836 = vpop.f32.mrf.mxu0
  %v1837 = vadd.f32 0.0, %v1836
  %1838 = vmatmul.bf16.gmra.mxu0 %v1202
  %v1839 = vpop.f32.mrf.mxu0
  %v1840 = vadd.f32 0.0, %v1839
  %v1841 = vpop.f32.mrf.mxu0
  %v1842 = vadd.f32 0.0, %v1841
  %1843 = vmatmul.bf16.gmra.mxu0 %v1205
  %v1844 = vpop.f32.mrf.mxu0
  %v1845 = vadd.f32 0.0, %v1844
  %v1846 = vpop.f32.mrf.mxu0
  %v1847 = vadd.f32 0.0, %v1846
  %1848 = vmatmul.bf16.gmra.mxu0 %v1208
  %v1849 = vpop.f32.mrf.mxu0
  %v1850 = vadd.f32 0.0, %v1849
  %v1851 = vpop.f32.mrf.mxu0
  %1852 = vdwg.mxu0
  %v1853 = vadd.f32 %v1751, %v1807
  %v1854 = vadd.f32 %v1779, %v1835
  %v1855 = vadd.f32 %v1753, %v1809
  %v1856 = vadd.f32 %v1781, %v1837
  %v1857 = vadd.f32 %v1756, %v1812
  %v1858 = vadd.f32 %v1784, %v1840
  %v1859 = vadd.f32 %v1758, %v1814
  %v1860 = vadd.f32 %v1786, %v1842
  %v1861 = vadd.f32 %v1761, %v1817
  %v1862 = vadd.f32 %v1789, %v1845
  %v1863 = vadd.f32 %v1763, %v1819
  %v1864 = vadd.f32 %v1791, %v1847
  %v1865 = vadd.f32 %v1766, %v1822
  %v1866 = vadd.f32 %v1794, %v1850
  %1867 = vmatpush.bf16.msra.mxu0 0
  %1868 = vmatpush.bf16.msra.mxu0 0
  %1869 = vmatpush.bf16.msra.mxu0 %v638
  %1870 = vmatpush.bf16.msra.mxu0 %v636
  %1871 = vmatpush.bf16.msra.mxu0 %v634
  %1872 = vmatpush.bf16.msra.mxu0 %v632
  %1873 = vmatpush.bf16.msra.mxu0 %v630
  %1874 = vmatpush.bf16.msra.mxu0 %v628
  %1875 = vmatmul.bf16.gmra.mxu0 %v1597
  %v1876 = vpop.f32.mrf.mxu0
  %v1877 = vadd.f32 0.0, %v1876
  %v1878 = vpop.f32.mrf.mxu0
  %v1879 = vadd.f32 0.0, %v1878
  %1880 = vmatmul.bf16.gmra.mxu0 %v1600
  %v1881 = vpop.f32.mrf.mxu0
  %v1882 = vadd.f32 0.0, %v1881
  %v1883 = vpop.f32.mrf.mxu0
  %v1884 = vadd.f32 0.0, %v1883
  %1885 = vmatmul.bf16.gmra.mxu0 %v1603
  %v1886 = vpop.f32.mrf.mxu0
  %v1887 = vadd.f32 0.0, %v1886
  %v1888 = vpop.f32.mrf.mxu0
  %v1889 = vadd.f32 0.0, %v1888
  %1890 = vmatmul.bf16.gmra.mxu0 %v1606
  %v1891 = vpop.f32.mrf.mxu0
  %v1892 = vadd.f32 0.0, %v1891
  %v1893 = vpop.f32.mrf.mxu0
  %1894 = vdwg.mxu0
  %1895 = vmatpush.bf16.msra.mxu0 0
  %1896 = vmatpush.bf16.msra.mxu0 0
  %1897 = vmatpush.bf16.msra.mxu0 %v639
  %1898 = vmatpush.bf16.msra.mxu0 %v637
  %1899 = vmatpush.bf16.msra.mxu0 %v635
  %1900 = vmatpush.bf16.msra.mxu0 %v633
  %1901 = vmatpush.bf16.msra.mxu0 %v631
  %1902 = vmatpush.bf16.msra.mxu0 %v629
  %1903 = vmatmul.bf16.gmra.mxu0 %v1597
  %v1904 = vpop.f32.mrf.mxu0
  %v1905 = vadd.f32 0.0, %v1904
  %v1906 = vpop.f32.mrf.mxu0
  %v1907 = vadd.f32 0.0, %v1906
  %1908 = vmatmul.bf16.gmra.mxu0 %v1600
  %v1909 = vpop.f32.mrf.mxu0
  %v1910 = vadd.f32 0.0, %v1909
  %v1911 = vpop.f32.mrf.mxu0
  %v1912 = vadd.f32 0.0, %v1911
  %1913 = vmatmul.bf16.gmra.mxu0 %v1603
  %v1914 = vpop.f32.mrf.mxu0
  %v1915 = vadd.f32 0.0, %v1914
  %v1916 = vpop.f32.mrf.mxu0
  %v1917 = vadd.f32 0.0, %v1916
  %1918 = vmatmul.bf16.gmra.mxu0 %v1606
  %v1919 = vpop.f32.mrf.mxu0
  %v1920 = vadd.f32 0.0, %v1919
  %v1921 = vpop.f32.mrf.mxu0
  %1922 = vdwg.mxu0
  %v1923 = vadd.f32 %v1853, %v1877
  %v1924 = vadd.f32 %v1854, %v1905
  %v1925 = vadd.f32 %v1855, %v1879
  %v1926 = vadd.f32 %v1856, %v1907
  %v1927 = vadd.f32 %v1857, %v1882
  %v1928 = vadd.f32 %v1858, %v1910
  %v1929 = vadd.f32 %v1859, %v1884
  %v1930 = vadd.f32 %v1860, %v1912
  %v1931 = vadd.f32 %v1861, %v1887
  %v1932 = vadd.f32 %v1862, %v1915
  %v1933 = vadd.f32 %v1863, %v1889
  %v1934 = vadd.f32 %v1864, %v1917
  %v1935 = vadd.f32 %v1865, %v1892
  %v1936 = vadd.f32 %v1866, %v1920
  %v1937 = vld [vmem:[%s553 + $0x4] sm:$0xf]
  %v1938 = vld [vmem:[%s553 + $0x8] sm:$0xf]
  %v1939 = vld [vmem:[%s553 + $0xc] sm:$0xf]
  %v1940 = vld [vmem:[%s553 + $0x10] sm:$0xf]
  %v1941 = vld [vmem:[%s553 + $0x14] sm:$0xf]
  %v1942 = vld [vmem:[%s553 + $0x18] sm:$0xf]
  %v1943 = vld [vmem:[%s553 + $0x1c] sm:$0xf]
  %v1951 = vunpack.c.l.b16 %v1937
  %v1952 = vunpack.c.l.b16 %v1938
  %v1953 = vunpack.c.l.b16 %v1939
  %v1954 = vunpack.c.l.b16 %v1940
  %v1955 = vunpack.c.l.b16 %v1941
  %v1956 = vunpack.c.l.b16 %v1942
  %v1957 = vunpack.c.l.b16 %v1943
  %v1958 = vpack.c.b16 %v1952, %v1951
  %v1959 = vpack.c.b16 %v1954, %v1953
  %v1960 = vpack.c.b16 %v1956, %v1955
  %v1961 = vpack.c.b16 %v1957, %v1957
  %v1963 = vsel %vm157, %v1958, 0
  %v1966 = vsel %vm157, %v1959, 0
  %v1969 = vsel %vm157, %v1960, 0
  %v1972 = vsel %vm157, %v1961, 0
  %1974 = vmatpush.bf16.msra.mxu0 0
  %1975 = vmatpush.bf16.msra.mxu0 0
  %1976 = vmatpush.bf16.msra.mxu0 %v818
  %1977 = vmatpush.bf16.msra.mxu0 %v816
  %1978 = vmatpush.bf16.msra.mxu0 %v814
  %1979 = vmatpush.bf16.msra.mxu0 %v812
  %1980 = vmatpush.bf16.msra.mxu0 %v810
  %1981 = vmatpush.bf16.msra.mxu0 %v808
  %1982 = vmatmul.bf16.gmra.mxu0 %v1963
  %v1983 = vpop.f32.mrf.mxu0
  %v1984 = vadd.f32 0.0, %v1983
  %v1985 = vpop.f32.mrf.mxu0
  %v1986 = vadd.f32 0.0, %v1985
  %1987 = vmatmul.bf16.gmra.mxu0 %v1966
  %v1988 = vpop.f32.mrf.mxu0
  %v1989 = vadd.f32 0.0, %v1988
  %v1990 = vpop.f32.mrf.mxu0
  %v1991 = vadd.f32 0.0, %v1990
  %1992 = vmatmul.bf16.gmra.mxu0 %v1969
  %v1993 = vpop.f32.mrf.mxu0
  %v1994 = vadd.f32 0.0, %v1993
  %v1995 = vpop.f32.mrf.mxu0
  %v1996 = vadd.f32 0.0, %v1995
  %1997 = vmatmul.bf16.gmra.mxu0 %v1972
  %v1998 = vpop.f32.mrf.mxu0
  %v1999 = vadd.f32 0.0, %v1998
  %v2000 = vpop.f32.mrf.mxu0
  %2001 = vdwg.mxu0
  %2002 = vmatpush.bf16.msra.mxu0 0
  %2003 = vmatpush.bf16.msra.mxu0 0
  %2004 = vmatpush.bf16.msra.mxu0 %v819
  %2005 = vmatpush.bf16.msra.mxu0 %v817
  %2006 = vmatpush.bf16.msra.mxu0 %v815
  %2007 = vmatpush.bf16.msra.mxu0 %v813
  %2008 = vmatpush.bf16.msra.mxu0 %v811
  %2009 = vmatpush.bf16.msra.mxu0 %v809
  %2010 = vmatmul.bf16.gmra.mxu0 %v1963
  %v2011 = vpop.f32.mrf.mxu0
  %v2012 = vadd.f32 0.0, %v2011
  %v2013 = vpop.f32.mrf.mxu0
  %v2014 = vadd.f32 0.0, %v2013
  %2015 = vmatmul.bf16.gmra.mxu0 %v1966
  %v2016 = vpop.f32.mrf.mxu0
  %v2017 = vadd.f32 0.0, %v2016
  %v2018 = vpop.f32.mrf.mxu0
  %v2019 = vadd.f32 0.0, %v2018
  %2020 = vmatmul.bf16.gmra.mxu0 %v1969
  %v2021 = vpop.f32.mrf.mxu0
  %v2022 = vadd.f32 0.0, %v2021
  %v2023 = vpop.f32.mrf.mxu0
  %v2024 = vadd.f32 0.0, %v2023
  %2025 = vmatmul.bf16.gmra.mxu0 %v1972
  %v2026 = vpop.f32.mrf.mxu0
  %v2027 = vadd.f32 0.0, %v2026
  %v2028 = vpop.f32.mrf.mxu0
  %2029 = vdwg.mxu0
  %v2030 = vadd.f32 %v1923, %v1984
  %v2031 = vadd.f32 %v1924, %v2012
  %v2032 = vadd.f32 %v1925, %v1986
  %v2033 = vadd.f32 %v1926, %v2014
  %v2034 = vadd.f32 %v1927, %v1989
  %v2035 = vadd.f32 %v1928, %v2017
  %v2036 = vadd.f32 %v1929, %v1991
  %v2037 = vadd.f32 %v1930, %v2019
  %v2038 = vadd.f32 %v1931, %v1994
  %v2039 = vadd.f32 %v1932, %v2022
  %v2040 = vadd.f32 %v1933, %v1996
  %v2041 = vadd.f32 %v1934, %v2024
  %v2042 = vadd.f32 %v1935, %v1999
  %v2043 = vadd.f32 %v1936, %v2027
  %v2044 = vmax.f32 %v2030, %v2031
  %v2045 = vmax.f32 %v2032, %v2033
  %v2046 = vmax.f32 %v2034, %v2035
  %v2047 = vmax.f32 %v2036, %v2037
  %v2048 = vmax.f32 %v2038, %v2039
  %v2049 = vmax.f32 %v2040, %v2041
  %v2050 = vmax.f32 %v2042, %v2043
  %v2051 = vmax.f32 %v1678, %v2044
  %v2052 = vmax.f32 %v1679, %v2045
  %v2053 = vmax.f32 %v1680, %v2046
  %v2054 = vmax.f32 %v1681, %v2047
  %v2055 = vmax.f32 %v1682, %v2048
  %v2056 = vmax.f32 %v1683, %v2049
  %v2057 = vmax.f32 %v1684, %v2050
  %v2058 = vadd.f32 %v2051, %v1296
  %v2059 = vadd.f32 %v2052, %v1296
  %v2060 = vadd.f32 %v2053, %v1296
  %v2061 = vadd.f32 %v2054, %v1296
  %v2062 = vadd.f32 %v2055, %v1296
  %v2063 = vadd.f32 %v2056, %v1296
  %v2064 = vadd.f32 %v2057, %v1296
  %v2065 = vmax.f32 %v2058, 0.0
  %v2066 = vmax.f32 %v2059, 0.0
  %v2067 = vmax.f32 %v2060, 0.0
  %v2068 = vmax.f32 %v2061, 0.0
  %v2069 = vmax.f32 %v2062, 0.0
  %v2070 = vmax.f32 %v2063, 0.0
  %v2071 = vmax.f32 %v2064, 0.0
  %v2072 = vpack.c.bf16 %v2065, %v2065
  %v2073 = vpack.c.bf16 %v2066, %v2066
  %v2074 = vpack.c.bf16 %v2067, %v2067
  %v2075 = vpack.c.bf16 %v2068, %v2068
  %v2076 = vpack.c.bf16 %v2069, %v2069
  %v2077 = vpack.c.bf16 %v2070, %v2070
  %v2078 = vpack.c.bf16 %v2071, %v2071
  %v2079 = vld [vmem:[%s3] sm:$0xff]
  %v2080 = vld [vmem:[%s3 + $0x8] sm:$0xff]
  %v2081 = vld [vmem:[%s3 + $0x10] sm:$0xff]
  %v2082 = vld [vmem:[%s3 + $0x18] sm:$0xff]
  %v2083 = vld [vmem:[%s3 + $0x20] sm:$0xff]
  %v2084 = vld [vmem:[%s3 + $0x28] sm:$0xff]
  %v2085 = vld [vmem:[%s3 + $0x30] sm:$0xff]
  %v2086 = vld [vmem:[%s3 + $0x38] sm:$0xff]
  %v2087 = vld [vmem:[%s3 + $0x40] sm:$0xff]
  %v2088 = vld [vmem:[%s3 + $0x48] sm:$0xff]
  %v2089 = vld [vmem:[%s3 + $0x50] sm:$0xff]
  %v2090 = vld [vmem:[%s3 + $0x58] sm:$0xff]
  %v2091 = vld [vmem:[%s3 + $0x60] sm:$0xff]
  %v2092 = vld [vmem:[%s3 + $0x68] sm:$0xff]
  %v2093 = vld [vmem:[%s3 + $0x70] sm:$0xff]
  %v2094 = vld [vmem:[%s3 + $0x78] sm:$0xff]
  %s2095 = scalar_lea.vmem %s3, 128
  %v2096 = vld [vmem:[%s2095] sm:$0xff]
  %v2097 = vld [vmem:[%s2095 + $0x8] sm:$0xff]
  %v2098 = vld [vmem:[%s2095 + $0x10] sm:$0xff]
  %v2099 = vld [vmem:[%s2095 + $0x18] sm:$0xff]
  %v2100 = vld [vmem:[%s2095 + $0x20] sm:$0xff]
  %v2101 = vld [vmem:[%s2095 + $0x28] sm:$0xff]
  %v2102 = vld [vmem:[%s2095 + $0x30] sm:$0xff]
  %v2103 = vld [vmem:[%s2095 + $0x38] sm:$0xff]
  %v2104 = vld [vmem:[%s2095 + $0x40] sm:$0xff]
  %v2105 = vld [vmem:[%s2095 + $0x48] sm:$0xff]
  %v2106 = vld [vmem:[%s2095 + $0x50] sm:$0xff]
  %v2107 = vld [vmem:[%s2095 + $0x58] sm:$0xff]
  %v2108 = vld [vmem:[%s2095 + $0x60] sm:$0xff]
  %v2109 = vld [vmem:[%s2095 + $0x68] sm:$0xff]
  %v2110 = vld [vmem:[%s2095 + $0x70] sm:$0xff]
  %v2111 = vld [vmem:[%s2095 + $0x78] sm:$0xff]
  %v2117 = vunpack.c.l.b16 %v2072
  %v2118 = vunpack.c.l.b16 %v2073
  %v2119 = vunpack.c.l.b16 %v2074
  %v2120 = vunpack.c.l.b16 %v2075
  %v2121 = vunpack.c.l.b16 %v2076
  %v2122 = vpack.c.b16 %v2118, %v2117
  %v2123 = vpack.c.b16 %v2120, %v2119
  %v2124 = vpack.c.b16 %v2121, %v2121
  %v2144 = vunpack.c.l.b16 %v2096
  %v2145 = vunpack.c.h.b16 %v2096
  %v2146 = vunpack.c.l.b16 %v2097
  %v2147 = vunpack.c.h.b16 %v2097
  %v2148 = vunpack.c.l.b16 %v2098
  %v2149 = vunpack.c.h.b16 %v2098
  %v2150 = vunpack.c.l.b16 %v2099
  %v2151 = vunpack.c.h.b16 %v2099
  %v2152 = vunpack.c.l.b16 %v2100
  %v2153 = vunpack.c.h.b16 %v2100
  %v2154 = vunpack.c.l.b16 %v2101
  %v2155 = vunpack.c.h.b16 %v2101
  %v2156 = vunpack.c.l.b16 %v2102
  %v2157 = vunpack.c.h.b16 %v2102
  %v2158 = vunpack.c.l.b16 %v2103
  %v2159 = vunpack.c.h.b16 %v2103
  %v2160 = vunpack.c.l.b16 %v2104
  %v2161 = vunpack.c.h.b16 %v2104
  %v2162 = vunpack.c.l.b16 %v2105
  %v2163 = vunpack.c.h.b16 %v2105
  %v2164 = vunpack.c.l.b16 %v2106
  %v2165 = vunpack.c.h.b16 %v2106
  %v2166 = vunpack.c.l.b16 %v2107
  %v2167 = vunpack.c.h.b16 %v2107
  %v2168 = vunpack.c.l.b16 %v2108
  %v2169 = vunpack.c.h.b16 %v2108
  %v2170 = vunpack.c.l.b16 %v2109
  %v2171 = vunpack.c.h.b16 %v2109
  %v2172 = vunpack.c.l.b16 %v2110
  %v2173 = vunpack.c.h.b16 %v2110
  %v2174 = vunpack.c.l.b16 %v2111
  %v2175 = vunpack.c.h.b16 %v2111
  %v2176 = vpack.c.b16 %v2146, %v2144
  %v2177 = vpack.c.b16 %v2147, %v2145
  %v2178 = vpack.c.b16 %v2150, %v2148
  %v2179 = vpack.c.b16 %v2151, %v2149
  %v2180 = vpack.c.b16 %v2154, %v2152
  %v2181 = vpack.c.b16 %v2155, %v2153
  %v2182 = vpack.c.b16 %v2158, %v2156
  %v2183 = vpack.c.b16 %v2159, %v2157
  %v2184 = vpack.c.b16 %v2162, %v2160
  %v2185 = vpack.c.b16 %v2163, %v2161
  %v2186 = vpack.c.b16 %v2166, %v2164
  %v2187 = vpack.c.b16 %v2167, %v2165
  %v2188 = vpack.c.b16 %v2170, %v2168
  %v2189 = vpack.c.b16 %v2171, %v2169
  %v2190 = vpack.c.b16 %v2174, %v2172
  %v2191 = vpack.c.b16 %v2175, %v2173
  %2208 = vmatpush.bf16.msra.mxu0 %v2190
  %2209 = vmatpush.bf16.msra.mxu0 %v2188
  %2210 = vmatpush.bf16.msra.mxu0 %v2186
  %2211 = vmatpush.bf16.msra.mxu0 %v2184
  %2212 = vmatpush.bf16.msra.mxu0 %v2182
  %2213 = vmatpush.bf16.msra.mxu0 %v2180
  %2214 = vmatpush.bf16.msra.mxu0 %v2178
  %2215 = vmatpush.bf16.msra.mxu0 %v2176
  %2216 = vmatmul.bf16.gmra.mxu0 %v2122
  %v2217 = vpop.f32.mrf.mxu0
  %v2218 = vadd.f32 0.0, %v2217
  %v2219 = vpop.f32.mrf.mxu0
  %v2220 = vadd.f32 0.0, %v2219
  %2221 = vmatmul.bf16.gmra.mxu0 %v2123
  %v2222 = vpop.f32.mrf.mxu0
  %v2223 = vadd.f32 0.0, %v2222
  %v2224 = vpop.f32.mrf.mxu0
  %v2225 = vadd.f32 0.0, %v2224
  %2226 = vmatmul.bf16.gmra.mxu0 %v2124
  %v2227 = vpop.f32.mrf.mxu0
  %v2228 = vadd.f32 0.0, %v2227
  %v2229 = vpop.f32.mrf.mxu0
  %2230 = vdwg.mxu0
  %2231 = vmatpush.bf16.msra.mxu0 %v2191
  %2232 = vmatpush.bf16.msra.mxu0 %v2189
  %2233 = vmatpush.bf16.msra.mxu0 %v2187
  %2234 = vmatpush.bf16.msra.mxu0 %v2185
  %2235 = vmatpush.bf16.msra.mxu0 %v2183
  %2236 = vmatpush.bf16.msra.mxu0 %v2181
  %2237 = vmatpush.bf16.msra.mxu0 %v2179
  %2238 = vmatpush.bf16.msra.mxu0 %v2177
  %2239 = vmatmul.bf16.gmra.mxu0 %v2122
  %v2240 = vpop.f32.mrf.mxu0
  %v2241 = vadd.f32 0.0, %v2240
  %v2242 = vpop.f32.mrf.mxu0
  %v2243 = vadd.f32 0.0, %v2242
  %2244 = vmatmul.bf16.gmra.mxu0 %v2123
  %v2245 = vpop.f32.mrf.mxu0
  %v2246 = vadd.f32 0.0, %v2245
  %v2247 = vpop.f32.mrf.mxu0
  %v2248 = vadd.f32 0.0, %v2247
  %2249 = vmatmul.bf16.gmra.mxu0 %v2124
  %v2250 = vpop.f32.mrf.mxu0
  %v2251 = vadd.f32 0.0, %v2250
  %v2252 = vpop.f32.mrf.mxu0
  %2253 = vdwg.mxu0
  %v2259 = vunpack.c.l.b16 %v1312
  %v2260 = vunpack.c.l.b16 %v1313
  %v2261 = vunpack.c.l.b16 %v1314
  %v2262 = vunpack.c.l.b16 %v1315
  %v2263 = vunpack.c.l.b16 %v1316
  %v2264 = vpack.c.b16 %v2260, %v2259
  %v2265 = vpack.c.b16 %v2262, %v2261
  %v2266 = vpack.c.b16 %v2263, %v2263
  %v2286 = vunpack.c.l.b16 %v2079
  %v2287 = vunpack.c.h.b16 %v2079
  %v2288 = vunpack.c.l.b16 %v2080
  %v2289 = vunpack.c.h.b16 %v2080
  %v2290 = vunpack.c.l.b16 %v2081
  %v2291 = vunpack.c.h.b16 %v2081
  %v2292 = vunpack.c.l.b16 %v2082
  %v2293 = vunpack.c.h.b16 %v2082
  %v2294 = vunpack.c.l.b16 %v2083
  %v2295 = vunpack.c.h.b16 %v2083
  %v2296 = vunpack.c.l.b16 %v2084
  %v2297 = vunpack.c.h.b16 %v2084
  %v2298 = vunpack.c.l.b16 %v2085
  %v2299 = vunpack.c.h.b16 %v2085
  %v2300 = vunpack.c.l.b16 %v2086
  %v2301 = vunpack.c.h.b16 %v2086
  %v2302 = vunpack.c.l.b16 %v2087
  %v2303 = vunpack.c.h.b16 %v2087
  %v2304 = vunpack.c.l.b16 %v2088
  %v2305 = vunpack.c.h.b16 %v2088
  %v2306 = vunpack.c.l.b16 %v2089
  %v2307 = vunpack.c.h.b16 %v2089
  %v2308 = vunpack.c.l.b16 %v2090
  %v2309 = vunpack.c.h.b16 %v2090
  %v2310 = vunpack.c.l.b16 %v2091
  %v2311 = vunpack.c.h.b16 %v2091
  %v2312 = vunpack.c.l.b16 %v2092
  %v2313 = vunpack.c.h.b16 %v2092
  %v2314 = vunpack.c.l.b16 %v2093
  %v2315 = vunpack.c.h.b16 %v2093
  %v2316 = vunpack.c.l.b16 %v2094
  %v2317 = vunpack.c.h.b16 %v2094
  %v2318 = vpack.c.b16 %v2288, %v2286
  %v2319 = vpack.c.b16 %v2289, %v2287
  %v2320 = vpack.c.b16 %v2292, %v2290
  %v2321 = vpack.c.b16 %v2293, %v2291
  %v2322 = vpack.c.b16 %v2296, %v2294
  %v2323 = vpack.c.b16 %v2297, %v2295
  %v2324 = vpack.c.b16 %v2300, %v2298
  %v2325 = vpack.c.b16 %v2301, %v2299
  %v2326 = vpack.c.b16 %v2304, %v2302
  %v2327 = vpack.c.b16 %v2305, %v2303
  %v2328 = vpack.c.b16 %v2308, %v2306
  %v2329 = vpack.c.b16 %v2309, %v2307
  %v2330 = vpack.c.b16 %v2312, %v2310
  %v2331 = vpack.c.b16 %v2313, %v2311
  %v2332 = vpack.c.b16 %v2316, %v2314
  %v2333 = vpack.c.b16 %v2317, %v2315
  %2350 = vmatpush.bf16.msra.mxu0 %v2332
  %2351 = vmatpush.bf16.msra.mxu0 %v2330
  %2352 = vmatpush.bf16.msra.mxu0 %v2328
  %2353 = vmatpush.bf16.msra.mxu0 %v2326
  %2354 = vmatpush.bf16.msra.mxu0 %v2324
  %2355 = vmatpush.bf16.msra.mxu0 %v2322
  %2356 = vmatpush.bf16.msra.mxu0 %v2320
  %2357 = vmatpush.bf16.msra.mxu0 %v2318
  %2358 = vmatmul.bf16.gmra.mxu0 %v2264
  %v2359 = vpop.f32.mrf.mxu0
  %v2360 = vadd.f32 %v2218, %v2359
  %v2361 = vpop.f32.mrf.mxu0
  %v2362 = vadd.f32 %v2220, %v2361
  %2363 = vmatmul.bf16.gmra.mxu0 %v2265
  %v2364 = vpop.f32.mrf.mxu0
  %v2365 = vadd.f32 %v2223, %v2364
  %v2366 = vpop.f32.mrf.mxu0
  %v2367 = vadd.f32 %v2225, %v2366
  %2368 = vmatmul.bf16.gmra.mxu0 %v2266
  %v2369 = vpop.f32.mrf.mxu0
  %v2370 = vadd.f32 %v2228, %v2369
  %v2371 = vpop.f32.mrf.mxu0
  %2372 = vdwg.mxu0
  %2373 = vmatpush.bf16.msra.mxu0 %v2333
  %2374 = vmatpush.bf16.msra.mxu0 %v2331
  %2375 = vmatpush.bf16.msra.mxu0 %v2329
  %2376 = vmatpush.bf16.msra.mxu0 %v2327
  %2377 = vmatpush.bf16.msra.mxu0 %v2325
  %2378 = vmatpush.bf16.msra.mxu0 %v2323
  %2379 = vmatpush.bf16.msra.mxu0 %v2321
  %2380 = vmatpush.bf16.msra.mxu0 %v2319
  %2381 = vmatmul.bf16.gmra.mxu0 %v2264
  %v2382 = vpop.f32.mrf.mxu0
  %v2383 = vadd.f32 %v2241, %v2382
  %v2384 = vpop.f32.mrf.mxu0
  %v2385 = vadd.f32 %v2243, %v2384
  %2386 = vmatmul.bf16.gmra.mxu0 %v2265
  %v2387 = vpop.f32.mrf.mxu0
  %v2388 = vadd.f32 %v2246, %v2387
  %v2389 = vpop.f32.mrf.mxu0
  %v2390 = vadd.f32 %v2248, %v2389
  %2391 = vmatmul.bf16.gmra.mxu0 %v2266
  %v2392 = vpop.f32.mrf.mxu0
  %v2393 = vadd.f32 %v2251, %v2392
  %v2394 = vpop.f32.mrf.mxu0
  %2395 = vdwg.mxu0
  %s2396 = scalar_lea.vmem %s3, 256
  %v2397 = vld [vmem:[%s2396] sm:$0xff]
  %v2398 = vld [vmem:[%s2396 + $0x8] sm:$0xff]
  %v2399 = vld [vmem:[%s2396 + $0x10] sm:$0xff]
  %v2400 = vld [vmem:[%s2396 + $0x18] sm:$0xff]
  %v2401 = vld [vmem:[%s2396 + $0x20] sm:$0xff]
  %v2402 = vld [vmem:[%s2396 + $0x28] sm:$0xff]
  %v2403 = vld [vmem:[%s2396 + $0x30] sm:$0xff]
  %v2404 = vld [vmem:[%s2396 + $0x38] sm:$0xff]
  %v2405 = vld [vmem:[%s2396 + $0x40] sm:$0xff]
  %v2406 = vld [vmem:[%s2396 + $0x48] sm:$0xff]
  %v2407 = vld [vmem:[%s2396 + $0x50] sm:$0xff]
  %v2408 = vld [vmem:[%s2396 + $0x58] sm:$0xff]
  %v2409 = vld [vmem:[%s2396 + $0x60] sm:$0xff]
  %v2410 = vld [vmem:[%s2396 + $0x68] sm:$0xff]
  %v2411 = vld [vmem:[%s2396 + $0x70] sm:$0xff]
  %v2412 = vld [vmem:[%s2396 + $0x78] sm:$0xff]
  %v2414 = vunpack.c.l.b16 %v1317
  %v2415 = vpack.c.b16 %v2261, %v2260
  %v2416 = vpack.c.b16 %v2263, %v2262
  %v2417 = vpack.c.b16 %v2414, %v2414
  %v2437 = vunpack.c.l.b16 %v2397
  %v2438 = vunpack.c.h.b16 %v2397
  %v2439 = vunpack.c.l.b16 %v2398
  %v2440 = vunpack.c.h.b16 %v2398
  %v2441 = vunpack.c.l.b16 %v2399
  %v2442 = vunpack.c.h.b16 %v2399
  %v2443 = vunpack.c.l.b16 %v2400
  %v2444 = vunpack.c.h.b16 %v2400
  %v2445 = vunpack.c.l.b16 %v2401
  %v2446 = vunpack.c.h.b16 %v2401
  %v2447 = vunpack.c.l.b16 %v2402
  %v2448 = vunpack.c.h.b16 %v2402
  %v2449 = vunpack.c.l.b16 %v2403
  %v2450 = vunpack.c.h.b16 %v2403
  %v2451 = vunpack.c.l.b16 %v2404
  %v2452 = vunpack.c.h.b16 %v2404
  %v2453 = vunpack.c.l.b16 %v2405
  %v2454 = vunpack.c.h.b16 %v2405
  %v2455 = vunpack.c.l.b16 %v2406
  %v2456 = vunpack.c.h.b16 %v2406
  %v2457 = vunpack.c.l.b16 %v2407
  %v2458 = vunpack.c.h.b16 %v2407
  %v2459 = vunpack.c.l.b16 %v2408
  %v2460 = vunpack.c.h.b16 %v2408
  %v2461 = vunpack.c.l.b16 %v2409
  %v2462 = vunpack.c.h.b16 %v2409
  %v2463 = vunpack.c.l.b16 %v2410
  %v2464 = vunpack.c.h.b16 %v2410
  %v2465 = vunpack.c.l.b16 %v2411
  %v2466 = vunpack.c.h.b16 %v2411
  %v2467 = vunpack.c.l.b16 %v2412
  %v2468 = vunpack.c.h.b16 %v2412
  %v2469 = vpack.c.b16 %v2439, %v2437
  %v2470 = vpack.c.b16 %v2440, %v2438
  %v2471 = vpack.c.b16 %v2443, %v2441
  %v2472 = vpack.c.b16 %v2444, %v2442
  %v2473 = vpack.c.b16 %v2447, %v2445
  %v2474 = vpack.c.b16 %v2448, %v2446
  %v2475 = vpack.c.b16 %v2451, %v2449
  %v2476 = vpack.c.b16 %v2452, %v2450
  %v2477 = vpack.c.b16 %v2455, %v2453
  %v2478 = vpack.c.b16 %v2456, %v2454
  %v2479 = vpack.c.b16 %v2459, %v2457
  %v2480 = vpack.c.b16 %v2460, %v2458
  %v2481 = vpack.c.b16 %v2463, %v2461
  %v2482 = vpack.c.b16 %v2464, %v2462
  %v2483 = vpack.c.b16 %v2467, %v2465
  %v2484 = vpack.c.b16 %v2468, %v2466
  %2501 = vmatpush.bf16.msra.mxu0 %v2483
  %2502 = vmatpush.bf16.msra.mxu0 %v2481
  %2503 = vmatpush.bf16.msra.mxu0 %v2479
  %2504 = vmatpush.bf16.msra.mxu0 %v2477
  %2505 = vmatpush.bf16.msra.mxu0 %v2475
  %2506 = vmatpush.bf16.msra.mxu0 %v2473
  %2507 = vmatpush.bf16.msra.mxu0 %v2471
  %2508 = vmatpush.bf16.msra.mxu0 %v2469
  %2509 = vmatmul.bf16.gmra.mxu0 %v2415
  %v2510 = vpop.f32.mrf.mxu0
  %v2511 = vadd.f32 0.0, %v2510
  %v2512 = vpop.f32.mrf.mxu0
  %v2513 = vadd.f32 0.0, %v2512
  %2514 = vmatmul.bf16.gmra.mxu0 %v2416
  %v2515 = vpop.f32.mrf.mxu0
  %v2516 = vadd.f32 0.0, %v2515
  %v2517 = vpop.f32.mrf.mxu0
  %v2518 = vadd.f32 0.0, %v2517
  %2519 = vmatmul.bf16.gmra.mxu0 %v2417
  %v2520 = vpop.f32.mrf.mxu0
  %v2521 = vadd.f32 0.0, %v2520
  %v2522 = vpop.f32.mrf.mxu0
  %2523 = vdwg.mxu0
  %2524 = vmatpush.bf16.msra.mxu0 %v2484
  %2525 = vmatpush.bf16.msra.mxu0 %v2482
  %2526 = vmatpush.bf16.msra.mxu0 %v2480
  %2527 = vmatpush.bf16.msra.mxu0 %v2478
  %2528 = vmatpush.bf16.msra.mxu0 %v2476
  %2529 = vmatpush.bf16.msra.mxu0 %v2474
  %2530 = vmatpush.bf16.msra.mxu0 %v2472
  %2531 = vmatpush.bf16.msra.mxu0 %v2470
  %2532 = vmatmul.bf16.gmra.mxu0 %v2415
  %v2533 = vpop.f32.mrf.mxu0
  %v2534 = vadd.f32 0.0, %v2533
  %v2535 = vpop.f32.mrf.mxu0
  %v2536 = vadd.f32 0.0, %v2535
  %2537 = vmatmul.bf16.gmra.mxu0 %v2416
  %v2538 = vpop.f32.mrf.mxu0
  %v2539 = vadd.f32 0.0, %v2538
  %v2540 = vpop.f32.mrf.mxu0
  %v2541 = vadd.f32 0.0, %v2540
  %2542 = vmatmul.bf16.gmra.mxu0 %v2417
  %v2543 = vpop.f32.mrf.mxu0
  %v2544 = vadd.f32 0.0, %v2543
  %v2545 = vpop.f32.mrf.mxu0
  %2546 = vdwg.mxu0
  %v2547 = vadd.f32 %v2360, %v2511
  %v2548 = vadd.f32 %v2383, %v2534
  %v2549 = vadd.f32 %v2362, %v2513
  %v2550 = vadd.f32 %v2385, %v2536
  %v2551 = vadd.f32 %v2365, %v2516
  %v2552 = vadd.f32 %v2388, %v2539
  %v2553 = vadd.f32 %v2367, %v2518
  %v2554 = vadd.f32 %v2390, %v2541
  %v2555 = vadd.f32 %v2370, %v2521
  %v2556 = vadd.f32 %v2393, %v2544
  %s2557 = scalar_lea.vmem %s3, 384
  %v2558 = vld [vmem:[%s2557] sm:$0xff]
  %v2559 = vld [vmem:[%s2557 + $0x8] sm:$0xff]
  %v2560 = vld [vmem:[%s2557 + $0x10] sm:$0xff]
  %v2561 = vld [vmem:[%s2557 + $0x18] sm:$0xff]
  %v2562 = vld [vmem:[%s2557 + $0x20] sm:$0xff]
  %v2563 = vld [vmem:[%s2557 + $0x28] sm:$0xff]
  %v2564 = vld [vmem:[%s2557 + $0x30] sm:$0xff]
  %v2565 = vld [vmem:[%s2557 + $0x38] sm:$0xff]
  %v2566 = vld [vmem:[%s2557 + $0x40] sm:$0xff]
  %v2567 = vld [vmem:[%s2557 + $0x48] sm:$0xff]
  %v2568 = vld [vmem:[%s2557 + $0x50] sm:$0xff]
  %v2569 = vld [vmem:[%s2557 + $0x58] sm:$0xff]
  %v2570 = vld [vmem:[%s2557 + $0x60] sm:$0xff]
  %v2571 = vld [vmem:[%s2557 + $0x68] sm:$0xff]
  %v2572 = vld [vmem:[%s2557 + $0x70] sm:$0xff]
  %v2573 = vld [vmem:[%s2557 + $0x78] sm:$0xff]
  %v2575 = vunpack.c.l.b16 %v2077
  %v2576 = vpack.c.b16 %v2119, %v2118
  %v2577 = vpack.c.b16 %v2121, %v2120
  %v2578 = vpack.c.b16 %v2575, %v2575
  %v2598 = vunpack.c.l.b16 %v2558
  %v2599 = vunpack.c.h.b16 %v2558
  %v2600 = vunpack.c.l.b16 %v2559
  %v2601 = vunpack.c.h.b16 %v2559
  %v2602 = vunpack.c.l.b16 %v2560
  %v2603 = vunpack.c.h.b16 %v2560
  %v2604 = vunpack.c.l.b16 %v2561
  %v2605 = vunpack.c.h.b16 %v2561
  %v2606 = vunpack.c.l.b16 %v2562
  %v2607 = vunpack.c.h.b16 %v2562
  %v2608 = vunpack.c.l.b16 %v2563
  %v2609 = vunpack.c.h.b16 %v2563
  %v2610 = vunpack.c.l.b16 %v2564
  %v2611 = vunpack.c.h.b16 %v2564
  %v2612 = vunpack.c.l.b16 %v2565
  %v2613 = vunpack.c.h.b16 %v2565
  %v2614 = vunpack.c.l.b16 %v2566
  %v2615 = vunpack.c.h.b16 %v2566
  %v2616 = vunpack.c.l.b16 %v2567
  %v2617 = vunpack.c.h.b16 %v2567
  %v2618 = vunpack.c.l.b16 %v2568
  %v2619 = vunpack.c.h.b16 %v2568
  %v2620 = vunpack.c.l.b16 %v2569
  %v2621 = vunpack.c.h.b16 %v2569
  %v2622 = vunpack.c.l.b16 %v2570
  %v2623 = vunpack.c.h.b16 %v2570
  %v2624 = vunpack.c.l.b16 %v2571
  %v2625 = vunpack.c.h.b16 %v2571
  %v2626 = vunpack.c.l.b16 %v2572
  %v2627 = vunpack.c.h.b16 %v2572
  %v2628 = vunpack.c.l.b16 %v2573
  %v2629 = vunpack.c.h.b16 %v2573
  %v2630 = vpack.c.b16 %v2600, %v2598
  %v2631 = vpack.c.b16 %v2601, %v2599
  %v2632 = vpack.c.b16 %v2604, %v2602
  %v2633 = vpack.c.b16 %v2605, %v2603
  %v2634 = vpack.c.b16 %v2608, %v2606
  %v2635 = vpack.c.b16 %v2609, %v2607
  %v2636 = vpack.c.b16 %v2612, %v2610
  %v2637 = vpack.c.b16 %v2613, %v2611
  %v2638 = vpack.c.b16 %v2616, %v2614
  %v2639 = vpack.c.b16 %v2617, %v2615
  %v2640 = vpack.c.b16 %v2620, %v2618
  %v2641 = vpack.c.b16 %v2621, %v2619
  %v2642 = vpack.c.b16 %v2624, %v2622
  %v2643 = vpack.c.b16 %v2625, %v2623
  %v2644 = vpack.c.b16 %v2628, %v2626
  %v2645 = vpack.c.b16 %v2629, %v2627
  %2662 = vmatpush.bf16.msra.mxu0 %v2644
  %2663 = vmatpush.bf16.msra.mxu0 %v2642
  %2664 = vmatpush.bf16.msra.mxu0 %v2640
  %2665 = vmatpush.bf16.msra.mxu0 %v2638
  %2666 = vmatpush.bf16.msra.mxu0 %v2636
  %2667 = vmatpush.bf16.msra.mxu0 %v2634
  %2668 = vmatpush.bf16.msra.mxu0 %v2632
  %2669 = vmatpush.bf16.msra.mxu0 %v2630
  %2670 = vmatmul.bf16.gmra.mxu0 %v2576
  %v2671 = vpop.f32.mrf.mxu0
  %v2672 = vadd.f32 0.0, %v2671
  %v2673 = vpop.f32.mrf.mxu0
  %v2674 = vadd.f32 0.0, %v2673
  %2675 = vmatmul.bf16.gmra.mxu0 %v2577
  %v2676 = vpop.f32.mrf.mxu0
  %v2677 = vadd.f32 0.0, %v2676
  %v2678 = vpop.f32.mrf.mxu0
  %v2679 = vadd.f32 0.0, %v2678
  %2680 = vmatmul.bf16.gmra.mxu0 %v2578
  %v2681 = vpop.f32.mrf.mxu0
  %v2682 = vadd.f32 0.0, %v2681
  %v2683 = vpop.f32.mrf.mxu0
  %2684 = vdwg.mxu0
  %2685 = vmatpush.bf16.msra.mxu0 %v2645
  %2686 = vmatpush.bf16.msra.mxu0 %v2643
  %2687 = vmatpush.bf16.msra.mxu0 %v2641
  %2688 = vmatpush.bf16.msra.mxu0 %v2639
  %2689 = vmatpush.bf16.msra.mxu0 %v2637
  %2690 = vmatpush.bf16.msra.mxu0 %v2635
  %2691 = vmatpush.bf16.msra.mxu0 %v2633
  %2692 = vmatpush.bf16.msra.mxu0 %v2631
  %2693 = vmatmul.bf16.gmra.mxu0 %v2576
  %v2694 = vpop.f32.mrf.mxu0
  %v2695 = vadd.f32 0.0, %v2694
  %v2696 = vpop.f32.mrf.mxu0
  %v2697 = vadd.f32 0.0, %v2696
  %2698 = vmatmul.bf16.gmra.mxu0 %v2577
  %v2699 = vpop.f32.mrf.mxu0
  %v2700 = vadd.f32 0.0, %v2699
  %v2701 = vpop.f32.mrf.mxu0
  %v2702 = vadd.f32 0.0, %v2701
  %2703 = vmatmul.bf16.gmra.mxu0 %v2578
  %v2704 = vpop.f32.mrf.mxu0
  %v2705 = vadd.f32 0.0, %v2704
  %v2706 = vpop.f32.mrf.mxu0
  %2707 = vdwg.mxu0
  %v2708 = vadd.f32 %v2547, %v2672
  %v2709 = vadd.f32 %v2548, %v2695
  %v2710 = vadd.f32 %v2549, %v2674
  %v2711 = vadd.f32 %v2550, %v2697
  %v2712 = vadd.f32 %v2551, %v2677
  %v2713 = vadd.f32 %v2552, %v2700
  %v2714 = vadd.f32 %v2553, %v2679
  %v2715 = vadd.f32 %v2554, %v2702
  %v2716 = vadd.f32 %v2555, %v2682
  %v2717 = vadd.f32 %v2556, %v2705
  %s2718 = scalar_lea.vmem %s3, 512
  %v2719 = vld [vmem:[%s2718] sm:$0xff]
  %v2720 = vld [vmem:[%s2718 + $0x8] sm:$0xff]
  %v2721 = vld [vmem:[%s2718 + $0x10] sm:$0xff]
  %v2722 = vld [vmem:[%s2718 + $0x18] sm:$0xff]
  %v2723 = vld [vmem:[%s2718 + $0x20] sm:$0xff]
  %v2724 = vld [vmem:[%s2718 + $0x28] sm:$0xff]
  %v2725 = vld [vmem:[%s2718 + $0x30] sm:$0xff]
  %v2726 = vld [vmem:[%s2718 + $0x38] sm:$0xff]
  %v2727 = vld [vmem:[%s2718 + $0x40] sm:$0xff]
  %v2728 = vld [vmem:[%s2718 + $0x48] sm:$0xff]
  %v2729 = vld [vmem:[%s2718 + $0x50] sm:$0xff]
  %v2730 = vld [vmem:[%s2718 + $0x58] sm:$0xff]
  %v2731 = vld [vmem:[%s2718 + $0x60] sm:$0xff]
  %v2732 = vld [vmem:[%s2718 + $0x68] sm:$0xff]
  %v2733 = vld [vmem:[%s2718 + $0x70] sm:$0xff]
  %v2734 = vld [vmem:[%s2718 + $0x78] sm:$0xff]
  %v2736 = vunpack.c.l.b16 %v1318
  %v2737 = vpack.c.b16 %v2414, %v2263
  %v2738 = vpack.c.b16 %v2736, %v2736
  %v2757 = vunpack.c.l.b16 %v2719
  %v2758 = vunpack.c.h.b16 %v2719
  %v2759 = vunpack.c.l.b16 %v2720
  %v2760 = vunpack.c.h.b16 %v2720
  %v2761 = vunpack.c.l.b16 %v2721
  %v2762 = vunpack.c.h.b16 %v2721
  %v2763 = vunpack.c.l.b16 %v2722
  %v2764 = vunpack.c.h.b16 %v2722
  %v2765 = vunpack.c.l.b16 %v2723
  %v2766 = vunpack.c.h.b16 %v2723
  %v2767 = vunpack.c.l.b16 %v2724
  %v2768 = vunpack.c.h.b16 %v2724
  %v2769 = vunpack.c.l.b16 %v2725
  %v2770 = vunpack.c.h.b16 %v2725
  %v2771 = vunpack.c.l.b16 %v2726
  %v2772 = vunpack.c.h.b16 %v2726
  %v2773 = vunpack.c.l.b16 %v2727
  %v2774 = vunpack.c.h.b16 %v2727
  %v2775 = vunpack.c.l.b16 %v2728
  %v2776 = vunpack.c.h.b16 %v2728
  %v2777 = vunpack.c.l.b16 %v2729
  %v2778 = vunpack.c.h.b16 %v2729
  %v2779 = vunpack.c.l.b16 %v2730
  %v2780 = vunpack.c.h.b16 %v2730
  %v2781 = vunpack.c.l.b16 %v2731
  %v2782 = vunpack.c.h.b16 %v2731
  %v2783 = vunpack.c.l.b16 %v2732
  %v2784 = vunpack.c.h.b16 %v2732
  %v2785 = vunpack.c.l.b16 %v2733
  %v2786 = vunpack.c.h.b16 %v2733
  %v2787 = vunpack.c.l.b16 %v2734
  %v2788 = vunpack.c.h.b16 %v2734
  %v2789 = vpack.c.b16 %v2759, %v2757
  %v2790 = vpack.c.b16 %v2760, %v2758
  %v2791 = vpack.c.b16 %v2763, %v2761
  %v2792 = vpack.c.b16 %v2764, %v2762
  %v2793 = vpack.c.b16 %v2767, %v2765
  %v2794 = vpack.c.b16 %v2768, %v2766
  %v2795 = vpack.c.b16 %v2771, %v2769
  %v2796 = vpack.c.b16 %v2772, %v2770
  %v2797 = vpack.c.b16 %v2775, %v2773
  %v2798 = vpack.c.b16 %v2776, %v2774
  %v2799 = vpack.c.b16 %v2779, %v2777
  %v2800 = vpack.c.b16 %v2780, %v2778
  %v2801 = vpack.c.b16 %v2783, %v2781
  %v2802 = vpack.c.b16 %v2784, %v2782
  %v2803 = vpack.c.b16 %v2787, %v2785
  %v2804 = vpack.c.b16 %v2788, %v2786
  %2821 = vmatpush.bf16.msra.mxu0 %v2803
  %2822 = vmatpush.bf16.msra.mxu0 %v2801
  %2823 = vmatpush.bf16.msra.mxu0 %v2799
  %2824 = vmatpush.bf16.msra.mxu0 %v2797
  %2825 = vmatpush.bf16.msra.mxu0 %v2795
  %2826 = vmatpush.bf16.msra.mxu0 %v2793
  %2827 = vmatpush.bf16.msra.mxu0 %v2791
  %2828 = vmatpush.bf16.msra.mxu0 %v2789
  %2829 = vmatmul.bf16.gmra.mxu0 %v2265
  %v2830 = vpop.f32.mrf.mxu0
  %v2831 = vadd.f32 0.0, %v2830
  %v2832 = vpop.f32.mrf.mxu0
  %v2833 = vadd.f32 0.0, %v2832
  %2834 = vmatmul.bf16.gmra.mxu0 %v2737
  %v2835 = vpop.f32.mrf.mxu0
  %v2836 = vadd.f32 0.0, %v2835
  %v2837 = vpop.f32.mrf.mxu0
  %v2838 = vadd.f32 0.0, %v2837
  %2839 = vmatmul.bf16.gmra.mxu0 %v2738
  %v2840 = vpop.f32.mrf.mxu0
  %v2841 = vadd.f32 0.0, %v2840
  %v2842 = vpop.f32.mrf.mxu0
  %2843 = vdwg.mxu0
  %2844 = vmatpush.bf16.msra.mxu0 %v2804
  %2845 = vmatpush.bf16.msra.mxu0 %v2802
  %2846 = vmatpush.bf16.msra.mxu0 %v2800
  %2847 = vmatpush.bf16.msra.mxu0 %v2798
  %2848 = vmatpush.bf16.msra.mxu0 %v2796
  %2849 = vmatpush.bf16.msra.mxu0 %v2794
  %2850 = vmatpush.bf16.msra.mxu0 %v2792
  %2851 = vmatpush.bf16.msra.mxu0 %v2790
  %2852 = vmatmul.bf16.gmra.mxu0 %v2265
  %v2853 = vpop.f32.mrf.mxu0
  %v2854 = vadd.f32 0.0, %v2853
  %v2855 = vpop.f32.mrf.mxu0
  %v2856 = vadd.f32 0.0, %v2855
  %2857 = vmatmul.bf16.gmra.mxu0 %v2737
  %v2858 = vpop.f32.mrf.mxu0
  %v2859 = vadd.f32 0.0, %v2858
  %v2860 = vpop.f32.mrf.mxu0
  %v2861 = vadd.f32 0.0, %v2860
  %2862 = vmatmul.bf16.gmra.mxu0 %v2738
  %v2863 = vpop.f32.mrf.mxu0
  %v2864 = vadd.f32 0.0, %v2863
  %v2865 = vpop.f32.mrf.mxu0
  %2866 = vdwg.mxu0
  %v2867 = vadd.f32 %v2708, %v2831
  %v2868 = vadd.f32 %v2709, %v2854
  %v2869 = vadd.f32 %v2710, %v2833
  %v2870 = vadd.f32 %v2711, %v2856
  %v2871 = vadd.f32 %v2712, %v2836
  %v2872 = vadd.f32 %v2713, %v2859
  %v2873 = vadd.f32 %v2714, %v2838
  %v2874 = vadd.f32 %v2715, %v2861
  %v2875 = vadd.f32 %v2716, %v2841
  %v2876 = vadd.f32 %v2717, %v2864
  %v2877 = vmax.f32 %v2867, %v2868
  %v2878 = vmax.f32 %v2869, %v2870
  %v2879 = vmax.f32 %v2871, %v2872
  %v2880 = vmax.f32 %v2873, %v2874
  %v2881 = vmax.f32 %v2875, %v2876
  %2882 = vmatpush.bf16.msra.mxu0 %v2190
  %2883 = vmatpush.bf16.msra.mxu0 %v2188
  %2884 = vmatpush.bf16.msra.mxu0 %v2186
  %2885 = vmatpush.bf16.msra.mxu0 %v2184
  %2886 = vmatpush.bf16.msra.mxu0 %v2182
  %2887 = vmatpush.bf16.msra.mxu0 %v2180
  %2888 = vmatpush.bf16.msra.mxu0 %v2178
  %2889 = vmatpush.bf16.msra.mxu0 %v2176
  %2890 = vmatmul.bf16.gmra.mxu0 %v2415
  %v2891 = vpop.f32.mrf.mxu0
  %v2892 = vadd.f32 0.0, %v2891
  %v2893 = vpop.f32.mrf.mxu0
  %v2894 = vadd.f32 0.0, %v2893
  %2895 = vmatmul.bf16.gmra.mxu0 %v2416
  %v2896 = vpop.f32.mrf.mxu0
  %v2897 = vadd.f32 0.0, %v2896
  %v2898 = vpop.f32.mrf.mxu0
  %v2899 = vadd.f32 0.0, %v2898
  %2900 = vmatmul.bf16.gmra.mxu0 %v2417
  %v2901 = vpop.f32.mrf.mxu0
  %v2902 = vadd.f32 0.0, %v2901
  %v2903 = vpop.f32.mrf.mxu0
  %2904 = vdwg.mxu0
  %2905 = vmatpush.bf16.msra.mxu0 %v2191
  %2906 = vmatpush.bf16.msra.mxu0 %v2189
  %2907 = vmatpush.bf16.msra.mxu0 %v2187
  %2908 = vmatpush.bf16.msra.mxu0 %v2185
  %2909 = vmatpush.bf16.msra.mxu0 %v2183
  %2910 = vmatpush.bf16.msra.mxu0 %v2181
  %2911 = vmatpush.bf16.msra.mxu0 %v2179
  %2912 = vmatpush.bf16.msra.mxu0 %v2177
  %2913 = vmatmul.bf16.gmra.mxu0 %v2415
  %v2914 = vpop.f32.mrf.mxu0
  %v2915 = vadd.f32 0.0, %v2914
  %v2916 = vpop.f32.mrf.mxu0
  %v2917 = vadd.f32 0.0, %v2916
  %2918 = vmatmul.bf16.gmra.mxu0 %v2416
  %v2919 = vpop.f32.mrf.mxu0
  %v2920 = vadd.f32 0.0, %v2919
  %v2921 = vpop.f32.mrf.mxu0
  %v2922 = vadd.f32 0.0, %v2921
  %2923 = vmatmul.bf16.gmra.mxu0 %v2417
  %v2924 = vpop.f32.mrf.mxu0
  %v2925 = vadd.f32 0.0, %v2924
  %v2926 = vpop.f32.mrf.mxu0
  %2927 = vdwg.mxu0
  %2928 = vmatpush.bf16.msra.mxu0 %v2332
  %2929 = vmatpush.bf16.msra.mxu0 %v2330
  %2930 = vmatpush.bf16.msra.mxu0 %v2328
  %2931 = vmatpush.bf16.msra.mxu0 %v2326
  %2932 = vmatpush.bf16.msra.mxu0 %v2324
  %2933 = vmatpush.bf16.msra.mxu0 %v2322
  %2934 = vmatpush.bf16.msra.mxu0 %v2320
  %2935 = vmatpush.bf16.msra.mxu0 %v2318
  %2936 = vmatmul.bf16.gmra.mxu0 %v2122
  %v2937 = vpop.f32.mrf.mxu0
  %v2938 = vadd.f32 %v2892, %v2937
  %v2939 = vpop.f32.mrf.mxu0
  %v2940 = vadd.f32 %v2894, %v2939
  %2941 = vmatmul.bf16.gmra.mxu0 %v2123
  %v2942 = vpop.f32.mrf.mxu0
  %v2943 = vadd.f32 %v2897, %v2942
  %v2944 = vpop.f32.mrf.mxu0
  %v2945 = vadd.f32 %v2899, %v2944
  %2946 = vmatmul.bf16.gmra.mxu0 %v2124
  %v2947 = vpop.f32.mrf.mxu0
  %v2948 = vadd.f32 %v2902, %v2947
  %v2949 = vpop.f32.mrf.mxu0
  %2950 = vdwg.mxu0
  %2951 = vmatpush.bf16.msra.mxu0 %v2333
  %2952 = vmatpush.bf16.msra.mxu0 %v2331
  %2953 = vmatpush.bf16.msra.mxu0 %v2329
  %2954 = vmatpush.bf16.msra.mxu0 %v2327
  %2955 = vmatpush.bf16.msra.mxu0 %v2325
  %2956 = vmatpush.bf16.msra.mxu0 %v2323
  %2957 = vmatpush.bf16.msra.mxu0 %v2321
  %2958 = vmatpush.bf16.msra.mxu0 %v2319
  %2959 = vmatmul.bf16.gmra.mxu0 %v2122
  %v2960 = vpop.f32.mrf.mxu0
  %v2961 = vadd.f32 %v2915, %v2960
  %v2962 = vpop.f32.mrf.mxu0
  %v2963 = vadd.f32 %v2917, %v2962
  %2964 = vmatmul.bf16.gmra.mxu0 %v2123
  %v2965 = vpop.f32.mrf.mxu0
  %v2966 = vadd.f32 %v2920, %v2965
  %v2967 = vpop.f32.mrf.mxu0
  %v2968 = vadd.f32 %v2922, %v2967
  %2969 = vmatmul.bf16.gmra.mxu0 %v2124
  %v2970 = vpop.f32.mrf.mxu0
  %v2971 = vadd.f32 %v2925, %v2970
  %v2972 = vpop.f32.mrf.mxu0
  %2973 = vdwg.mxu0
  %2974 = vmatpush.bf16.msra.mxu0 %v2483
  %2975 = vmatpush.bf16.msra.mxu0 %v2481
  %2976 = vmatpush.bf16.msra.mxu0 %v2479
  %2977 = vmatpush.bf16.msra.mxu0 %v2477
  %2978 = vmatpush.bf16.msra.mxu0 %v2475
  %2979 = vmatpush.bf16.msra.mxu0 %v2473
  %2980 = vmatpush.bf16.msra.mxu0 %v2471
  %2981 = vmatpush.bf16.msra.mxu0 %v2469
  %2982 = vmatmul.bf16.gmra.mxu0 %v2576
  %v2983 = vpop.f32.mrf.mxu0
  %v2984 = vadd.f32 0.0, %v2983
  %v2985 = vpop.f32.mrf.mxu0
  %v2986 = vadd.f32 0.0, %v2985
  %2987 = vmatmul.bf16.gmra.mxu0 %v2577
  %v2988 = vpop.f32.mrf.mxu0
  %v2989 = vadd.f32 0.0, %v2988
  %v2990 = vpop.f32.mrf.mxu0
  %v2991 = vadd.f32 0.0, %v2990
  %2992 = vmatmul.bf16.gmra.mxu0 %v2578
  %v2993 = vpop.f32.mrf.mxu0
  %v2994 = vadd.f32 0.0, %v2993
  %v2995 = vpop.f32.mrf.mxu0
  %2996 = vdwg.mxu0
  %2997 = vmatpush.bf16.msra.mxu0 %v2484
  %2998 = vmatpush.bf16.msra.mxu0 %v2482
  %2999 = vmatpush.bf16.msra.mxu0 %v2480
  %3000 = vmatpush.bf16.msra.mxu0 %v2478
  %3001 = vmatpush.bf16.msra.mxu0 %v2476
  %3002 = vmatpush.bf16.msra.mxu0 %v2474
  %3003 = vmatpush.bf16.msra.mxu0 %v2472
  %3004 = vmatpush.bf16.msra.mxu0 %v2470
  %3005 = vmatmul.bf16.gmra.mxu0 %v2576
  %v3006 = vpop.f32.mrf.mxu0
  %v3007 = vadd.f32 0.0, %v3006
  %v3008 = vpop.f32.mrf.mxu0
  %v3009 = vadd.f32 0.0, %v3008
  %3010 = vmatmul.bf16.gmra.mxu0 %v2577
  %v3011 = vpop.f32.mrf.mxu0
  %v3012 = vadd.f32 0.0, %v3011
  %v3013 = vpop.f32.mrf.mxu0
  %v3014 = vadd.f32 0.0, %v3013
  %3015 = vmatmul.bf16.gmra.mxu0 %v2578
  %v3016 = vpop.f32.mrf.mxu0
  %v3017 = vadd.f32 0.0, %v3016
  %v3018 = vpop.f32.mrf.mxu0
  %3019 = vdwg.mxu0
  %v3020 = vadd.f32 %v2938, %v2984
  %v3021 = vadd.f32 %v2961, %v3007
  %v3022 = vadd.f32 %v2940, %v2986
  %v3023 = vadd.f32 %v2963, %v3009
  %v3024 = vadd.f32 %v2943, %v2989
  %v3025 = vadd.f32 %v2966, %v3012
  %v3026 = vadd.f32 %v2945, %v2991
  %v3027 = vadd.f32 %v2968, %v3014
  %v3028 = vadd.f32 %v2948, %v2994
  %v3029 = vadd.f32 %v2971, %v3017
  %3030 = vmatpush.bf16.msra.mxu0 %v2644
  %3031 = vmatpush.bf16.msra.mxu0 %v2642
  %3032 = vmatpush.bf16.msra.mxu0 %v2640
  %3033 = vmatpush.bf16.msra.mxu0 %v2638
  %3034 = vmatpush.bf16.msra.mxu0 %v2636
  %3035 = vmatpush.bf16.msra.mxu0 %v2634
  %3036 = vmatpush.bf16.msra.mxu0 %v2632
  %3037 = vmatpush.bf16.msra.mxu0 %v2630
  %3038 = vmatmul.bf16.gmra.mxu0 %v2265
  %v3039 = vpop.f32.mrf.mxu0
  %v3040 = vadd.f32 0.0, %v3039
  %v3041 = vpop.f32.mrf.mxu0
  %v3042 = vadd.f32 0.0, %v3041
  %3043 = vmatmul.bf16.gmra.mxu0 %v2737
  %v3044 = vpop.f32.mrf.mxu0
  %v3045 = vadd.f32 0.0, %v3044
  %v3046 = vpop.f32.mrf.mxu0
  %v3047 = vadd.f32 0.0, %v3046
  %3048 = vmatmul.bf16.gmra.mxu0 %v2738
  %v3049 = vpop.f32.mrf.mxu0
  %v3050 = vadd.f32 0.0, %v3049
  %v3051 = vpop.f32.mrf.mxu0
  %3052 = vdwg.mxu0
  %3053 = vmatpush.bf16.msra.mxu0 %v2645
  %3054 = vmatpush.bf16.msra.mxu0 %v2643
  %3055 = vmatpush.bf16.msra.mxu0 %v2641
  %3056 = vmatpush.bf16.msra.mxu0 %v2639
  %3057 = vmatpush.bf16.msra.mxu0 %v2637
  %3058 = vmatpush.bf16.msra.mxu0 %v2635
  %3059 = vmatpush.bf16.msra.mxu0 %v2633
  %3060 = vmatpush.bf16.msra.mxu0 %v2631
  %3061 = vmatmul.bf16.gmra.mxu0 %v2265
  %v3062 = vpop.f32.mrf.mxu0
  %v3063 = vadd.f32 0.0, %v3062
  %v3064 = vpop.f32.mrf.mxu0
  %v3065 = vadd.f32 0.0, %v3064
  %3066 = vmatmul.bf16.gmra.mxu0 %v2737
  %v3067 = vpop.f32.mrf.mxu0
  %v3068 = vadd.f32 0.0, %v3067
  %v3069 = vpop.f32.mrf.mxu0
  %v3070 = vadd.f32 0.0, %v3069
  %3071 = vmatmul.bf16.gmra.mxu0 %v2738
  %v3072 = vpop.f32.mrf.mxu0
  %v3073 = vadd.f32 0.0, %v3072
  %v3074 = vpop.f32.mrf.mxu0
  %3075 = vdwg.mxu0
  %v3076 = vadd.f32 %v3020, %v3040
  %v3077 = vadd.f32 %v3021, %v3063
  %v3078 = vadd.f32 %v3022, %v3042
  %v3079 = vadd.f32 %v3023, %v3065
  %v3080 = vadd.f32 %v3024, %v3045
  %v3081 = vadd.f32 %v3025, %v3068
  %v3082 = vadd.f32 %v3026, %v3047
  %v3083 = vadd.f32 %v3027, %v3070
  %v3084 = vadd.f32 %v3028, %v3050
  %v3085 = vadd.f32 %v3029, %v3073
  %v3087 = vunpack.c.l.b16 %v2078
  %v3088 = vpack.c.b16 %v2575, %v2121
  %v3089 = vpack.c.b16 %v3087, %v3087
  %3092 = vmatpush.bf16.msra.mxu0 %v2803
  %3093 = vmatpush.bf16.msra.mxu0 %v2801
  %3094 = vmatpush.bf16.msra.mxu0 %v2799
  %3095 = vmatpush.bf16.msra.mxu0 %v2797
  %3096 = vmatpush.bf16.msra.mxu0 %v2795
  %3097 = vmatpush.bf16.msra.mxu0 %v2793
  %3098 = vmatpush.bf16.msra.mxu0 %v2791
  %3099 = vmatpush.bf16.msra.mxu0 %v2789
  %3100 = vmatmul.bf16.gmra.mxu0 %v2123
  %v3101 = vpop.f32.mrf.mxu0
  %v3102 = vadd.f32 0.0, %v3101
  %v3103 = vpop.f32.mrf.mxu0
  %v3104 = vadd.f32 0.0, %v3103
  %3105 = vmatmul.bf16.gmra.mxu0 %v3088
  %v3106 = vpop.f32.mrf.mxu0
  %v3107 = vadd.f32 0.0, %v3106
  %v3108 = vpop.f32.mrf.mxu0
  %v3109 = vadd.f32 0.0, %v3108
  %3110 = vmatmul.bf16.gmra.mxu0 %v3089
  %v3111 = vpop.f32.mrf.mxu0
  %v3112 = vadd.f32 0.0, %v3111
  %v3113 = vpop.f32.mrf.mxu0
  %3114 = vdwg.mxu0
  %3115 = vmatpush.bf16.msra.mxu0 %v2804
  %3116 = vmatpush.bf16.msra.mxu0 %v2802
  %3117 = vmatpush.bf16.msra.mxu0 %v2800
  %3118 = vmatpush.bf16.msra.mxu0 %v2798
  %3119 = vmatpush.bf16.msra.mxu0 %v2796
  %3120 = vmatpush.bf16.msra.mxu0 %v2794
  %3121 = vmatpush.bf16.msra.mxu0 %v2792
  %3122 = vmatpush.bf16.msra.mxu0 %v2790
  %3123 = vmatmul.bf16.gmra.mxu0 %v2123
  %v3124 = vpop.f32.mrf.mxu0
  %v3125 = vadd.f32 0.0, %v3124
  %v3126 = vpop.f32.mrf.mxu0
  %v3127 = vadd.f32 0.0, %v3126
  %3128 = vmatmul.bf16.gmra.mxu0 %v3088
  %v3129 = vpop.f32.mrf.mxu0
  %v3130 = vadd.f32 0.0, %v3129
  %v3131 = vpop.f32.mrf.mxu0
  %v3132 = vadd.f32 0.0, %v3131
  %3133 = vmatmul.bf16.gmra.mxu0 %v3089
  %v3134 = vpop.f32.mrf.mxu0
  %v3135 = vadd.f32 0.0, %v3134
  %v3136 = vpop.f32.mrf.mxu0
  %3137 = vdwg.mxu0
  %v3138 = vadd.f32 %v3076, %v3102
  %v3139 = vadd.f32 %v3077, %v3125
  %v3140 = vadd.f32 %v3078, %v3104
  %v3141 = vadd.f32 %v3079, %v3127
  %v3142 = vadd.f32 %v3080, %v3107
  %v3143 = vadd.f32 %v3081, %v3130
  %v3144 = vadd.f32 %v3082, %v3109
  %v3145 = vadd.f32 %v3083, %v3132
  %v3146 = vadd.f32 %v3084, %v3112
  %v3147 = vadd.f32 %v3085, %v3135
  %v3148 = vmax.f32 %v3138, %v3139
  %v3149 = vmax.f32 %v3140, %v3141
  %v3150 = vmax.f32 %v3142, %v3143
  %v3151 = vmax.f32 %v3144, %v3145
  %v3152 = vmax.f32 %v3146, %v3147
  %v3153 = vmax.f32 %v2877, %v3148
  %v3154 = vmax.f32 %v2878, %v3149
  %v3155 = vmax.f32 %v2879, %v3150
  %v3156 = vmax.f32 %v2880, %v3151
  %v3157 = vmax.f32 %v2881, %v3152
  %v3158 = vld [vmem:[%s4] sm:$0x1]
  %v3160 = vperm.slane %v3158, 0
  %v3162 = vadd.f32 %v3153, %v3160
  %v3163 = vadd.f32 %v3154, %v3160
  %v3164 = vadd.f32 %v3155, %v3160
  %v3165 = vadd.f32 %v3156, %v3160
  %v3166 = vadd.f32 %v3157, %v3160
  %v3167 = vmax.f32 %v3162, 0.0
  %v3168 = vmax.f32 %v3163, 0.0
  %v3169 = vmax.f32 %v3164, 0.0
  %v3170 = vmax.f32 %v3165, 0.0
  %v3171 = vmax.f32 %v3166, 0.0
  %v3172 = vpack.c.bf16 %v3167, %v3167
  %v3173 = vpack.c.bf16 %v3168, %v3168
  %v3174 = vpack.c.bf16 %v3169, %v3169
  %v3175 = vpack.c.bf16 %v3170, %v3170
  %v3176 = vpack.c.bf16 %v3171, %v3171
  %v3177 = vld [vmem:[%s5] sm:$0xf]
  %v3178 = vld [vmem:[%s5 + $0x4] sm:$0xf]
  %v3179 = vld [vmem:[%s5 + $0x8] sm:$0xf]
  %v3180 = vld [vmem:[%s5 + $0xc] sm:$0xf]
  %v3181 = vld [vmem:[%s5 + $0x10] sm:$0xf]
  %v3182 = vld [vmem:[%s5 + $0x14] sm:$0xf]
  %v3183 = vld [vmem:[%s5 + $0x18] sm:$0xf]
  %v3184 = vld [vmem:[%s5 + $0x1c] sm:$0xf]
  %v3185 = vld [vmem:[%s5 + $0x20] sm:$0xf]
  %v3186 = vld [vmem:[%s5 + $0x24] sm:$0xf]
  %v3187 = vld [vmem:[%s5 + $0x28] sm:$0xf]
  %v3188 = vld [vmem:[%s5 + $0x2c] sm:$0xf]
  %v3189 = vld [vmem:[%s5 + $0x30] sm:$0xf]
  %v3190 = vld [vmem:[%s5 + $0x34] sm:$0xf]
  %v3191 = vld [vmem:[%s5 + $0x38] sm:$0xf]
  %v3192 = vld [vmem:[%s5 + $0x3c] sm:$0xf]
  %s3193 = scalar_lea.vmem %s5, 64
  %v3194 = vld [vmem:[%s3193] sm:$0xf]
  %v3195 = vld [vmem:[%s3193 + $0x4] sm:$0xf]
  %v3196 = vld [vmem:[%s3193 + $0x8] sm:$0xf]
  %v3197 = vld [vmem:[%s3193 + $0xc] sm:$0xf]
  %v3198 = vld [vmem:[%s3193 + $0x10] sm:$0xf]
  %v3199 = vld [vmem:[%s3193 + $0x14] sm:$0xf]
  %v3200 = vld [vmem:[%s3193 + $0x18] sm:$0xf]
  %v3201 = vld [vmem:[%s3193 + $0x1c] sm:$0xf]
  %v3202 = vld [vmem:[%s3193 + $0x20] sm:$0xf]
  %v3203 = vld [vmem:[%s3193 + $0x24] sm:$0xf]
  %v3204 = vld [vmem:[%s3193 + $0x28] sm:$0xf]
  %v3205 = vld [vmem:[%s3193 + $0x2c] sm:$0xf]
  %v3206 = vld [vmem:[%s3193 + $0x30] sm:$0xf]
  %v3207 = vld [vmem:[%s3193 + $0x34] sm:$0xf]
  %v3208 = vld [vmem:[%s3193 + $0x38] sm:$0xf]
  %v3209 = vld [vmem:[%s3193 + $0x3c] sm:$0xf]
  %v3226 = vunpack.c.l.b16 %v3194
  %v3227 = vunpack.c.l.b16 %v3195
  %v3228 = vunpack.c.l.b16 %v3196
  %v3229 = vunpack.c.l.b16 %v3197
  %v3230 = vunpack.c.l.b16 %v3198
  %v3231 = vunpack.c.l.b16 %v3199
  %v3232 = vunpack.c.l.b16 %v3200
  %v3233 = vunpack.c.l.b16 %v3201
  %v3234 = vunpack.c.l.b16 %v3202
  %v3235 = vunpack.c.l.b16 %v3203
  %v3236 = vunpack.c.l.b16 %v3204
  %v3237 = vunpack.c.l.b16 %v3205
  %v3238 = vunpack.c.l.b16 %v3206
  %v3239 = vunpack.c.l.b16 %v3207
  %v3240 = vunpack.c.l.b16 %v3208
  %v3241 = vunpack.c.l.b16 %v3209
  %v3242 = vpack.c.b16 %v3227, %v3226
  %v3243 = vpack.c.b16 %v3229, %v3228
  %v3244 = vpack.c.b16 %v3231, %v3230
  %v3245 = vpack.c.b16 %v3233, %v3232
  %v3246 = vpack.c.b16 %v3235, %v3234
  %v3247 = vpack.c.b16 %v3237, %v3236
  %v3248 = vpack.c.b16 %v3239, %v3238
  %v3249 = vpack.c.b16 %v3241, %v3240
  %3258 = vmatpush.bf16.msra.mxu0 %v3249
  %3259 = vmatpush.bf16.msra.mxu0 %v3248
  %3260 = vmatpush.bf16.msra.mxu0 %v3247
  %3261 = vmatpush.bf16.msra.mxu0 %v3246
  %3262 = vmatpush.bf16.msra.mxu0 %v3245
  %3263 = vmatpush.bf16.msra.mxu0 %v3244
  %3264 = vmatpush.bf16.msra.mxu0 %v3243
  %3265 = vmatpush.bf16.msra.mxu0 %v3242
  %3266 = vmatmul.bf16.gmra.mxu0 %v3173
  %v3267 = vpop.f32.mrf.mxu0
  %v3268 = vadd.f32 0.0, %v3267
  %v3269 = vpop.f32.mrf.mxu0
  %3270 = vdwg.mxu0
  %v3287 = vunpack.c.l.b16 %v3177
  %v3288 = vunpack.c.l.b16 %v3178
  %v3289 = vunpack.c.l.b16 %v3179
  %v3290 = vunpack.c.l.b16 %v3180
  %v3291 = vunpack.c.l.b16 %v3181
  %v3292 = vunpack.c.l.b16 %v3182
  %v3293 = vunpack.c.l.b16 %v3183
  %v3294 = vunpack.c.l.b16 %v3184
  %v3295 = vunpack.c.l.b16 %v3185
  %v3296 = vunpack.c.l.b16 %v3186
  %v3297 = vunpack.c.l.b16 %v3187
  %v3298 = vunpack.c.l.b16 %v3188
  %v3299 = vunpack.c.l.b16 %v3189
  %v3300 = vunpack.c.l.b16 %v3190
  %v3301 = vunpack.c.l.b16 %v3191
  %v3302 = vunpack.c.l.b16 %v3192
  %v3303 = vpack.c.b16 %v3288, %v3287
  %v3304 = vpack.c.b16 %v3290, %v3289
  %v3305 = vpack.c.b16 %v3292, %v3291
  %v3306 = vpack.c.b16 %v3294, %v3293
  %v3307 = vpack.c.b16 %v3296, %v3295
  %v3308 = vpack.c.b16 %v3298, %v3297
  %v3309 = vpack.c.b16 %v3300, %v3299
  %v3310 = vpack.c.b16 %v3302, %v3301
  %3319 = vmatpush.bf16.msra.mxu0 %v3310
  %3320 = vmatpush.bf16.msra.mxu0 %v3309
  %3321 = vmatpush.bf16.msra.mxu0 %v3308
  %3322 = vmatpush.bf16.msra.mxu0 %v3307
  %3323 = vmatpush.bf16.msra.mxu0 %v3306
  %3324 = vmatpush.bf16.msra.mxu0 %v3305
  %3325 = vmatpush.bf16.msra.mxu0 %v3304
  %3326 = vmatpush.bf16.msra.mxu0 %v3303
  %3327 = vmatmul.bf16.gmra.mxu0 %v3172
  %v3328 = vpop.f32.mrf.mxu0
  %v3329 = vadd.f32 %v3268, %v3328
  %v3330 = vpop.f32.mrf.mxu0
  %3331 = vdwg.mxu0
  %s3332 = scalar_lea.vmem %s5, 128
  %v3333 = vld [vmem:[%s3332] sm:$0xf]
  %v3334 = vld [vmem:[%s3332 + $0x4] sm:$0xf]
  %v3335 = vld [vmem:[%s3332 + $0x8] sm:$0xf]
  %v3336 = vld [vmem:[%s3332 + $0xc] sm:$0xf]
  %v3337 = vld [vmem:[%s3332 + $0x10] sm:$0xf]
  %v3338 = vld [vmem:[%s3332 + $0x14] sm:$0xf]
  %v3339 = vld [vmem:[%s3332 + $0x18] sm:$0xf]
  %v3340 = vld [vmem:[%s3332 + $0x1c] sm:$0xf]
  %v3341 = vld [vmem:[%s3332 + $0x20] sm:$0xf]
  %v3342 = vld [vmem:[%s3332 + $0x24] sm:$0xf]
  %v3343 = vld [vmem:[%s3332 + $0x28] sm:$0xf]
  %v3344 = vld [vmem:[%s3332 + $0x2c] sm:$0xf]
  %v3345 = vld [vmem:[%s3332 + $0x30] sm:$0xf]
  %v3346 = vld [vmem:[%s3332 + $0x34] sm:$0xf]
  %v3347 = vld [vmem:[%s3332 + $0x38] sm:$0xf]
  %v3348 = vld [vmem:[%s3332 + $0x3c] sm:$0xf]
  %v3365 = vunpack.c.l.b16 %v3333
  %v3366 = vunpack.c.l.b16 %v3334
  %v3367 = vunpack.c.l.b16 %v3335
  %v3368 = vunpack.c.l.b16 %v3336
  %v3369 = vunpack.c.l.b16 %v3337
  %v3370 = vunpack.c.l.b16 %v3338
  %v3371 = vunpack.c.l.b16 %v3339
  %v3372 = vunpack.c.l.b16 %v3340
  %v3373 = vunpack.c.l.b16 %v3341
  %v3374 = vunpack.c.l.b16 %v3342
  %v3375 = vunpack.c.l.b16 %v3343
  %v3376 = vunpack.c.l.b16 %v3344
  %v3377 = vunpack.c.l.b16 %v3345
  %v3378 = vunpack.c.l.b16 %v3346
  %v3379 = vunpack.c.l.b16 %v3347
  %v3380 = vunpack.c.l.b16 %v3348
  %v3381 = vpack.c.b16 %v3366, %v3365
  %v3382 = vpack.c.b16 %v3368, %v3367
  %v3383 = vpack.c.b16 %v3370, %v3369
  %v3384 = vpack.c.b16 %v3372, %v3371
  %v3385 = vpack.c.b16 %v3374, %v3373
  %v3386 = vpack.c.b16 %v3376, %v3375
  %v3387 = vpack.c.b16 %v3378, %v3377
  %v3388 = vpack.c.b16 %v3380, %v3379
  %3397 = vmatpush.bf16.msra.mxu0 %v3388
  %3398 = vmatpush.bf16.msra.mxu0 %v3387
  %3399 = vmatpush.bf16.msra.mxu0 %v3386
  %3400 = vmatpush.bf16.msra.mxu0 %v3385
  %3401 = vmatpush.bf16.msra.mxu0 %v3384
  %3402 = vmatpush.bf16.msra.mxu0 %v3383
  %3403 = vmatpush.bf16.msra.mxu0 %v3382
  %3404 = vmatpush.bf16.msra.mxu0 %v3381
  %3405 = vmatmul.bf16.gmra.mxu0 %v3174
  %v3406 = vpop.f32.mrf.mxu0
  %v3407 = vadd.f32 0.0, %v3406
  %v3408 = vpop.f32.mrf.mxu0
  %3409 = vdwg.mxu0
  %v3410 = vadd.f32 %v3329, %v3407
  %s3411 = scalar_lea.vmem %s5, 192
  %v3412 = vld [vmem:[%s3411] sm:$0xf]
  %v3413 = vld [vmem:[%s3411 + $0x4] sm:$0xf]
  %v3414 = vld [vmem:[%s3411 + $0x8] sm:$0xf]
  %v3415 = vld [vmem:[%s3411 + $0xc] sm:$0xf]
  %v3416 = vld [vmem:[%s3411 + $0x10] sm:$0xf]
  %v3417 = vld [vmem:[%s3411 + $0x14] sm:$0xf]
  %v3418 = vld [vmem:[%s3411 + $0x18] sm:$0xf]
  %v3419 = vld [vmem:[%s3411 + $0x1c] sm:$0xf]
  %v3420 = vld [vmem:[%s3411 + $0x20] sm:$0xf]
  %v3421 = vld [vmem:[%s3411 + $0x24] sm:$0xf]
  %v3422 = vld [vmem:[%s3411 + $0x28] sm:$0xf]
  %v3423 = vld [vmem:[%s3411 + $0x2c] sm:$0xf]
  %v3424 = vld [vmem:[%s3411 + $0x30] sm:$0xf]
  %v3425 = vld [vmem:[%s3411 + $0x34] sm:$0xf]
  %v3426 = vld [vmem:[%s3411 + $0x38] sm:$0xf]
  %v3427 = vld [vmem:[%s3411 + $0x3c] sm:$0xf]
  %v3444 = vunpack.c.l.b16 %v3412
  %v3445 = vunpack.c.l.b16 %v3413
  %v3446 = vunpack.c.l.b16 %v3414
  %v3447 = vunpack.c.l.b16 %v3415
  %v3448 = vunpack.c.l.b16 %v3416
  %v3449 = vunpack.c.l.b16 %v3417
  %v3450 = vunpack.c.l.b16 %v3418
  %v3451 = vunpack.c.l.b16 %v3419
  %v3452 = vunpack.c.l.b16 %v3420
  %v3453 = vunpack.c.l.b16 %v3421
  %v3454 = vunpack.c.l.b16 %v3422
  %v3455 = vunpack.c.l.b16 %v3423
  %v3456 = vunpack.c.l.b16 %v3424
  %v3457 = vunpack.c.l.b16 %v3425
  %v3458 = vunpack.c.l.b16 %v3426
  %v3459 = vunpack.c.l.b16 %v3427
  %v3460 = vpack.c.b16 %v3445, %v3444
  %v3461 = vpack.c.b16 %v3447, %v3446
  %v3462 = vpack.c.b16 %v3449, %v3448
  %v3463 = vpack.c.b16 %v3451, %v3450
  %v3464 = vpack.c.b16 %v3453, %v3452
  %v3465 = vpack.c.b16 %v3455, %v3454
  %v3466 = vpack.c.b16 %v3457, %v3456
  %v3467 = vpack.c.b16 %v3459, %v3458
  %3476 = vmatpush.bf16.msra.mxu0 %v3467
  %3477 = vmatpush.bf16.msra.mxu0 %v3466
  %3478 = vmatpush.bf16.msra.mxu0 %v3465
  %3479 = vmatpush.bf16.msra.mxu0 %v3464
  %3480 = vmatpush.bf16.msra.mxu0 %v3463
  %3481 = vmatpush.bf16.msra.mxu0 %v3462
  %3482 = vmatpush.bf16.msra.mxu0 %v3461
  %3483 = vmatpush.bf16.msra.mxu0 %v3460
  %3484 = vmatmul.bf16.gmra.mxu0 %v3175
  %v3485 = vpop.f32.mrf.mxu0
  %v3486 = vadd.f32 0.0, %v3485
  %v3487 = vpop.f32.mrf.mxu0
  %3488 = vdwg.mxu0
  %v3489 = vadd.f32 %v3410, %v3486
  %s3490 = scalar_lea.vmem %s5, 256
  %v3491 = vld [vmem:[%s3490] sm:$0xf]
  %v3492 = vld [vmem:[%s3490 + $0x4] sm:$0xf]
  %v3493 = vld [vmem:[%s3490 + $0x8] sm:$0xf]
  %v3494 = vld [vmem:[%s3490 + $0xc] sm:$0xf]
  %v3495 = vld [vmem:[%s3490 + $0x10] sm:$0xf]
  %v3496 = vld [vmem:[%s3490 + $0x14] sm:$0xf]
  %v3497 = vld [vmem:[%s3490 + $0x18] sm:$0xf]
  %v3498 = vld [vmem:[%s3490 + $0x1c] sm:$0xf]
  %v3499 = vld [vmem:[%s3490 + $0x20] sm:$0xf]
  %v3500 = vld [vmem:[%s3490 + $0x24] sm:$0xf]
  %v3501 = vld [vmem:[%s3490 + $0x28] sm:$0xf]
  %v3502 = vld [vmem:[%s3490 + $0x2c] sm:$0xf]
  %v3503 = vld [vmem:[%s3490 + $0x30] sm:$0xf]
  %v3504 = vld [vmem:[%s3490 + $0x34] sm:$0xf]
  %v3505 = vld [vmem:[%s3490 + $0x38] sm:$0xf]
  %v3506 = vld [vmem:[%s3490 + $0x3c] sm:$0xf]
  %v3523 = vunpack.c.l.b16 %v3491
  %v3524 = vunpack.c.l.b16 %v3492
  %v3525 = vunpack.c.l.b16 %v3493
  %v3526 = vunpack.c.l.b16 %v3494
  %v3527 = vunpack.c.l.b16 %v3495
  %v3528 = vunpack.c.l.b16 %v3496
  %v3529 = vunpack.c.l.b16 %v3497
  %v3530 = vunpack.c.l.b16 %v3498
  %v3531 = vunpack.c.l.b16 %v3499
  %v3532 = vunpack.c.l.b16 %v3500
  %v3533 = vunpack.c.l.b16 %v3501
  %v3534 = vunpack.c.l.b16 %v3502
  %v3535 = vunpack.c.l.b16 %v3503
  %v3536 = vunpack.c.l.b16 %v3504
  %v3537 = vunpack.c.l.b16 %v3505
  %v3538 = vunpack.c.l.b16 %v3506
  %v3539 = vpack.c.b16 %v3524, %v3523
  %v3540 = vpack.c.b16 %v3526, %v3525
  %v3541 = vpack.c.b16 %v3528, %v3527
  %v3542 = vpack.c.b16 %v3530, %v3529
  %v3543 = vpack.c.b16 %v3532, %v3531
  %v3544 = vpack.c.b16 %v3534, %v3533
  %v3545 = vpack.c.b16 %v3536, %v3535
  %v3546 = vpack.c.b16 %v3538, %v3537
  %3555 = vmatpush.bf16.msra.mxu0 %v3546
  %3556 = vmatpush.bf16.msra.mxu0 %v3545
  %3557 = vmatpush.bf16.msra.mxu0 %v3544
  %3558 = vmatpush.bf16.msra.mxu0 %v3543
  %3559 = vmatpush.bf16.msra.mxu0 %v3542
  %3560 = vmatpush.bf16.msra.mxu0 %v3541
  %3561 = vmatpush.bf16.msra.mxu0 %v3540
  %3562 = vmatpush.bf16.msra.mxu0 %v3539
  %3563 = vmatmul.bf16.gmra.mxu0 %v3176
  %v3564 = vpop.f32.mrf.mxu0
  %v3565 = vadd.f32 0.0, %v3564
  %v3566 = vpop.f32.mrf.mxu0
  %3567 = vdwg.mxu0
  %v3568 = vadd.f32 %v3489, %v3565
  %v3569 = vld [vmem:[%s6] sm:$0x1]
  %v3571 = vperm.slane %v3569, 0
  %v3573 = vadd.f32 %v3568, %v3571
  %v3574 = vmax.f32 %v3573, 0.0
  %v3575 = vpack.c.bf16 %v3574, %v3574
  %v3576 = vld [vmem:[%s7] sm:$0xf]
  %v3577 = vld [vmem:[%s7 + $0x4] sm:$0xf]
  %v3578 = vld [vmem:[%s7 + $0x8] sm:$0xf]
  %v3579 = vld [vmem:[%s7 + $0xc] sm:$0xf]
  %v3580 = vld [vmem:[%s7 + $0x10] sm:$0xf]
  %v3581 = vld [vmem:[%s7 + $0x14] sm:$0xf]
  %v3582 = vld [vmem:[%s7 + $0x18] sm:$0xf]
  %v3583 = vld [vmem:[%s7 + $0x1c] sm:$0xf]
  %v3584 = vld [vmem:[%s7 + $0x20] sm:$0xf]
  %v3585 = vld [vmem:[%s7 + $0x24] sm:$0xf]
  %v3586 = vld [vmem:[%s7 + $0x28] sm:$0xf]
  %v3587 = vld [vmem:[%s7 + $0x2c] sm:$0xf]
  %v3588 = vld [vmem:[%s7 + $0x30] sm:$0xf]
  %v3589 = vld [vmem:[%s7 + $0x34] sm:$0xf]
  %v3590 = vld [vmem:[%s7 + $0x38] sm:$0xf]
  %v3591 = vld [vmem:[%s8] sm:$0x1]
  %v3593 = vperm.slane %v3591, 0
  %v3610 = vunpack.c.l.b16 %v3576
  %v3611 = vunpack.c.l.b16 %v3577
  %v3612 = vunpack.c.l.b16 %v3578
  %v3613 = vunpack.c.l.b16 %v3579
  %v3614 = vunpack.c.l.b16 %v3580
  %v3615 = vunpack.c.l.b16 %v3581
  %v3616 = vunpack.c.l.b16 %v3582
  %v3617 = vunpack.c.l.b16 %v3583
  %v3618 = vunpack.c.l.b16 %v3584
  %v3619 = vunpack.c.l.b16 %v3585
  %v3620 = vunpack.c.l.b16 %v3586
  %v3621 = vunpack.c.l.b16 %v3587
  %v3622 = vunpack.c.l.b16 %v3588
  %v3623 = vunpack.c.l.b16 %v3589
  %v3624 = vunpack.c.l.b16 %v3590
  %v3625 = vpack.c.b16 %v3611, %v3610
  %v3626 = vpack.c.b16 %v3613, %v3612
  %v3627 = vpack.c.b16 %v3615, %v3614
  %v3628 = vpack.c.b16 %v3617, %v3616
  %v3629 = vpack.c.b16 %v3619, %v3618
  %v3630 = vpack.c.b16 %v3621, %v3620
  %v3631 = vpack.c.b16 %v3623, %v3622
  %v3632 = vpack.c.b16 %v3624, %v3624
  %vm3640 = vcmask 982016
  %v3642 = vsel %vm3640, %v3575, 0
  %vm3644 = vcmask 1043456
  %v3646 = vsel %vm3644, %v3632, 0
  %3648 = vmatpush.bf16.msra.mxu0 %v3646
  %3649 = vmatpush.bf16.msra.mxu0 %v3631
  %3650 = vmatpush.bf16.msra.mxu0 %v3630
  %3651 = vmatpush.bf16.msra.mxu0 %v3629
  %3652 = vmatpush.bf16.msra.mxu0 %v3628
  %3653 = vmatpush.bf16.msra.mxu0 %v3627
  %3654 = vmatpush.bf16.msra.mxu0 %v3626
  %3655 = vmatpush.bf16.msra.mxu0 %v3625
  %3656 = vmatmul.bf16.gmra.mxu0 %v3642
  %v3657 = vpop.f32.mrf.mxu0
  %v3658 = vadd.f32 %v3593, %v3657
  %v3659 = vpop.f32.mrf.mxu0
  %3660 = vdwg.mxu0
  %v3661 = vmax.f32 %v3658, 0.0
  %v3662 = vpack.c.bf16 %v3661, %v3661
  %v3663 = vld [vmem:[%s9] sm:$0xf]
  %v3664 = vld [vmem:[%s9 + $0x4] sm:$0xf]
  %v3665 = vld [vmem:[%s9 + $0x8] sm:$0xf]
  %v3666 = vld [vmem:[%s9 + $0xc] sm:$0xf]
  %v3667 = vld [vmem:[%s9 + $0x10] sm:$0xf]
  %v3668 = vld [vmem:[%s9 + $0x14] sm:$0xf]
  %v3669 = vld [vmem:[%s9 + $0x18] sm:$0xf]
  %v3670 = vld [vmem:[%s9 + $0x1c] sm:$0xf]
  %v3671 = vld [vmem:[%s9 + $0x20] sm:$0xf]
  %v3672 = vld [vmem:[%s9 + $0x24] sm:$0xf]
  %v3673 = vld [vmem:[%s9 + $0x28] sm:$0x3]
  %v3674 = vld [vmem:[%s10] sm:$0x1]
  %v3676 = vperm.slane %v3674, 0
  %v3689 = vunpack.c.l.b16 %v3663
  %v3690 = vunpack.c.l.b16 %v3664
  %v3691 = vunpack.c.l.b16 %v3665
  %v3692 = vunpack.c.l.b16 %v3666
  %v3693 = vunpack.c.l.b16 %v3667
  %v3694 = vunpack.c.l.b16 %v3668
  %v3695 = vunpack.c.l.b16 %v3669
  %v3696 = vunpack.c.l.b16 %v3670
  %v3697 = vunpack.c.l.b16 %v3671
  %v3698 = vunpack.c.l.b16 %v3672
  %v3699 = vunpack.c.l.b16 %v3673
  %v3700 = vpack.c.b16 %v3690, %v3689
  %v3701 = vpack.c.b16 %v3692, %v3691
  %v3702 = vpack.c.b16 %v3694, %v3693
  %v3703 = vpack.c.b16 %v3696, %v3695
  %v3704 = vpack.c.b16 %v3698, %v3697
  %v3705 = vpack.c.b16 %v3699, %v3699
  %vm3711 = vcmask 687104
  %v3713 = vsel %vm3711, %v3662, 0
  %vm3715 = vcmask 1041408
  %v3717 = vsel %vm3715, %v3705, 0
  %3719 = vmatpush.bf16.msra.mxu0 0
  %3720 = vmatpush.bf16.msra.mxu0 0
  %3721 = vmatpush.bf16.msra.mxu0 %v3717
  %3722 = vmatpush.bf16.msra.mxu0 %v3704
  %3723 = vmatpush.bf16.msra.mxu0 %v3703
  %3724 = vmatpush.bf16.msra.mxu0 %v3702
  %3725 = vmatpush.bf16.msra.mxu0 %v3701
  %3726 = vmatpush.bf16.msra.mxu0 %v3700
  %3727 = vmatmul.bf16.gmra.mxu0 %v3713
  %v3728 = vpop.f32.mrf.mxu0
  %v3729 = vadd.f32 %v3676, %v3728
  %v3730 = vpop.f32.mrf.mxu0
  %3731 = vdwg.mxu0
  %3732 = vst [vmem:[%s11] sm:$0xff] %v3729
  // Predicated region
  $region46: #{lenet_forward.1} parent=0 // pred_check
    _
  $region47: #{lenet_forward.1} parent=0 // pred_check_branch
    %3734 = sbr.rel (0) target = $region49
  $region48: #{lenet_forward.1} parent=0 // pred_region
    _
  $region49: #{lenet_forward.1} parent=0 // pred_fallthru
    _
  // Predicated region
  $region50: #{lenet_forward.1} parent=0 // pred_check
    _
  $region51: #{lenet_forward.1} parent=0 // pred_check_branch
    %3736 = sbr.rel (0) target = $region53
  $region52: #{lenet_forward.1} parent=0 // pred_region
    _
  $region53: #{lenet_forward.1} parent=0 // pred_fallthru
    _

</llo_original>
